<compile_context>
chip_gen: v7x
topology: tpu7x:2x2x1
jax: 0.10.0
libtpu: 0.0.40
codegen_flags: <defaults>
</compile_context>

<pallas_src>
import jax
import jax.numpy as jnp
from jax import lax
from jax.experimental import pallas as pl
from jax.experimental.pallas import tpu as pltpu


# ----------------------------- configuration --------------------------------
B = 2                # batch
CIN = 4              # input channels (small, synthetic)
H = W = 16           # spatial
KH = KW = 3          # stand-in conv kernel
HO, WO = H - KH + 1, W - KW + 1
P = HO * WO          # output pixels per image
BP = B * P           # all output pixels, batch-flattened
K = KH * KW * CIN    # im2col patch length
C_FEAT = 2048        # Inception-V3 feature dim (fixed by self.model.fc in_features)
N_CONCEPTS = 16      # n_concepts

CHUNK = 256                      # C_FEAT chunk (lane-aligned, 2x128)
N_CHUNKS = C_FEAT // CHUNK


# ------------------------------- kernel -------------------------------------
def x_to_c_kernel(patches_ref, mask_ref, wc_ref, bc_ref, wfc_t_ref, bfc_ref,
                  chat_ref):
    """Whole batched forward pass in one grid step, chunked over C_FEAT.

    patches_ref : (B*P, K)        bf16   im2col patches, batch-flattened
    mask_ref    : (B, B*P)        f32    block-diagonal ones (per-batch segments)
    wc_ref      : (K, C_FEAT)     bf16   stand-in backbone conv weight
    bc_ref      : (1, C_FEAT)     f32    conv bias
    wfc_t_ref   : (N_C, C_FEAT)   bf16   CNN_model.fc weight (lane-dense, 1/P folded)
    bfc_ref     : (1, N_C)        f32    fc bias
    chat_ref    : (B, N_C)        f32    output Chat = sigmoid(fc(feat))
    """
    patches = patches_ref[...]                                   # (BP, K)  bf16
    mask = mask_ref[...]                                          # (B, BP)  f32

    # fc-logit accumulator (tiny: (B, N_C) f32).
    acc = jnp.zeros((B, N_CONCEPTS), dtype=jnp.float32)

    # Static loop over C_FEAT chunks: the per-chunk (BP, CHUNK) f32 activation
    # never leaves register/near-register scale.
    for j in range(N_CHUNKS):
        c0 = j * CHUNK                                            # static, lane-aligned

        # ---- stand-in backbone conv chunk (MXU, f32 accumulation) ----------
        conv = jnp.dot(patches, wc_ref[:, c0:c0 + CHUNK],
                       preferred_element_type=jnp.float32)        # (BP, CHUNK) f32
        relu = jnp.maximum(conv + bc_ref[:, c0:c0 + CHUNK], 0.0)  # f32 (safe on v5e)

        # ---- global-average-pool chunk as an f32 mask matmul (no bf16 cast) -
        feat = jnp.dot(mask, relu,
                       preferred_element_type=jnp.float32)        # (B, CHUNK) f32
        # (1/P scale is folded into wfc_t in the wrapper.)

        # ---- fc partial: contract over this C_FEAT chunk --------------------
        acc = acc + lax.dot_general(
            feat.astype(jnp.bfloat16),
            wfc_t_ref[:, c0:c0 + CHUNK],
            (((1,), (1,)), ((), ())),
            preferred_element_type=jnp.float32)                   # (B, N_C) f32

    # ---- bias + numerically stable sigmoid (tanh form, EUP) -----------------
    z = acc + bfc_ref[...]                                        # (B, N_C) f32
    chat = 0.5 * (jnp.tanh(0.5 * z) + 1.0)

    # Single full-block store for the whole batch.
    chat_ref[...] = chat.astype(chat_ref.dtype)


# ------------------------------- wrapper -------------------------------------
def model_x_to_c(x_nchw, w_conv, b_conv, w_fc, b_fc):
    """x_nchw: (B, CIN, H, W) float32. Returns Chat (B, N_CONCEPTS) float32."""
    # Glue: NCHW -> NHWC and im2col (valid 3x3, stride 1), flatten batch.
    # (Input is ~4 KB; at this size the XLA glue is comparable to the kernel —
    #  kept in the wrapper for clarity.)
    x = jnp.transpose(x_nchw, (0, 2, 3, 1))                    # (B, H, W, CIN)
    cols = []
    for kh in range(KH):
        for kw in range(KW):
            cols.append(x[:, kh:kh + HO, kw:kw + WO, :])       # (B, HO, WO, CIN)
    patches = jnp.stack(cols, axis=3)                          # (B, HO, WO, KH*KW, CIN)
    patches = patches.reshape(BP, K).astype(jnp.bfloat16)      # (B*P, K) bf16

    w_conv_flat = w_conv.reshape(K, C_FEAT).astype(jnp.bfloat16)

    # Lane-dense fc weight with the exact 1/P GAP scale folded in (done in f32
    # before the bf16 cast; fc is linear so this is exact).
    w_fc_t = (w_fc * jnp.float32(1.0 / P)).T.astype(jnp.bfloat16)   # (N_C, C_FEAT)

    # Block-diagonal segmentation mask of exact ones, kept in f32 so the
    # pooling matmul accumulates the f32 ReLU output without a bf16 round.
    mask = jnp.kron(jnp.eye(B, dtype=jnp.float32),
                    jnp.ones((1, P), jnp.float32))             # (B, B*P) f32

    grid_spec = pltpu.PrefetchScalarGridSpec(
        num_scalar_prefetch=0,
        grid=(1,),
        in_specs=[
            pl.BlockSpec((BP, K), lambda i: (0, 0)),
            pl.BlockSpec((B, BP), lambda i: (0, 0)),
            pl.BlockSpec((K, C_FEAT), lambda i: (0, 0)),
            pl.BlockSpec((1, C_FEAT), lambda i: (0, 0)),
            pl.BlockSpec((N_CONCEPTS, C_FEAT), lambda i: (0, 0)),
            pl.BlockSpec((1, N_CONCEPTS), lambda i: (0, 0)),
        ],
        out_specs=pl.BlockSpec((B, N_CONCEPTS), lambda i: (0, 0)),
    )

    chat = pl.pallas_call(
        x_to_c_kernel,
        out_shape=jax.ShapeDtypeStruct((B, N_CONCEPTS), jnp.float32),
        grid_spec=grid_spec,
        compiler_params=pltpu.CompilerParams(
            dimension_semantics=("arbitrary",),
        ),
    )(patches, mask, w_conv_flat, b_conv, w_fc_t, b_fc)
    return chat


# --------------------------- pure-JAX reference -------------------------------
def reference(x_nchw, w_conv, b_conv, w_fc, b_fc):
    x = jnp.transpose(x_nchw, (0, 2, 3, 1))
    cols = []
    for kh in range(KH):
        for kw in range(KW):
            cols.append(x[:, kh:kh + HO, kw:kw + WO, :])
    patches = jnp.stack(cols, axis=3).reshape(B, P, K)
    conv = jnp.maximum(jnp.einsum("bpk,kf->bpf", patches,
                                  w_conv.reshape(K, C_FEAT)) + b_conv, 0.0)
    feat = jnp.mean(conv, axis=1)                            # (B, C_FEAT)
    chat = jax.nn.sigmoid(feat @ w_fc + b_fc)                # (B, N_CONCEPTS)
    return chat


# --------------------------------- main ---------------------------------------
if __name__ == "__main__":
    key = jax.random.PRNGKey(0)
    kx, kwc, kbc, kwfc, kbfc = jax.random.split(key, 5)

    x = jax.random.normal(kx, (B, CIN, H, W), dtype=jnp.float32)

    # Deterministic synthetic parameters (shapes dictated by the module).
    w_conv = jax.random.normal(kwc, (KH, KW, CIN, C_FEAT), jnp.float32) * 0.05
    b_conv = jax.random.normal(kbc, (1, C_FEAT), jnp.float32) * 0.05
    w_fc   = jax.random.normal(kwfc, (C_FEAT, N_CONCEPTS), jnp.float32) * 0.02
    b_fc   = jax.random.normal(kbfc, (1, N_CONCEPTS), jnp.float32) * 0.02

    chat = model_x_to_c(x, w_conv, b_conv, w_fc, b_fc)
    jax.block_until_ready(chat)

    chat_ref = reference(x, w_conv, b_conv, w_fc, b_fc)
    assert chat.shape == (B, N_CONCEPTS)
    assert jnp.allclose(chat, chat_ref, rtol=1e-2, atol=1e-2)
    # Sigmoid outputs lie in [0, 1].
    assert bool(jnp.all((chat >= 0.0) & (chat <= 1.0)))

    print("KERNEL_OK")
</pallas_src>

<mosaic_0001>
module attributes {stable_mosaic.version = 11 : i64} {
  func.func @x_to_c_kernel(%arg0: i32, %arg1: memref<392x36xbf16, #tpu.memory_space<vmem>>, %arg2: memref<2x392xf32, #tpu.memory_space<vmem>>, %arg3: memref<36x2048xbf16, #tpu.memory_space<vmem>>, %arg4: memref<1x2048xf32, #tpu.memory_space<vmem>>, %arg5: memref<16x2048xbf16, #tpu.memory_space<vmem>>, %arg6: memref<1x16xf32, #tpu.memory_space<vmem>>, %arg7: memref<2x16xf32, #tpu.memory_space<vmem>>) attributes {dimension_semantics = [#tpu.dimension_semantics<arbitrary>], iteration_bounds = array<i64: 1>, scalar_prefetch = 0 : i64, scratch_operands = 0 : i64, tpu.core_type = #tpu.core_type<tc>, window_params = [{pipeline_mode = #tpu.pipeline_mode<synchronous>, transform_indices = @transform_0, window_bounds = array<i64: 392, 36>}, {pipeline_mode = #tpu.pipeline_mode<synchronous>, transform_indices = @transform_1, window_bounds = array<i64: 2, 392>}, {pipeline_mode = #tpu.pipeline_mode<synchronous>, transform_indices = @transform_2, window_bounds = array<i64: 36, 2048>}, {pipeline_mode = #tpu.pipeline_mode<synchronous>, transform_indices = @transform_3, window_bounds = array<i64: 1, 2048>}, {pipeline_mode = #tpu.pipeline_mode<synchronous>, transform_indices = @transform_4, window_bounds = array<i64: 16, 2048>}, {pipeline_mode = #tpu.pipeline_mode<synchronous>, transform_indices = @transform_5, window_bounds = array<i64: 1, 16>}, {pipeline_mode = #tpu.pipeline_mode<synchronous>, transform_indices = @transform_6, window_bounds = array<i64: 2, 16>}]} {
    %c0 = arith.constant 0 : index
    %c0_0 = arith.constant 0 : index
    %0 = vector.load %arg1[%c0, %c0_0] : memref<392x36xbf16, #tpu.memory_space<vmem>>, vector<392x36xbf16>
    %c0_1 = arith.constant 0 : index
    %c0_2 = arith.constant 0 : index
    %1 = vector.load %arg2[%c0_1, %c0_2] : memref<2x392xf32, #tpu.memory_space<vmem>>, vector<2x392xf32>
    %cst = arith.constant 0.000000e+00 : f32
    %2 = vector.broadcast %cst : f32 to vector<2x16xf32>
    %c0_3 = arith.constant 0 : index
    %c0_4 = arith.constant 0 : index
    %3 = vector.load %arg3[%c0_3, %c0_4] : memref<36x2048xbf16, #tpu.memory_space<vmem>>, vector<36x256xbf16>
    %cst_5 = arith.constant dense<0.000000e+00> : vector<392x256xf32>
    %4 = tpu.matmul %0, %3, %cst_5 {dimension_numbers = #tpu.dot_dimension_numbers<[1], [0], [0], [1], [0, 0, 1, 1], [], []>} : vector<392x36xbf16>, vector<36x256xbf16>, vector<392x256xf32> -> vector<392x256xf32>
    %c0_6 = arith.constant 0 : index
    %c0_7 = arith.constant 0 : index
    %5 = vector.load %arg4[%c0_6, %c0_7] : memref<1x2048xf32, #tpu.memory_space<vmem>>, vector<1x256xf32>
    %6 = vector.broadcast %5 : vector<1x256xf32> to vector<392x256xf32>
    %7 = arith.addf %4, %6 : vector<392x256xf32>
    %cst_8 = arith.constant 0.000000e+00 : f32
    %8 = vector.broadcast %cst_8 : f32 to vector<392x256xf32>
    %9 = arith.maximumf %7, %8 : vector<392x256xf32>
    %cst_9 = arith.constant dense<0.000000e+00> : vector<2x256xf32>
    %10 = tpu.matmul %1, %9, %cst_9 {dimension_numbers = #tpu.dot_dimension_numbers<[1], [0], [0], [1], [0, 0, 1, 1], [], []>} : vector<2x392xf32>, vector<392x256xf32>, vector<2x256xf32> -> vector<2x256xf32>
    %11 = arith.truncf %10 : vector<2x256xf32> to vector<2x256xbf16>
    %c0_10 = arith.constant 0 : index
    %c0_11 = arith.constant 0 : index
    %12 = vector.load %arg5[%c0_10, %c0_11] : memref<16x2048xbf16, #tpu.memory_space<vmem>>, vector<16x256xbf16>
    %cst_12 = arith.constant dense<0.000000e+00> : vector<2x16xf32>
    %13 = tpu.matmul %11, %12, %cst_12 {dimension_numbers = #tpu.dot_dimension_numbers<[1], [1], [0], [0], [0, 0, 1, 0], [], []>} : vector<2x256xbf16>, vector<16x256xbf16>, vector<2x16xf32> -> vector<2x16xf32>
    %14 = arith.addf %2, %13 : vector<2x16xf32>
    %c0_13 = arith.constant 0 : index
    %c256 = arith.constant 256 : index
    %15 = vector.load %arg3[%c0_13, %c256] : memref<36x2048xbf16, #tpu.memory_space<vmem>>, vector<36x256xbf16>
    %cst_14 = arith.constant dense<0.000000e+00> : vector<392x256xf32>
    %16 = tpu.matmul %0, %15, %cst_14 {dimension_numbers = #tpu.dot_dimension_numbers<[1], [0], [0], [1], [0, 0, 1, 1], [], []>} : vector<392x36xbf16>, vector<36x256xbf16>, vector<392x256xf32> -> vector<392x256xf32>
    %c0_15 = arith.constant 0 : index
    %c256_16 = arith.constant 256 : index
    %17 = vector.load %arg4[%c0_15, %c256_16] : memref<1x2048xf32, #tpu.memory_space<vmem>>, vector<1x256xf32>
    %18 = vector.broadcast %17 : vector<1x256xf32> to vector<392x256xf32>
    %19 = arith.addf %16, %18 : vector<392x256xf32>
    %cst_17 = arith.constant 0.000000e+00 : f32
    %20 = vector.broadcast %cst_17 : f32 to vector<392x256xf32>
    %21 = arith.maximumf %19, %20 : vector<392x256xf32>
    %cst_18 = arith.constant dense<0.000000e+00> : vector<2x256xf32>
    %22 = tpu.matmul %1, %21, %cst_18 {dimension_numbers = #tpu.dot_dimension_numbers<[1], [0], [0], [1], [0, 0, 1, 1], [], []>} : vector<2x392xf32>, vector<392x256xf32>, vector<2x256xf32> -> vector<2x256xf32>
    %23 = arith.truncf %22 : vector<2x256xf32> to vector<2x256xbf16>
    %c0_19 = arith.constant 0 : index
    %c256_20 = arith.constant 256 : index
    %24 = vector.load %arg5[%c0_19, %c256_20] : memref<16x2048xbf16, #tpu.memory_space<vmem>>, vector<16x256xbf16>
    %cst_21 = arith.constant dense<0.000000e+00> : vector<2x16xf32>
    %25 = tpu.matmul %23, %24, %cst_21 {dimension_numbers = #tpu.dot_dimension_numbers<[1], [1], [0], [0], [0, 0, 1, 0], [], []>} : vector<2x256xbf16>, vector<16x256xbf16>, vector<2x16xf32> -> vector<2x16xf32>
    %26 = arith.addf %14, %25 : vector<2x16xf32>
    %c0_22 = arith.constant 0 : index
    %c512 = arith.constant 512 : index
    %27 = vector.load %arg3[%c0_22, %c512] : memref<36x2048xbf16, #tpu.memory_space<vmem>>, vector<36x256xbf16>
    %cst_23 = arith.constant dense<0.000000e+00> : vector<392x256xf32>
    %28 = tpu.matmul %0, %27, %cst_23 {dimension_numbers = #tpu.dot_dimension_numbers<[1], [0], [0], [1], [0, 0, 1, 1], [], []>} : vector<392x36xbf16>, vector<36x256xbf16>, vector<392x256xf32> -> vector<392x256xf32>
    %c0_24 = arith.constant 0 : index
    %c512_25 = arith.constant 512 : index
    %29 = vector.load %arg4[%c0_24, %c512_25] : memref<1x2048xf32, #tpu.memory_space<vmem>>, vector<1x256xf32>
    %30 = vector.broadcast %29 : vector<1x256xf32> to vector<392x256xf32>
    %31 = arith.addf %28, %30 : vector<392x256xf32>
    %cst_26 = arith.constant 0.000000e+00 : f32
    %32 = vector.broadcast %cst_26 : f32 to vector<392x256xf32>
    %33 = arith.maximumf %31, %32 : vector<392x256xf32>
    %cst_27 = arith.constant dense<0.000000e+00> : vector<2x256xf32>
    %34 = tpu.matmul %1, %33, %cst_27 {dimension_numbers = #tpu.dot_dimension_numbers<[1], [0], [0], [1], [0, 0, 1, 1], [], []>} : vector<2x392xf32>, vector<392x256xf32>, vector<2x256xf32> -> vector<2x256xf32>
    %35 = arith.truncf %34 : vector<2x256xf32> to vector<2x256xbf16>
    %c0_28 = arith.constant 0 : index
    %c512_29 = arith.constant 512 : index
    %36 = vector.load %arg5[%c0_28, %c512_29] : memref<16x2048xbf16, #tpu.memory_space<vmem>>, vector<16x256xbf16>
    %cst_30 = arith.constant dense<0.000000e+00> : vector<2x16xf32>
    %37 = tpu.matmul %35, %36, %cst_30 {dimension_numbers = #tpu.dot_dimension_numbers<[1], [1], [0], [0], [0, 0, 1, 0], [], []>} : vector<2x256xbf16>, vector<16x256xbf16>, vector<2x16xf32> -> vector<2x16xf32>
    %38 = arith.addf %26, %37 : vector<2x16xf32>
    %c0_31 = arith.constant 0 : index
    %c768 = arith.constant 768 : index
    %39 = vector.load %arg3[%c0_31, %c768] : memref<36x2048xbf16, #tpu.memory_space<vmem>>, vector<36x256xbf16>
    %cst_32 = arith.constant dense<0.000000e+00> : vector<392x256xf32>
    %40 = tpu.matmul %0, %39, %cst_32 {dimension_numbers = #tpu.dot_dimension_numbers<[1], [0], [0], [1], [0, 0, 1, 1], [], []>} : vector<392x36xbf16>, vector<36x256xbf16>, vector<392x256xf32> -> vector<392x256xf32>
    %c0_33 = arith.constant 0 : index
    %c768_34 = arith.constant 768 : index
    %41 = vector.load %arg4[%c0_33, %c768_34] : memref<1x2048xf32, #tpu.memory_space<vmem>>, vector<1x256xf32>
    %42 = vector.broadcast %41 : vector<1x256xf32> to vector<392x256xf32>
    %43 = arith.addf %40, %42 : vector<392x256xf32>
    %cst_35 = arith.constant 0.000000e+00 : f32
    %44 = vector.broadcast %cst_35 : f32 to vector<392x256xf32>
    %45 = arith.maximumf %43, %44 : vector<392x256xf32>
    %cst_36 = arith.constant dense<0.000000e+00> : vector<2x256xf32>
    %46 = tpu.matmul %1, %45, %cst_36 {dimension_numbers = #tpu.dot_dimension_numbers<[1], [0], [0], [1], [0, 0, 1, 1], [], []>} : vector<2x392xf32>, vector<392x256xf32>, vector<2x256xf32> -> vector<2x256xf32>
    %47 = arith.truncf %46 : vector<2x256xf32> to vector<2x256xbf16>
    %c0_37 = arith.constant 0 : index
    %c768_38 = arith.constant 768 : index
    %48 = vector.load %arg5[%c0_37, %c768_38] : memref<16x2048xbf16, #tpu.memory_space<vmem>>, vector<16x256xbf16>
    %cst_39 = arith.constant dense<0.000000e+00> : vector<2x16xf32>
    %49 = tpu.matmul %47, %48, %cst_39 {dimension_numbers = #tpu.dot_dimension_numbers<[1], [1], [0], [0], [0, 0, 1, 0], [], []>} : vector<2x256xbf16>, vector<16x256xbf16>, vector<2x16xf32> -> vector<2x16xf32>
    %50 = arith.addf %38, %49 : vector<2x16xf32>
    %c0_40 = arith.constant 0 : index
    %c1024 = arith.constant 1024 : index
    %51 = vector.load %arg3[%c0_40, %c1024] : memref<36x2048xbf16, #tpu.memory_space<vmem>>, vector<36x256xbf16>
    %cst_41 = arith.constant dense<0.000000e+00> : vector<392x256xf32>
    %52 = tpu.matmul %0, %51, %cst_41 {dimension_numbers = #tpu.dot_dimension_numbers<[1], [0], [0], [1], [0, 0, 1, 1], [], []>} : vector<392x36xbf16>, vector<36x256xbf16>, vector<392x256xf32> -> vector<392x256xf32>
    %c0_42 = arith.constant 0 : index
    %c1024_43 = arith.constant 1024 : index
    %53 = vector.load %arg4[%c0_42, %c1024_43] : memref<1x2048xf32, #tpu.memory_space<vmem>>, vector<1x256xf32>
    %54 = vector.broadcast %53 : vector<1x256xf32> to vector<392x256xf32>
    %55 = arith.addf %52, %54 : vector<392x256xf32>
    %cst_44 = arith.constant 0.000000e+00 : f32
    %56 = vector.broadcast %cst_44 : f32 to vector<392x256xf32>
    %57 = arith.maximumf %55, %56 : vector<392x256xf32>
    %cst_45 = arith.constant dense<0.000000e+00> : vector<2x256xf32>
    %58 = tpu.matmul %1, %57, %cst_45 {dimension_numbers = #tpu.dot_dimension_numbers<[1], [0], [0], [1], [0, 0, 1, 1], [], []>} : vector<2x392xf32>, vector<392x256xf32>, vector<2x256xf32> -> vector<2x256xf32>
    %59 = arith.truncf %58 : vector<2x256xf32> to vector<2x256xbf16>
    %c0_46 = arith.constant 0 : index
    %c1024_47 = arith.constant 1024 : index
    %60 = vector.load %arg5[%c0_46, %c1024_47] : memref<16x2048xbf16, #tpu.memory_space<vmem>>, vector<16x256xbf16>
    %cst_48 = arith.constant dense<0.000000e+00> : vector<2x16xf32>
    %61 = tpu.matmul %59, %60, %cst_48 {dimension_numbers = #tpu.dot_dimension_numbers<[1], [1], [0], [0], [0, 0, 1, 0], [], []>} : vector<2x256xbf16>, vector<16x256xbf16>, vector<2x16xf32> -> vector<2x16xf32>
    %62 = arith.addf %50, %61 : vector<2x16xf32>
    %c0_49 = arith.constant 0 : index
    %c1280 = arith.constant 1280 : index
    %63 = vector.load %arg3[%c0_49, %c1280] : memref<36x2048xbf16, #tpu.memory_space<vmem>>, vector<36x256xbf16>
    %cst_50 = arith.constant dense<0.000000e+00> : vector<392x256xf32>
    %64 = tpu.matmul %0, %63, %cst_50 {dimension_numbers = #tpu.dot_dimension_numbers<[1], [0], [0], [1], [0, 0, 1, 1], [], []>} : vector<392x36xbf16>, vector<36x256xbf16>, vector<392x256xf32> -> vector<392x256xf32>
    %c0_51 = arith.constant 0 : index
    %c1280_52 = arith.constant 1280 : index
    %65 = vector.load %arg4[%c0_51, %c1280_52] : memref<1x2048xf32, #tpu.memory_space<vmem>>, vector<1x256xf32>
    %66 = vector.broadcast %65 : vector<1x256xf32> to vector<392x256xf32>
    %67 = arith.addf %64, %66 : vector<392x256xf32>
    %cst_53 = arith.constant 0.000000e+00 : f32
    %68 = vector.broadcast %cst_53 : f32 to vector<392x256xf32>
    %69 = arith.maximumf %67, %68 : vector<392x256xf32>
    %cst_54 = arith.constant dense<0.000000e+00> : vector<2x256xf32>
    %70 = tpu.matmul %1, %69, %cst_54 {dimension_numbers = #tpu.dot_dimension_numbers<[1], [0], [0], [1], [0, 0, 1, 1], [], []>} : vector<2x392xf32>, vector<392x256xf32>, vector<2x256xf32> -> vector<2x256xf32>
    %71 = arith.truncf %70 : vector<2x256xf32> to vector<2x256xbf16>
    %c0_55 = arith.constant 0 : index
    %c1280_56 = arith.constant 1280 : index
    %72 = vector.load %arg5[%c0_55, %c1280_56] : memref<16x2048xbf16, #tpu.memory_space<vmem>>, vector<16x256xbf16>
    %cst_57 = arith.constant dense<0.000000e+00> : vector<2x16xf32>
    %73 = tpu.matmul %71, %72, %cst_57 {dimension_numbers = #tpu.dot_dimension_numbers<[1], [1], [0], [0], [0, 0, 1, 0], [], []>} : vector<2x256xbf16>, vector<16x256xbf16>, vector<2x16xf32> -> vector<2x16xf32>
    %74 = arith.addf %62, %73 : vector<2x16xf32>
    %c0_58 = arith.constant 0 : index
    %c1536 = arith.constant 1536 : index
    %75 = vector.load %arg3[%c0_58, %c1536] : memref<36x2048xbf16, #tpu.memory_space<vmem>>, vector<36x256xbf16>
    %cst_59 = arith.constant dense<0.000000e+00> : vector<392x256xf32>
    %76 = tpu.matmul %0, %75, %cst_59 {dimension_numbers = #tpu.dot_dimension_numbers<[1], [0], [0], [1], [0, 0, 1, 1], [], []>} : vector<392x36xbf16>, vector<36x256xbf16>, vector<392x256xf32> -> vector<392x256xf32>
    %c0_60 = arith.constant 0 : index
    %c1536_61 = arith.constant 1536 : index
    %77 = vector.load %arg4[%c0_60, %c1536_61] : memref<1x2048xf32, #tpu.memory_space<vmem>>, vector<1x256xf32>
    %78 = vector.broadcast %77 : vector<1x256xf32> to vector<392x256xf32>
    %79 = arith.addf %76, %78 : vector<392x256xf32>
    %cst_62 = arith.constant 0.000000e+00 : f32
    %80 = vector.broadcast %cst_62 : f32 to vector<392x256xf32>
    %81 = arith.maximumf %79, %80 : vector<392x256xf32>
    %cst_63 = arith.constant dense<0.000000e+00> : vector<2x256xf32>
    %82 = tpu.matmul %1, %81, %cst_63 {dimension_numbers = #tpu.dot_dimension_numbers<[1], [0], [0], [1], [0, 0, 1, 1], [], []>} : vector<2x392xf32>, vector<392x256xf32>, vector<2x256xf32> -> vector<2x256xf32>
    %83 = arith.truncf %82 : vector<2x256xf32> to vector<2x256xbf16>
    %c0_64 = arith.constant 0 : index
    %c1536_65 = arith.constant 1536 : index
    %84 = vector.load %arg5[%c0_64, %c1536_65] : memref<16x2048xbf16, #tpu.memory_space<vmem>>, vector<16x256xbf16>
    %cst_66 = arith.constant dense<0.000000e+00> : vector<2x16xf32>
    %85 = tpu.matmul %83, %84, %cst_66 {dimension_numbers = #tpu.dot_dimension_numbers<[1], [1], [0], [0], [0, 0, 1, 0], [], []>} : vector<2x256xbf16>, vector<16x256xbf16>, vector<2x16xf32> -> vector<2x16xf32>
    %86 = arith.addf %74, %85 : vector<2x16xf32>
    %c0_67 = arith.constant 0 : index
    %c1792 = arith.constant 1792 : index
    %87 = vector.load %arg3[%c0_67, %c1792] : memref<36x2048xbf16, #tpu.memory_space<vmem>>, vector<36x256xbf16>
    %cst_68 = arith.constant dense<0.000000e+00> : vector<392x256xf32>
    %88 = tpu.matmul %0, %87, %cst_68 {dimension_numbers = #tpu.dot_dimension_numbers<[1], [0], [0], [1], [0, 0, 1, 1], [], []>} : vector<392x36xbf16>, vector<36x256xbf16>, vector<392x256xf32> -> vector<392x256xf32>
    %c0_69 = arith.constant 0 : index
    %c1792_70 = arith.constant 1792 : index
    %89 = vector.load %arg4[%c0_69, %c1792_70] : memref<1x2048xf32, #tpu.memory_space<vmem>>, vector<1x256xf32>
    %90 = vector.broadcast %89 : vector<1x256xf32> to vector<392x256xf32>
    %91 = arith.addf %88, %90 : vector<392x256xf32>
    %cst_71 = arith.constant 0.000000e+00 : f32
    %92 = vector.broadcast %cst_71 : f32 to vector<392x256xf32>
    %93 = arith.maximumf %91, %92 : vector<392x256xf32>
    %cst_72 = arith.constant dense<0.000000e+00> : vector<2x256xf32>
    %94 = tpu.matmul %1, %93, %cst_72 {dimension_numbers = #tpu.dot_dimension_numbers<[1], [0], [0], [1], [0, 0, 1, 1], [], []>} : vector<2x392xf32>, vector<392x256xf32>, vector<2x256xf32> -> vector<2x256xf32>
    %95 = arith.truncf %94 : vector<2x256xf32> to vector<2x256xbf16>
    %c0_73 = arith.constant 0 : index
    %c1792_74 = arith.constant 1792 : index
    %96 = vector.load %arg5[%c0_73, %c1792_74] : memref<16x2048xbf16, #tpu.memory_space<vmem>>, vector<16x256xbf16>
    %cst_75 = arith.constant dense<0.000000e+00> : vector<2x16xf32>
    %97 = tpu.matmul %95, %96, %cst_75 {dimension_numbers = #tpu.dot_dimension_numbers<[1], [1], [0], [0], [0, 0, 1, 0], [], []>} : vector<2x256xbf16>, vector<16x256xbf16>, vector<2x16xf32> -> vector<2x16xf32>
    %98 = arith.addf %86, %97 : vector<2x16xf32>
    %c0_76 = arith.constant 0 : index
    %c0_77 = arith.constant 0 : index
    %99 = vector.load %arg6[%c0_76, %c0_77] : memref<1x16xf32, #tpu.memory_space<vmem>>, vector<1x16xf32>
    %100 = vector.broadcast %99 : vector<1x16xf32> to vector<2x16xf32>
    %101 = arith.addf %98, %100 : vector<2x16xf32>
    %cst_78 = arith.constant 5.000000e-01 : f32
    %102 = vector.broadcast %cst_78 : f32 to vector<2x16xf32>
    %103 = arith.mulf %102, %101 : vector<2x16xf32>
    %104 = math.tanh %103 : vector<2x16xf32>
    %cst_79 = arith.constant 1.000000e+00 : f32
    %105 = vector.broadcast %cst_79 : f32 to vector<2x16xf32>
    %106 = arith.addf %104, %105 : vector<2x16xf32>
    %cst_80 = arith.constant 5.000000e-01 : f32
    %107 = vector.broadcast %cst_80 : f32 to vector<2x16xf32>
    %108 = arith.mulf %107, %106 : vector<2x16xf32>
    %c0_81 = arith.constant 0 : index
    %c0_82 = arith.constant 0 : index
    %109 = vector.load %arg7[%c0_81, %c0_82] : memref<2x16xf32, #tpu.memory_space<vmem>>, vector<2x16xf32>
    tpu.vector_store %arg7[%c0_81, %c0_82], %108 {strides = array<i32>} : memref<2x16xf32, #tpu.memory_space<vmem>>, vector<2x16xf32>,
    return
  }
  func.func @transform_0(%arg0: i32) -> (i32, i32) {
    %c0_i32 = arith.constant 0 : i32
    %c0_i32_0 = arith.constant 0 : i32
    %c0_i32_1 = arith.constant 0 : i32
    return %c0_i32, %c0_i32_0 : i32, i32
  }
  func.func @transform_1(%arg0: i32) -> (i32, i32) {
    %c0_i32 = arith.constant 0 : i32
    %c0_i32_0 = arith.constant 0 : i32
    %c0_i32_1 = arith.constant 0 : i32
    return %c0_i32, %c0_i32_0 : i32, i32
  }
  func.func @transform_2(%arg0: i32) -> (i32, i32) {
    %c0_i32 = arith.constant 0 : i32
    %c0_i32_0 = arith.constant 0 : i32
    %c0_i32_1 = arith.constant 0 : i32
    return %c0_i32, %c0_i32_0 : i32, i32
  }
  func.func @transform_3(%arg0: i32) -> (i32, i32) {
    %c0_i32 = arith.constant 0 : i32
    %c0_i32_0 = arith.constant 0 : i32
    %c0_i32_1 = arith.constant 0 : i32
    return %c0_i32, %c0_i32_0 : i32, i32
  }
  func.func @transform_4(%arg0: i32) -> (i32, i32) {
    %c0_i32 = arith.constant 0 : i32
    %c0_i32_0 = arith.constant 0 : i32
    %c0_i32_1 = arith.constant 0 : i32
    return %c0_i32, %c0_i32_0 : i32, i32
  }
  func.func @transform_5(%arg0: i32) -> (i32, i32) {
    %c0_i32 = arith.constant 0 : i32
    %c0_i32_0 = arith.constant 0 : i32
    %c0_i32_1 = arith.constant 0 : i32
    return %c0_i32, %c0_i32_0 : i32, i32
  }
  func.func @transform_6(%arg0: i32) -> (i32, i32) {
    %c0_i32 = arith.constant 0 : i32
    %c0_i32_0 = arith.constant 0 : i32
    %c0_i32_1 = arith.constant 0 : i32
    return %c0_i32, %c0_i32_0 : i32, i32
  }
}

</mosaic_0001>

<llo_original>
// kernel: tpu_custom_call.1
$region0: #{tpu_custom_call.1}
  #allocation0 [shape = 'u32[]', space=smem, size = 0x4, offset = 0x4, fixed_abs, tag = 'smem constant byte address 0x4 - core index']
  #allocation1 [shape = 'u32[144,128]{1,0:T(1,128)}', space=vmem, size = 0x12000, scoped, tag = 'internal scratch']
  %s0 = inlined_call_operand.vmem [shape: bf16[392,36], index: 0, kind: input, shape index: {}]
  %s1 = inlined_call_operand.vmem [shape: f32[2,392], index: 1, kind: input, shape index: {}]
  %s2 = inlined_call_operand.hbm [shape: bf16[36,2048], index: 2, kind: input, shape index: {}]
  %s3 = inlined_call_operand.vmem [shape: f32[1,2048], index: 3, kind: input, shape index: {}]
  %s4 = inlined_call_operand.vmem [shape: bf16[16,2048], index: 4, kind: input, shape index: {}]
  %s5 = inlined_call_operand.vmem [shape: f32[1,16], index: 5, kind: input, shape index: {}]
  %s6 = inlined_call_operand.hbm [shape: f32[2,16], index: 6, kind: output, shape index: {}]
  %s7 = sld [smem:[#allocation0]]
  $region38: #{tpu_custom_call.1} parent=0
    _
  %s9 = ssub.s32 1, %s7
  %s10 = scalar_select 0, %s9, %s7
  $region1: #{tpu_custom_call.1} parent=0
    #allocation2 [shape = 'u8[163840]{0}', space=vmem, size = 0x28000, scoped, tag = 'input window, operand 2, single buffered']
    #allocation3 [shape = 's32[1]{0}', space=sflag, size = 0x4, scoped, tag = 'scoped memory for tpu_custom_call.1']
    #allocation4 [shape = 's32[1]{0}', space=sflag, size = 0x4, scoped, tag = 'scoped memory for tpu_custom_call.1']
    #allocation5 [shape = 'u8[1024]{0}', space=vmem, size = 0x400, scoped, tag = 'output window, operand 0, single buffered']
    %11 = vsyncpa [#allocation3], 0
    %12 = vsyncpa [#allocation4], 0
    // Predicated region
    $region2: #{tpu_custom_call.1} parent=1 // pred_check
      _
    $region3: #{tpu_custom_call.1} parent=1 // pred_check_branch
      %14 = sbr.rel (0) target = $region5
    $region4: #{tpu_custom_call.1} parent=1 // pred_region
      _
    $region5: #{tpu_custom_call.1} parent=1 // pred_fallthru
      _
    // Predicated region
    $region6: #{tpu_custom_call.1} parent=1 // pred_check
      _
    $region7: #{tpu_custom_call.1} parent=1 // pred_check_branch
      %16 = sbr.rel (0) target = $region9
    $region8: #{tpu_custom_call.1} parent=1 // pred_region
      _
    $region9: #{tpu_custom_call.1} parent=1 // pred_fallthru
      _
    // Predicated region
    $region10: #{tpu_custom_call.1} parent=1 // pred_check
      _
    $region11: #{tpu_custom_call.1} parent=1 // pred_check_branch
      %18 = sbr.rel (0) target = $region13
    $region12: #{tpu_custom_call.1} parent=1 // pred_region
      %s20 = ssub.s32 5120, 5120
      %21 = vsyncadd [#allocation3], %s20
      %s22 = sshll.u32 [#allocation2], 4
      %s23 = int_to_ptr.vmem [resolvable:$true] %s22
      %28 = dma.hbm_to_vmem [thread:$0]  %s2, 5120, %s23, [#allocation3], 1024, 1024, 64
    $region13: #{tpu_custom_call.1} parent=1 // pred_fallthru
      _
    // Predicated region
    $region14: #{tpu_custom_call.1} parent=1 // pred_check
      _
    $region15: #{tpu_custom_call.1} parent=1 // pred_check_branch
      %30 = sbr.rel (0) target = $region17
    $region16: #{tpu_custom_call.1} parent=1 // pred_region
      _
    $region17: #{tpu_custom_call.1} parent=1 // pred_fallthru
      _
    // Predicated region
    $region18: #{tpu_custom_call.1} parent=1 // pred_check
      _
    $region19: #{tpu_custom_call.1} parent=1 // pred_check_branch
      %32 = sbr.rel (0) target = $region21
    $region20: #{tpu_custom_call.1} parent=1 // pred_region
      _
    $region21: #{tpu_custom_call.1} parent=1 // pred_fallthru
      _
    // Predicated region
    $region22: #{tpu_custom_call.1} parent=1 // pred_check
      _
    $region23: #{tpu_custom_call.1} parent=1 // pred_check_branch
      %34 = sbr.rel (0) target = $region25
    $region24: #{tpu_custom_call.1} parent=1 // pred_region
      _
    $region25: #{tpu_custom_call.1} parent=1 // pred_fallthru
      _
    // Predicated region
    $region26: #{tpu_custom_call.1} parent=1 // pred_check
      _
    $region27: #{tpu_custom_call.1} parent=1 // pred_check_branch
      %36 = sbr.rel (0) target = $region29
    $region28: #{tpu_custom_call.1} parent=1 // pred_region
      %37 = dma.done [#allocation3], 5120
    $region29: #{tpu_custom_call.1} parent=1 // pred_fallthru
      _
    %v39 = vld [vmem:[%s0] sm:$0xf]
    %v40 = vld [vmem:[%s0 + $0x4] sm:$0xf]
    %v41 = vld [vmem:[%s0 + $0x8] sm:$0xf]
    %v42 = vld [vmem:[%s0 + $0xc] sm:$0xf]
    %v43 = vld [vmem:[%s0 + $0x10] sm:$0xf]
    %v44 = vld [vmem:[%s0 + $0x14] sm:$0xf]
    %v45 = vld [vmem:[%s0 + $0x18] sm:$0xf]
    %v46 = vld [vmem:[%s0 + $0x1c] sm:$0xf]
    %v47 = vld [vmem:[%s0 + $0x20] sm:$0xf]
    %v48 = vld [vmem:[%s0 + $0x24] sm:$0xf]
    %v49 = vld [vmem:[%s0 + $0x28] sm:$0xf]
    %v50 = vld [vmem:[%s0 + $0x2c] sm:$0xf]
    %v51 = vld [vmem:[%s0 + $0x30] sm:$0xf]
    %v52 = vld [vmem:[%s0 + $0x34] sm:$0xf]
    %v53 = vld [vmem:[%s0 + $0x38] sm:$0xf]
    %v54 = vld [vmem:[%s0 + $0x3c] sm:$0xf]
    %v55 = vld [vmem:[%s0 + $0x40] sm:$0xf]
    %v56 = vld [vmem:[%s0 + $0x44] sm:$0xf]
    %v57 = vld [vmem:[%s0 + $0x48] sm:$0xf]
    %v58 = vld [vmem:[%s0 + $0x4c] sm:$0xf]
    %v59 = vld [vmem:[%s0 + $0x50] sm:$0xf]
    %v60 = vld [vmem:[%s0 + $0x54] sm:$0xf]
    %v61 = vld [vmem:[%s0 + $0x58] sm:$0xf]
    %v62 = vld [vmem:[%s0 + $0x5c] sm:$0xf]
    %v63 = vld [vmem:[%s0 + $0x60] sm:$0xf]
    %v64 = vld [vmem:[%s0 + $0x64] sm:$0xf]
    %v65 = vld [vmem:[%s0 + $0x68] sm:$0xf]
    %v66 = vld [vmem:[%s0 + $0x6c] sm:$0xf]
    %v67 = vld [vmem:[%s0 + $0x70] sm:$0xf]
    %v68 = vld [vmem:[%s0 + $0x74] sm:$0xf]
    %v69 = vld [vmem:[%s0 + $0x78] sm:$0xf]
    %v70 = vld [vmem:[%s0 + $0x7c] sm:$0xf]
    %v71 = vld [vmem:[%s0 + $0x80] sm:$0xf]
    %v72 = vld [vmem:[%s0 + $0x84] sm:$0xf]
    %v73 = vld [vmem:[%s0 + $0x88] sm:$0xf]
    %v74 = vld [vmem:[%s0 + $0x8c] sm:$0xf]
    %v75 = vld [vmem:[%s0 + $0x90] sm:$0xf]
    %v76 = vld [vmem:[%s0 + $0x94] sm:$0xf]
    %v77 = vld [vmem:[%s0 + $0x98] sm:$0xf]
    %v78 = vld [vmem:[%s0 + $0x9c] sm:$0xf]
    %v79 = vld [vmem:[%s0 + $0xa0] sm:$0xf]
    %v80 = vld [vmem:[%s0 + $0xa4] sm:$0xf]
    %v81 = vld [vmem:[%s0 + $0xa8] sm:$0xf]
    %v82 = vld [vmem:[%s0 + $0xac] sm:$0xf]
    %v83 = vld [vmem:[%s0 + $0xb0] sm:$0xf]
    %v84 = vld [vmem:[%s0 + $0xb4] sm:$0xf]
    %v85 = vld [vmem:[%s0 + $0xb8] sm:$0xf]
    %v86 = vld [vmem:[%s0 + $0xbc] sm:$0xf]
    %v87 = vld [vmem:[%s0 + $0xc0] sm:$0xf]
    %v88 = vld [vmem:[%s1] sm:$0xff]
    %v89 = vld [vmem:[#allocation2] sm:$0xff]
    %v90 = vld [vmem:[#allocation2 + $0x40] sm:$0xff]
    %v91 = vld [vmem:[#allocation2 + $0x80] sm:$0xff]
    %v92 = vld [vmem:[#allocation2 + $0xc0] sm:$0xff]
    %v93 = vld [vmem:[#allocation2 + $0x100] sm:$0x33]
    %v94 = vld [vmem:[%s3] sm:$0x3]
    %v96 = vlaneseq
    %v97 = vshrl.u32 %v96, 7
    %v98 = vsub.s32 0, %v97
    %v99 = vrot.slane %v94, %v98
    %v100 = vlaneseq
    %v101 = vshrl.u32 %v100, 7
    %v102 = vsub.s32 1, %v101
    %v103 = vrot.slane %v94, %v102
    %v155 = vunpack.c.l.b16 %v39
    %v156 = vunpack.c.l.b16 %v40
    %v157 = vunpack.c.l.b16 %v41
    %v158 = vunpack.c.l.b16 %v42
    %v159 = vunpack.c.l.b16 %v43
    %v160 = vunpack.c.l.b16 %v44
    %v161 = vunpack.c.l.b16 %v45
    %v162 = vunpack.c.l.b16 %v46
    %v163 = vunpack.c.l.b16 %v47
    %v164 = vunpack.c.l.b16 %v48
    %v165 = vunpack.c.l.b16 %v49
    %v166 = vunpack.c.l.b16 %v50
    %v167 = vunpack.c.l.b16 %v51
    %v168 = vunpack.c.l.b16 %v52
    %v169 = vunpack.c.l.b16 %v53
    %v170 = vunpack.c.l.b16 %v54
    %v171 = vunpack.c.l.b16 %v55
    %v172 = vunpack.c.l.b16 %v56
    %v173 = vunpack.c.l.b16 %v57
    %v174 = vunpack.c.l.b16 %v58
    %v175 = vunpack.c.l.b16 %v59
    %v176 = vunpack.c.l.b16 %v60
    %v177 = vunpack.c.l.b16 %v61
    %v178 = vunpack.c.l.b16 %v62
    %v179 = vunpack.c.l.b16 %v63
    %v180 = vunpack.c.l.b16 %v64
    %v181 = vunpack.c.l.b16 %v65
    %v182 = vunpack.c.l.b16 %v66
    %v183 = vunpack.c.l.b16 %v67
    %v184 = vunpack.c.l.b16 %v68
    %v185 = vunpack.c.l.b16 %v69
    %v186 = vunpack.c.l.b16 %v70
    %v187 = vunpack.c.l.b16 %v71
    %v188 = vunpack.c.l.b16 %v72
    %v189 = vunpack.c.l.b16 %v73
    %v190 = vunpack.c.l.b16 %v74
    %v191 = vunpack.c.l.b16 %v75
    %v192 = vunpack.c.l.b16 %v76
    %v193 = vunpack.c.l.b16 %v77
    %v194 = vunpack.c.l.b16 %v78
    %v195 = vunpack.c.l.b16 %v79
    %v196 = vunpack.c.l.b16 %v80
    %v197 = vunpack.c.l.b16 %v81
    %v198 = vunpack.c.l.b16 %v82
    %v199 = vunpack.c.l.b16 %v83
    %v200 = vunpack.c.l.b16 %v84
    %v201 = vunpack.c.l.b16 %v85
    %v202 = vunpack.c.l.b16 %v86
    %v203 = vunpack.c.l.b16 %v87
    %v204 = vpack.c.b16 %v156, %v155
    %v205 = vpack.c.b16 %v158, %v157
    %v206 = vpack.c.b16 %v160, %v159
    %v207 = vpack.c.b16 %v162, %v161
    %v208 = vpack.c.b16 %v164, %v163
    %v209 = vpack.c.b16 %v166, %v165
    %v210 = vpack.c.b16 %v168, %v167
    %v211 = vpack.c.b16 %v170, %v169
    %v212 = vpack.c.b16 %v172, %v171
    %v213 = vpack.c.b16 %v174, %v173
    %v214 = vpack.c.b16 %v176, %v175
    %v215 = vpack.c.b16 %v178, %v177
    %v216 = vpack.c.b16 %v180, %v179
    %v217 = vpack.c.b16 %v182, %v181
    %v218 = vpack.c.b16 %v184, %v183
    %v219 = vpack.c.b16 %v186, %v185
    %v220 = vpack.c.b16 %v188, %v187
    %v221 = vpack.c.b16 %v190, %v189
    %v222 = vpack.c.b16 %v192, %v191
    %v223 = vpack.c.b16 %v194, %v193
    %v224 = vpack.c.b16 %v196, %v195
    %v225 = vpack.c.b16 %v198, %v197
    %v226 = vpack.c.b16 %v200, %v199
    %v227 = vpack.c.b16 %v202, %v201
    %v228 = vpack.c.b16 %v203, %v203
    %v234 = vunpack.c.l.b16 %v89
    %v235 = vunpack.c.h.b16 %v89
    %v236 = vunpack.c.l.b16 %v90
    %v237 = vunpack.c.h.b16 %v90
    %v238 = vunpack.c.l.b16 %v91
    %v239 = vunpack.c.h.b16 %v91
    %v240 = vunpack.c.l.b16 %v92
    %v241 = vunpack.c.h.b16 %v92
    %v242 = vunpack.c.l.b16 %v93
    %v243 = vunpack.c.h.b16 %v93
    %v244 = vpack.c.b16 %v236, %v234
    %v245 = vpack.c.b16 %v237, %v235
    %v246 = vpack.c.b16 %v240, %v238
    %v247 = vpack.c.b16 %v241, %v239
    %v248 = vpack.c.b16 %v242, %v242
    %v249 = vpack.c.b16 %v243, %v243
    %vm254 = vcmask 293888
    %v256 = vsel %vm254, %v204, 0
    %v259 = vsel %vm254, %v205, 0
    %v262 = vsel %vm254, %v206, 0
    %v265 = vsel %vm254, %v207, 0
    %v268 = vsel %vm254, %v208, 0
    %v271 = vsel %vm254, %v209, 0
    %v274 = vsel %vm254, %v210, 0
    %v277 = vsel %vm254, %v211, 0
    %v280 = vsel %vm254, %v212, 0
    %v283 = vsel %vm254, %v213, 0
    %v286 = vsel %vm254, %v214, 0
    %v289 = vsel %vm254, %v215, 0
    %v292 = vsel %vm254, %v216, 0
    %v295 = vsel %vm254, %v217, 0
    %v298 = vsel %vm254, %v218, 0
    %v301 = vsel %vm254, %v219, 0
    %v304 = vsel %vm254, %v220, 0
    %v307 = vsel %vm254, %v221, 0
    %v310 = vsel %vm254, %v222, 0
    %v313 = vsel %vm254, %v223, 0
    %v316 = vsel %vm254, %v224, 0
    %v319 = vsel %vm254, %v225, 0
    %v322 = vsel %vm254, %v226, 0
    %v325 = vsel %vm254, %v227, 0
    %v328 = vsel %vm254, %v228, 0
    %vm330 = vcmask 1041408
    %v332 = vsel %vm330, %v248, 0
    %v335 = vsel %vm330, %v249, 0
    %337 = vmatprep.subr.bf16.mxu0 %v245
    %338 = vmatpush1.bf16.msra.mxu0 %v244
    %339 = vmatprep.subr.bf16.mxu0 %v247
    %340 = vmatpush1.bf16.msra.mxu0 %v246
    %341 = vmatprep.subr.bf16.mxu0 %v335
    %342 = vmatpush1.bf16.msra.mxu0 %v332
    %343 = vmatprep.subr.bf16.mxu0 0
    %344 = vmatpush1.bf16.msra.mxu0 0
    %345 = vmatprep.subr.bf16.mxu0 0
    %346 = vmatpush1.bf16.msra.mxu0 0
    %347 = vmatprep.subr.bf16.mxu0 0
    %348 = vmatpush1.bf16.msra.mxu0 0
    %349 = vmatprep.subr.bf16.mxu0 0
    %350 = vmatpush1.bf16.msra.mxu0 0
    %351 = vmatprep.subr.bf16.mxu0 0
    %352 = vmatpush1.bf16.msra.mxu0 0
    %353 = vmatprep.subr.bf16.mxu0 0
    %354 = vmatpush1.bf16.msra.mxu0 0
    %355 = vmatprep.subr.bf16.mxu0 0
    %356 = vmatpush1.bf16.msra.mxu0 0
    %357 = vmatprep.subr.bf16.mxu0 0
    %358 = vmatpush1.bf16.msra.mxu0 0
    %359 = vmatprep.subr.bf16.mxu0 0
    %360 = vmatpush1.bf16.msra.mxu0 0
    %361 = vmatprep.subr.bf16.mxu0 0
    %362 = vmatpush1.bf16.msra.mxu0 0
    %363 = vmatprep.subr.bf16.mxu0 0
    %364 = vmatpush1.bf16.msra.mxu0 0
    %365 = vmatprep.subr.bf16.mxu0 0
    %366 = vmatpush1.bf16.msra.mxu0 0
    %367 = vmatprep.subr.bf16.mxu0 0
    %368 = vmatpush1.bf16.msra.mxu0 0
    %369 = vmatprep.mubr.bf16.mxu0 0
    %370 = vmatmul.mubr.bf16.gmra.mrb[0].mxu0 %v256
    %v371 = vpop.f32.mrb[0].mxu0
    %v372 = vadd.f32 %v99, %v371
    %v373 = vpop.f32.mrb[0].mxu0
    %v374 = vadd.f32 %v103, %v373
    %v375 = vpop.f32.mrb[0].mxu0
    %v376 = vadd.f32 %v99, %v375
    %v377 = vpop.f32.mrb[0].mxu0
    %v378 = vadd.f32 %v103, %v377
    %379 = vmatprep.mubr.bf16.mxu0 0
    %380 = vmatmul.mubr.bf16.gmra.mrb[0].mxu0 %v259
    %v381 = vpop.f32.mrb[0].mxu0
    %v382 = vadd.f32 %v99, %v381
    %v383 = vpop.f32.mrb[0].mxu0
    %v384 = vadd.f32 %v103, %v383
    %v385 = vpop.f32.mrb[0].mxu0
    %v386 = vadd.f32 %v99, %v385
    %v387 = vpop.f32.mrb[0].mxu0
    %v388 = vadd.f32 %v103, %v387
    %389 = vmatprep.mubr.bf16.mxu0 0
    %390 = vmatmul.mubr.bf16.gmra.mrb[0].mxu0 %v262
    %v391 = vpop.f32.mrb[0].mxu0
    %v392 = vadd.f32 %v99, %v391
    %v393 = vpop.f32.mrb[0].mxu0
    %v394 = vadd.f32 %v103, %v393
    %v395 = vpop.f32.mrb[0].mxu0
    %v396 = vadd.f32 %v99, %v395
    %v397 = vpop.f32.mrb[0].mxu0
    %v398 = vadd.f32 %v103, %v397
    %399 = vmatprep.mubr.bf16.mxu0 0
    %400 = vmatmul.mubr.bf16.gmra.mrb[0].mxu0 %v265
    %v401 = vpop.f32.mrb[0].mxu0
    %v402 = vadd.f32 %v99, %v401
    %v403 = vpop.f32.mrb[0].mxu0
    %v404 = vadd.f32 %v103, %v403
    %v405 = vpop.f32.mrb[0].mxu0
    %v406 = vadd.f32 %v99, %v405
    %v407 = vpop.f32.mrb[0].mxu0
    %v408 = vadd.f32 %v103, %v407
    %409 = vmatprep.mubr.bf16.mxu0 0
    %410 = vmatmul.mubr.bf16.gmra.mrb[0].mxu0 %v268
    %v411 = vpop.f32.mrb[0].mxu0
    %v412 = vadd.f32 %v99, %v411
    %v413 = vpop.f32.mrb[0].mxu0
    %v414 = vadd.f32 %v103, %v413
    %v415 = vpop.f32.mrb[0].mxu0
    %v416 = vadd.f32 %v99, %v415
    %v417 = vpop.f32.mrb[0].mxu0
    %v418 = vadd.f32 %v103, %v417
    %419 = vmatprep.mubr.bf16.mxu0 0
    %420 = vmatmul.mubr.bf16.gmra.mrb[0].mxu0 %v271
    %v421 = vpop.f32.mrb[0].mxu0
    %v422 = vadd.f32 %v99, %v421
    %v423 = vpop.f32.mrb[0].mxu0
    %v424 = vadd.f32 %v103, %v423
    %v425 = vpop.f32.mrb[0].mxu0
    %v426 = vadd.f32 %v99, %v425
    %v427 = vpop.f32.mrb[0].mxu0
    %v428 = vadd.f32 %v103, %v427
    %429 = vmatprep.mubr.bf16.mxu0 0
    %430 = vmatmul.mubr.bf16.gmra.mrb[0].mxu0 %v274
    %v431 = vpop.f32.mrb[0].mxu0
    %v432 = vadd.f32 %v99, %v431
    %v433 = vpop.f32.mrb[0].mxu0
    %v434 = vadd.f32 %v103, %v433
    %v435 = vpop.f32.mrb[0].mxu0
    %v436 = vadd.f32 %v99, %v435
    %v437 = vpop.f32.mrb[0].mxu0
    %v438 = vadd.f32 %v103, %v437
    %439 = vmatprep.mubr.bf16.mxu0 0
    %440 = vmatmul.mubr.bf16.gmra.mrb[0].mxu0 %v277
    %v441 = vpop.f32.mrb[0].mxu0
    %v442 = vadd.f32 %v99, %v441
    %v443 = vpop.f32.mrb[0].mxu0
    %v444 = vadd.f32 %v103, %v443
    %v445 = vpop.f32.mrb[0].mxu0
    %v446 = vadd.f32 %v99, %v445
    %v447 = vpop.f32.mrb[0].mxu0
    %v448 = vadd.f32 %v103, %v447
    %449 = vmatprep.mubr.bf16.mxu0 0
    %450 = vmatmul.mubr.bf16.gmra.mrb[0].mxu0 %v280
    %v451 = vpop.f32.mrb[0].mxu0
    %v452 = vadd.f32 %v99, %v451
    %v453 = vpop.f32.mrb[0].mxu0
    %v454 = vadd.f32 %v103, %v453
    %v455 = vpop.f32.mrb[0].mxu0
    %v456 = vadd.f32 %v99, %v455
    %v457 = vpop.f32.mrb[0].mxu0
    %v458 = vadd.f32 %v103, %v457
    %459 = vmatprep.mubr.bf16.mxu0 0
    %460 = vmatmul.mubr.bf16.gmra.mrb[0].mxu0 %v283
    %v461 = vpop.f32.mrb[0].mxu0
    %v462 = vadd.f32 %v99, %v461
    %v463 = vpop.f32.mrb[0].mxu0
    %v464 = vadd.f32 %v103, %v463
    %v465 = vpop.f32.mrb[0].mxu0
    %v466 = vadd.f32 %v99, %v465
    %v467 = vpop.f32.mrb[0].mxu0
    %v468 = vadd.f32 %v103, %v467
    %469 = vmatprep.mubr.bf16.mxu0 0
    %470 = vmatmul.mubr.bf16.gmra.mrb[0].mxu0 %v286
    %v471 = vpop.f32.mrb[0].mxu0
    %v472 = vadd.f32 %v99, %v471
    %v473 = vpop.f32.mrb[0].mxu0
    %v474 = vadd.f32 %v103, %v473
    %v475 = vpop.f32.mrb[0].mxu0
    %v476 = vadd.f32 %v99, %v475
    %v477 = vpop.f32.mrb[0].mxu0
    %v478 = vadd.f32 %v103, %v477
    %479 = vmatprep.mubr.bf16.mxu0 0
    %480 = vmatmul.mubr.bf16.gmra.mrb[0].mxu0 %v289
    %v481 = vpop.f32.mrb[0].mxu0
    %v482 = vadd.f32 %v99, %v481
    %v483 = vpop.f32.mrb[0].mxu0
    %v484 = vadd.f32 %v103, %v483
    %v485 = vpop.f32.mrb[0].mxu0
    %v486 = vadd.f32 %v99, %v485
    %v487 = vpop.f32.mrb[0].mxu0
    %v488 = vadd.f32 %v103, %v487
    %489 = vmatprep.mubr.bf16.mxu0 0
    %490 = vmatmul.mubr.bf16.gmra.mrb[0].mxu0 %v292
    %v491 = vpop.f32.mrb[0].mxu0
    %v492 = vadd.f32 %v99, %v491
    %v493 = vpop.f32.mrb[0].mxu0
    %v494 = vadd.f32 %v103, %v493
    %v495 = vpop.f32.mrb[0].mxu0
    %v496 = vadd.f32 %v99, %v495
    %v497 = vpop.f32.mrb[0].mxu0
    %v498 = vadd.f32 %v103, %v497
    %499 = vmatprep.mubr.bf16.mxu0 0
    %500 = vmatmul.mubr.bf16.gmra.mrb[0].mxu0 %v295
    %v501 = vpop.f32.mrb[0].mxu0
    %v502 = vadd.f32 %v99, %v501
    %v503 = vpop.f32.mrb[0].mxu0
    %v504 = vadd.f32 %v103, %v503
    %v505 = vpop.f32.mrb[0].mxu0
    %v506 = vadd.f32 %v99, %v505
    %v507 = vpop.f32.mrb[0].mxu0
    %v508 = vadd.f32 %v103, %v507
    %509 = vmatprep.mubr.bf16.mxu0 0
    %510 = vmatmul.mubr.bf16.gmra.mrb[0].mxu0 %v298
    %v511 = vpop.f32.mrb[0].mxu0
    %v512 = vadd.f32 %v99, %v511
    %v513 = vpop.f32.mrb[0].mxu0
    %v514 = vadd.f32 %v103, %v513
    %v515 = vpop.f32.mrb[0].mxu0
    %v516 = vadd.f32 %v99, %v515
    %v517 = vpop.f32.mrb[0].mxu0
    %v518 = vadd.f32 %v103, %v517
    %519 = vmatprep.mubr.bf16.mxu0 0
    %520 = vmatmul.mubr.bf16.gmra.mrb[0].mxu0 %v301
    %v521 = vpop.f32.mrb[0].mxu0
    %v522 = vadd.f32 %v99, %v521
    %v523 = vpop.f32.mrb[0].mxu0
    %v524 = vadd.f32 %v103, %v523
    %v525 = vpop.f32.mrb[0].mxu0
    %v526 = vadd.f32 %v99, %v525
    %v527 = vpop.f32.mrb[0].mxu0
    %v528 = vadd.f32 %v103, %v527
    %529 = vmatprep.mubr.bf16.mxu0 0
    %530 = vmatmul.mubr.bf16.gmra.mrb[0].mxu0 %v304
    %v531 = vpop.f32.mrb[0].mxu0
    %v532 = vadd.f32 %v99, %v531
    %v533 = vpop.f32.mrb[0].mxu0
    %v534 = vadd.f32 %v103, %v533
    %v535 = vpop.f32.mrb[0].mxu0
    %v536 = vadd.f32 %v99, %v535
    %v537 = vpop.f32.mrb[0].mxu0
    %v538 = vadd.f32 %v103, %v537
    %539 = vmatprep.mubr.bf16.mxu0 0
    %540 = vmatmul.mubr.bf16.gmra.mrb[0].mxu0 %v307
    %v541 = vpop.f32.mrb[0].mxu0
    %v542 = vadd.f32 %v99, %v541
    %v543 = vpop.f32.mrb[0].mxu0
    %v544 = vadd.f32 %v103, %v543
    %v545 = vpop.f32.mrb[0].mxu0
    %v546 = vadd.f32 %v99, %v545
    %v547 = vpop.f32.mrb[0].mxu0
    %v548 = vadd.f32 %v103, %v547
    %549 = vmatprep.mubr.bf16.mxu0 0
    %550 = vmatmul.mubr.bf16.gmra.mrb[0].mxu0 %v310
    %v551 = vpop.f32.mrb[0].mxu0
    %v552 = vadd.f32 %v99, %v551
    %v553 = vpop.f32.mrb[0].mxu0
    %v554 = vadd.f32 %v103, %v553
    %v555 = vpop.f32.mrb[0].mxu0
    %v556 = vadd.f32 %v99, %v555
    %v557 = vpop.f32.mrb[0].mxu0
    %v558 = vadd.f32 %v103, %v557
    %559 = vmatprep.mubr.bf16.mxu0 0
    %560 = vmatmul.mubr.bf16.gmra.mrb[0].mxu0 %v313
    %v561 = vpop.f32.mrb[0].mxu0
    %v562 = vadd.f32 %v99, %v561
    %v563 = vpop.f32.mrb[0].mxu0
    %v564 = vadd.f32 %v103, %v563
    %v565 = vpop.f32.mrb[0].mxu0
    %v566 = vadd.f32 %v99, %v565
    %v567 = vpop.f32.mrb[0].mxu0
    %v568 = vadd.f32 %v103, %v567
    %569 = vmatprep.mubr.bf16.mxu0 0
    %570 = vmatmul.mubr.bf16.gmra.mrb[0].mxu0 %v316
    %v571 = vpop.f32.mrb[0].mxu0
    %v572 = vadd.f32 %v99, %v571
    %v573 = vpop.f32.mrb[0].mxu0
    %v574 = vadd.f32 %v103, %v573
    %v575 = vpop.f32.mrb[0].mxu0
    %v576 = vadd.f32 %v99, %v575
    %v577 = vpop.f32.mrb[0].mxu0
    %v578 = vadd.f32 %v103, %v577
    %579 = vmatprep.mubr.bf16.mxu0 0
    %580 = vmatmul.mubr.bf16.gmra.mrb[0].mxu0 %v319
    %v581 = vpop.f32.mrb[0].mxu0
    %v582 = vadd.f32 %v99, %v581
    %v583 = vpop.f32.mrb[0].mxu0
    %v584 = vadd.f32 %v103, %v583
    %v585 = vpop.f32.mrb[0].mxu0
    %v586 = vadd.f32 %v99, %v585
    %v587 = vpop.f32.mrb[0].mxu0
    %v588 = vadd.f32 %v103, %v587
    %589 = vmatprep.mubr.bf16.mxu0 0
    %590 = vmatmul.mubr.bf16.gmra.mrb[0].mxu0 %v322
    %v591 = vpop.f32.mrb[0].mxu0
    %v592 = vadd.f32 %v99, %v591
    %v593 = vpop.f32.mrb[0].mxu0
    %v594 = vadd.f32 %v103, %v593
    %v595 = vpop.f32.mrb[0].mxu0
    %v596 = vadd.f32 %v99, %v595
    %v597 = vpop.f32.mrb[0].mxu0
    %v598 = vadd.f32 %v103, %v597
    %599 = vmatprep.mubr.bf16.mxu0 0
    %600 = vmatmul.mubr.bf16.gmra.mrb[0].mxu0 %v325
    %v601 = vpop.f32.mrb[0].mxu0
    %v602 = vadd.f32 %v99, %v601
    %v603 = vpop.f32.mrb[0].mxu0
    %v604 = vadd.f32 %v103, %v603
    %v605 = vpop.f32.mrb[0].mxu0
    %v606 = vadd.f32 %v99, %v605
    %v607 = vpop.f32.mrb[0].mxu0
    %v608 = vadd.f32 %v103, %v607
    %609 = vmatprep.mubr.bf16.mxu0 0
    %610 = vmatmul.mubr.bf16.gmra.mrb[0].mxu0 %v328
    %v611 = vpop.f32.mrb[0].mxu0
    %v612 = vadd.f32 %v99, %v611
    %v613 = vpop.f32.mrb[0].mxu0
    %v614 = vadd.f32 %v103, %v613
    %v615 = vpop.f32.mrb[0].mxu0
    %v616 = vpop.f32.mrb[0].mxu0
    %617 = vdwg.mxu0
    %v618 = vmax.f32 %v372, 0.0
    %v619 = vmax.f32 %v374, 0.0
    %v620 = vmax.f32 %v376, 0.0
    %v621 = vmax.f32 %v378, 0.0
    %v622 = vmax.f32 %v382, 0.0
    %v623 = vmax.f32 %v384, 0.0
    %v624 = vmax.f32 %v386, 0.0
    %v625 = vmax.f32 %v388, 0.0
    %v626 = vmax.f32 %v392, 0.0
    %v627 = vmax.f32 %v394, 0.0
    %v628 = vmax.f32 %v396, 0.0
    %v629 = vmax.f32 %v398, 0.0
    %v630 = vmax.f32 %v402, 0.0
    %v631 = vmax.f32 %v404, 0.0
    %v632 = vmax.f32 %v406, 0.0
    %v633 = vmax.f32 %v408, 0.0
    %v634 = vmax.f32 %v412, 0.0
    %v635 = vmax.f32 %v414, 0.0
    %v636 = vmax.f32 %v416, 0.0
    %v637 = vmax.f32 %v418, 0.0
    %v638 = vmax.f32 %v422, 0.0
    %v639 = vmax.f32 %v424, 0.0
    %v640 = vmax.f32 %v426, 0.0
    %v641 = vmax.f32 %v428, 0.0
    %v642 = vmax.f32 %v432, 0.0
    %v643 = vmax.f32 %v434, 0.0
    %v644 = vmax.f32 %v436, 0.0
    %v645 = vmax.f32 %v438, 0.0
    %v646 = vmax.f32 %v442, 0.0
    %v647 = vmax.f32 %v444, 0.0
    %v648 = vmax.f32 %v446, 0.0
    %v649 = vmax.f32 %v448, 0.0
    %v650 = vmax.f32 %v452, 0.0
    %v651 = vmax.f32 %v454, 0.0
    %v652 = vmax.f32 %v456, 0.0
    %v653 = vmax.f32 %v458, 0.0
    %v654 = vmax.f32 %v462, 0.0
    %v655 = vmax.f32 %v464, 0.0
    %v656 = vmax.f32 %v466, 0.0
    %v657 = vmax.f32 %v468, 0.0
    %v658 = vmax.f32 %v472, 0.0
    %v659 = vmax.f32 %v474, 0.0
    %v660 = vmax.f32 %v476, 0.0
    %v661 = vmax.f32 %v478, 0.0
    %v662 = vmax.f32 %v482, 0.0
    %v663 = vmax.f32 %v484, 0.0
    %v664 = vmax.f32 %v486, 0.0
    %v665 = vmax.f32 %v488, 0.0
    %v666 = vmax.f32 %v492, 0.0
    %v667 = vmax.f32 %v494, 0.0
    %v668 = vmax.f32 %v496, 0.0
    %v669 = vmax.f32 %v498, 0.0
    %v670 = vmax.f32 %v502, 0.0
    %v671 = vmax.f32 %v504, 0.0
    %v672 = vmax.f32 %v506, 0.0
    %v673 = vmax.f32 %v508, 0.0
    %v674 = vmax.f32 %v512, 0.0
    %v675 = vmax.f32 %v514, 0.0
    %v676 = vmax.f32 %v516, 0.0
    %v677 = vmax.f32 %v518, 0.0
    %v678 = vmax.f32 %v522, 0.0
    %v679 = vmax.f32 %v524, 0.0
    %v680 = vmax.f32 %v526, 0.0
    %v681 = vmax.f32 %v528, 0.0
    %v682 = vmax.f32 %v532, 0.0
    %v683 = vmax.f32 %v534, 0.0
    %v684 = vmax.f32 %v536, 0.0
    %v685 = vmax.f32 %v538, 0.0
    %v686 = vmax.f32 %v542, 0.0
    %v687 = vmax.f32 %v544, 0.0
    %v688 = vmax.f32 %v546, 0.0
    %v689 = vmax.f32 %v548, 0.0
    %v690 = vmax.f32 %v552, 0.0
    %v691 = vmax.f32 %v554, 0.0
    %v692 = vmax.f32 %v556, 0.0
    %v693 = vmax.f32 %v558, 0.0
    %v694 = vmax.f32 %v562, 0.0
    %v695 = vmax.f32 %v564, 0.0
    %v696 = vmax.f32 %v566, 0.0
    %v697 = vmax.f32 %v568, 0.0
    %v698 = vmax.f32 %v572, 0.0
    %v699 = vmax.f32 %v574, 0.0
    %v700 = vmax.f32 %v576, 0.0
    %v701 = vmax.f32 %v578, 0.0
    %v702 = vmax.f32 %v582, 0.0
    %v703 = vmax.f32 %v584, 0.0
    %v704 = vmax.f32 %v586, 0.0
    %v705 = vmax.f32 %v588, 0.0
    %v706 = vmax.f32 %v592, 0.0
    %v707 = vmax.f32 %v594, 0.0
    %v708 = vmax.f32 %v596, 0.0
    %v709 = vmax.f32 %v598, 0.0
    %v710 = vmax.f32 %v602, 0.0
    %v711 = vmax.f32 %v604, 0.0
    %v712 = vmax.f32 %v606, 0.0
    %v713 = vmax.f32 %v608, 0.0
    %v714 = vmax.f32 %v612, 0.0
    %v715 = vmax.f32 %v614, 0.0
    %v717 = vcombine.high %v88, %v88
    %v719 = vunpack.c.l.s4 1983009808
    %v720 = vunpack.c.0.s8 %v719
    %v721 = vlaneseq
    %v722 = vshrl.u32 %v721, 7
    %v723 = vsub.s32 %v720, %v722
    %v724 = vrot.slane %v88, %v723
    %v726 = vunpack.c.l.s4 1983009808
    %v727 = vunpack.c.0.s8 %v726
    %v728 = vlaneseq
    %v729 = vshrl.u32 %v728, 7
    %v730 = vsub.s32 %v727, %v729
    %v731 = vrot.slane %v717, %v730
    %v732 = vcombine.high %v724, %v724
    %v733 = vcombine.high %v731, %v731
    %vm737 = vcmask 64512
    %v738 = vsel %vm737, %v733, 0
    %740 = vmatprep.subr.mxu0 %v619
    %741 = vmatpush1.msra.mxu0 %v618
    %742 = vmatprep.subr.mxu0 %v621
    %743 = vmatpush1.msra.mxu0 %v620
    %744 = vmatprep.subr.mxu0 %v623
    %745 = vmatpush1.msra.mxu0 %v622
    %746 = vmatprep.subr.mxu0 %v625
    %747 = vmatpush1.msra.mxu0 %v624
    %748 = vmatprep.subr.mxu0 %v627
    %749 = vmatpush1.msra.mxu0 %v626
    %750 = vmatprep.subr.mxu0 %v629
    %751 = vmatpush1.msra.mxu0 %v628
    %752 = vmatprep.subr.mxu0 %v631
    %753 = vmatpush1.msra.mxu0 %v630
    %754 = vmatprep.subr.mxu0 %v633
    %755 = vmatpush1.msra.mxu0 %v632
    %756 = vmatprep.subr.mxu0 %v635
    %757 = vmatpush1.msra.mxu0 %v634
    %758 = vmatprep.subr.mxu0 %v637
    %759 = vmatpush1.msra.mxu0 %v636
    %760 = vmatprep.subr.mxu0 %v639
    %761 = vmatpush1.msra.mxu0 %v638
    %762 = vmatprep.subr.mxu0 %v641
    %763 = vmatpush1.msra.mxu0 %v640
    %764 = vmatprep.subr.mxu0 %v643
    %765 = vmatpush1.msra.mxu0 %v642
    %766 = vmatprep.subr.mxu0 %v645
    %767 = vmatpush1.msra.mxu0 %v644
    %768 = vmatprep.subr.mxu0 %v647
    %769 = vmatpush1.msra.mxu0 %v646
    %770 = vmatprep.subr.mxu0 %v649
    %771 = vmatpush1.msra.mxu0 %v648
    %772 = vmatprep.subr.mxu0 %v651
    %773 = vmatpush1.msra.mxu0 %v650
    %774 = vmatprep.subr.mxu0 %v653
    %775 = vmatpush1.msra.mxu0 %v652
    %776 = vmatprep.subr.mxu0 %v655
    %777 = vmatpush1.msra.mxu0 %v654
    %778 = vmatprep.subr.mxu0 %v657
    %779 = vmatpush1.msra.mxu0 %v656
    %780 = vmatprep.subr.mxu0 %v659
    %781 = vmatpush1.msra.mxu0 %v658
    %782 = vmatprep.subr.mxu0 %v661
    %783 = vmatpush1.msra.mxu0 %v660
    %784 = vmatprep.subr.mxu0 %v663
    %785 = vmatpush1.msra.mxu0 %v662
    %786 = vmatprep.subr.mxu0 %v665
    %787 = vmatpush1.msra.mxu0 %v664
    %788 = vmatprep.subr.mxu0 %v667
    %789 = vmatpush1.msra.mxu0 %v666
    %790 = vmatprep.subr.mxu0 %v669
    %791 = vmatpush1.msra.mxu0 %v668
    %792 = vmatprep.subr.mxu0 %v671
    %793 = vmatpush1.msra.mxu0 %v670
    %794 = vmatprep.subr.mxu0 %v673
    %795 = vmatpush1.msra.mxu0 %v672
    %796 = vmatprep.subr.mxu0 %v675
    %797 = vmatpush1.msra.mxu0 %v674
    %798 = vmatprep.subr.mxu0 %v677
    %799 = vmatpush1.msra.mxu0 %v676
    %800 = vmatprep.subr.mxu0 %v679
    %801 = vmatpush1.msra.mxu0 %v678
    %802 = vmatprep.subr.mxu0 %v681
    %803 = vmatpush1.msra.mxu0 %v680
    %804 = vmatprep.mubr.f32.mxu0 %v732
    %805 = vmatmul.mubr.f32.gmra.mrb[0].mxu0 %v724
    %v806 = vpop.f32.mrb[0].mxu0
    %v807 = vadd.f32 0.0, %v806
    %v808 = vpop.f32.mrb[0].mxu0
    %v809 = vadd.f32 0.0, %v808
    %810 = vdwg.mxu0
    %811 = vmatprep.subr.mxu0 %v683
    %812 = vmatpush1.msra.mxu0 %v682
    %813 = vmatprep.subr.mxu0 %v685
    %814 = vmatpush1.msra.mxu0 %v684
    %815 = vmatprep.subr.mxu0 %v687
    %816 = vmatpush1.msra.mxu0 %v686
    %817 = vmatprep.subr.mxu0 %v689
    %818 = vmatpush1.msra.mxu0 %v688
    %819 = vmatprep.subr.mxu0 %v691
    %820 = vmatpush1.msra.mxu0 %v690
    %821 = vmatprep.subr.mxu0 %v693
    %822 = vmatpush1.msra.mxu0 %v692
    %823 = vmatprep.subr.mxu0 %v695
    %824 = vmatpush1.msra.mxu0 %v694
    %825 = vmatprep.subr.mxu0 %v697
    %826 = vmatpush1.msra.mxu0 %v696
    %827 = vmatprep.subr.mxu0 %v699
    %828 = vmatpush1.msra.mxu0 %v698
    %829 = vmatprep.subr.mxu0 %v701
    %830 = vmatpush1.msra.mxu0 %v700
    %831 = vmatprep.subr.mxu0 %v703
    %832 = vmatpush1.msra.mxu0 %v702
    %833 = vmatprep.subr.mxu0 %v705
    %834 = vmatpush1.msra.mxu0 %v704
    %835 = vmatprep.subr.mxu0 %v707
    %836 = vmatpush1.msra.mxu0 %v706
    %837 = vmatprep.subr.mxu0 %v709
    %838 = vmatpush1.msra.mxu0 %v708
    %839 = vmatprep.subr.mxu0 %v711
    %840 = vmatpush1.msra.mxu0 %v710
    %841 = vmatprep.subr.mxu0 %v713
    %842 = vmatpush1.msra.mxu0 %v712
    %843 = vmatprep.subr.mxu0 %v715
    %844 = vmatpush1.msra.mxu0 %v714
    %845 = vmatprep.subr.mxu0 0.0
    %846 = vmatpush1.msra.mxu0 0.0
    %847 = vmatprep.subr.mxu0 0.0
    %848 = vmatpush1.msra.mxu0 0.0
    %849 = vmatprep.subr.mxu0 0.0
    %850 = vmatpush1.msra.mxu0 0.0
    %851 = vmatprep.subr.mxu0 0.0
    %852 = vmatpush1.msra.mxu0 0.0
    %853 = vmatprep.subr.mxu0 0.0
    %854 = vmatpush1.msra.mxu0 0.0
    %855 = vmatprep.subr.mxu0 0.0
    %856 = vmatpush1.msra.mxu0 0.0
    %857 = vmatprep.subr.mxu0 0.0
    %858 = vmatpush1.msra.mxu0 0.0
    %859 = vmatprep.subr.mxu0 0.0
    %860 = vmatpush1.msra.mxu0 0.0
    %861 = vmatprep.subr.mxu0 0.0
    %862 = vmatpush1.msra.mxu0 0.0
    %863 = vmatprep.subr.mxu0 0.0
    %864 = vmatpush1.msra.mxu0 0.0
    %865 = vmatprep.subr.mxu0 0.0
    %866 = vmatpush1.msra.mxu0 0.0
    %867 = vmatprep.subr.mxu0 0.0
    %868 = vmatpush1.msra.mxu0 0.0
    %869 = vmatprep.subr.mxu0 0.0
    %870 = vmatpush1.msra.mxu0 0.0
    %871 = vmatprep.subr.mxu0 0.0
    %872 = vmatpush1.msra.mxu0 0.0
    %873 = vmatprep.subr.mxu0 0.0
    %874 = vmatpush1.msra.mxu0 0.0
    %875 = vmatprep.mubr.f32.mxu0 %v738
    %876 = vmatmul.mubr.f32.gmra.mrb[0].mxu0 %v731
    %v877 = vpop.f32.mrb[0].mxu0
    %v878 = vadd.f32 %v807, %v877
    %v879 = vpop.f32.mrb[0].mxu0
    %v880 = vadd.f32 %v809, %v879
    %881 = vdwg.mxu0
    %v882 = vpack.c.bf16 %v878, %v878
    %v883 = vpack.c.bf16 %v880, %v880
    %v884 = vld [vmem:[%s4] sm:$0xff]
    %v885 = vld [vmem:[%s4 + $0x40] sm:$0xff]
    %v886 = vld [vmem:[#allocation2 + $0x8] sm:$0xff]
    %v887 = vld [vmem:[#allocation2 + $0x48] sm:$0xff]
    %v888 = vld [vmem:[#allocation2 + $0x88] sm:$0xff]
    %v889 = vld [vmem:[#allocation2 + $0xc8] sm:$0xff]
    %v890 = vld [vmem:[#allocation2 + $0x108] sm:$0x33]
    %v891 = vld [vmem:[%s3 + $0x2] sm:$0x3]
    %v893 = vlaneseq
    %v894 = vshrl.u32 %v893, 7
    %v895 = vsub.s32 0, %v894
    %v896 = vrot.slane %v891, %v895
    %v897 = vlaneseq
    %v898 = vshrl.u32 %v897, 7
    %v899 = vsub.s32 1, %v898
    %v900 = vrot.slane %v891, %v899
    %v908 = vunpack.c.l.b16 %v886
    %v909 = vunpack.c.h.b16 %v886
    %v910 = vunpack.c.l.b16 %v887
    %v911 = vunpack.c.h.b16 %v887
    %v912 = vunpack.c.l.b16 %v888
    %v913 = vunpack.c.h.b16 %v888
    %v914 = vunpack.c.l.b16 %v889
    %v915 = vunpack.c.h.b16 %v889
    %v916 = vunpack.c.l.b16 %v890
    %v917 = vunpack.c.h.b16 %v890
    %v918 = vpack.c.b16 %v910, %v908
    %v919 = vpack.c.b16 %v911, %v909
    %v920 = vpack.c.b16 %v914, %v912
    %v921 = vpack.c.b16 %v915, %v913
    %v922 = vpack.c.b16 %v916, %v916
    %v923 = vpack.c.b16 %v917, %v917
    %v929 = vsel %vm330, %v922, 0
    %v932 = vsel %vm330, %v923, 0
    %934 = vmatprep.subr.bf16.mxu0 %v919
    %935 = vmatpush1.bf16.msra.mxu0 %v918
    %936 = vmatprep.subr.bf16.mxu0 %v921
    %937 = vmatpush1.bf16.msra.mxu0 %v920
    %938 = vmatprep.subr.bf16.mxu0 %v932
    %939 = vmatpush1.bf16.msra.mxu0 %v929
    %940 = vmatprep.subr.bf16.mxu0 0
    %941 = vmatpush1.bf16.msra.mxu0 0
    %942 = vmatprep.subr.bf16.mxu0 0
    %943 = vmatpush1.bf16.msra.mxu0 0
    %944 = vmatprep.subr.bf16.mxu0 0
    %945 = vmatpush1.bf16.msra.mxu0 0
    %946 = vmatprep.subr.bf16.mxu0 0
    %947 = vmatpush1.bf16.msra.mxu0 0
    %948 = vmatprep.subr.bf16.mxu0 0
    %949 = vmatpush1.bf16.msra.mxu0 0
    %950 = vmatprep.subr.bf16.mxu0 0
    %951 = vmatpush1.bf16.msra.mxu0 0
    %952 = vmatprep.subr.bf16.mxu0 0
    %953 = vmatpush1.bf16.msra.mxu0 0
    %954 = vmatprep.subr.bf16.mxu0 0
    %955 = vmatpush1.bf16.msra.mxu0 0
    %956 = vmatprep.subr.bf16.mxu0 0
    %957 = vmatpush1.bf16.msra.mxu0 0
    %958 = vmatprep.subr.bf16.mxu0 0
    %959 = vmatpush1.bf16.msra.mxu0 0
    %960 = vmatprep.subr.bf16.mxu0 0
    %961 = vmatpush1.bf16.msra.mxu0 0
    %962 = vmatprep.subr.bf16.mxu0 0
    %963 = vmatpush1.bf16.msra.mxu0 0
    %964 = vmatprep.subr.bf16.mxu0 0
    %965 = vmatpush1.bf16.msra.mxu0 0
    %966 = vmatprep.mubr.bf16.mxu0 0
    %967 = vmatmul.mubr.bf16.gmra.mrb[0].mxu0 %v256
    %v968 = vpop.f32.mrb[0].mxu0
    %v969 = vadd.f32 %v896, %v968
    %v970 = vpop.f32.mrb[0].mxu0
    %v971 = vadd.f32 %v900, %v970
    %v972 = vpop.f32.mrb[0].mxu0
    %v973 = vadd.f32 %v896, %v972
    %v974 = vpop.f32.mrb[0].mxu0
    %v975 = vadd.f32 %v900, %v974
    %976 = vmatprep.mubr.bf16.mxu0 0
    %977 = vmatmul.mubr.bf16.gmra.mrb[0].mxu0 %v259
    %v978 = vpop.f32.mrb[0].mxu0
    %v979 = vadd.f32 %v896, %v978
    %v980 = vpop.f32.mrb[0].mxu0
    %v981 = vadd.f32 %v900, %v980
    %v982 = vpop.f32.mrb[0].mxu0
    %v983 = vadd.f32 %v896, %v982
    %v984 = vpop.f32.mrb[0].mxu0
    %v985 = vadd.f32 %v900, %v984
    %986 = vmatprep.mubr.bf16.mxu0 0
    %987 = vmatmul.mubr.bf16.gmra.mrb[0].mxu0 %v262
    %v988 = vpop.f32.mrb[0].mxu0
    %v989 = vadd.f32 %v896, %v988
    %v990 = vpop.f32.mrb[0].mxu0
    %v991 = vadd.f32 %v900, %v990
    %v992 = vpop.f32.mrb[0].mxu0
    %v993 = vadd.f32 %v896, %v992
    %v994 = vpop.f32.mrb[0].mxu0
    %v995 = vadd.f32 %v900, %v994
    %996 = vmatprep.mubr.bf16.mxu0 0
    %997 = vmatmul.mubr.bf16.gmra.mrb[0].mxu0 %v265
    %v998 = vpop.f32.mrb[0].mxu0
    %v999 = vadd.f32 %v896, %v998
    %v1000 = vpop.f32.mrb[0].mxu0
    %v1001 = vadd.f32 %v900, %v1000
    %v1002 = vpop.f32.mrb[0].mxu0
    %v1003 = vadd.f32 %v896, %v1002
    %v1004 = vpop.f32.mrb[0].mxu0
    %v1005 = vadd.f32 %v900, %v1004
    %1006 = vmatprep.mubr.bf16.mxu0 0
    %1007 = vmatmul.mubr.bf16.gmra.mrb[0].mxu0 %v268
    %v1008 = vpop.f32.mrb[0].mxu0
    %v1009 = vadd.f32 %v896, %v1008
    %v1010 = vpop.f32.mrb[0].mxu0
    %v1011 = vadd.f32 %v900, %v1010
    %v1012 = vpop.f32.mrb[0].mxu0
    %v1013 = vadd.f32 %v896, %v1012
    %v1014 = vpop.f32.mrb[0].mxu0
    %v1015 = vadd.f32 %v900, %v1014
    %1016 = vmatprep.mubr.bf16.mxu0 0
    %1017 = vmatmul.mubr.bf16.gmra.mrb[0].mxu0 %v271
    %v1018 = vpop.f32.mrb[0].mxu0
    %v1019 = vadd.f32 %v896, %v1018
    %v1020 = vpop.f32.mrb[0].mxu0
    %v1021 = vadd.f32 %v900, %v1020
    %v1022 = vpop.f32.mrb[0].mxu0
    %v1023 = vadd.f32 %v896, %v1022
    %v1024 = vpop.f32.mrb[0].mxu0
    %v1025 = vadd.f32 %v900, %v1024
    %1026 = vmatprep.mubr.bf16.mxu0 0
    %1027 = vmatmul.mubr.bf16.gmra.mrb[0].mxu0 %v274
    %v1028 = vpop.f32.mrb[0].mxu0
    %v1029 = vadd.f32 %v896, %v1028
    %v1030 = vpop.f32.mrb[0].mxu0
    %v1031 = vadd.f32 %v900, %v1030
    %v1032 = vpop.f32.mrb[0].mxu0
    %v1033 = vadd.f32 %v896, %v1032
    %v1034 = vpop.f32.mrb[0].mxu0
    %v1035 = vadd.f32 %v900, %v1034
    %1036 = vmatprep.mubr.bf16.mxu0 0
    %1037 = vmatmul.mubr.bf16.gmra.mrb[0].mxu0 %v277
    %v1038 = vpop.f32.mrb[0].mxu0
    %v1039 = vadd.f32 %v896, %v1038
    %v1040 = vpop.f32.mrb[0].mxu0
    %v1041 = vadd.f32 %v900, %v1040
    %v1042 = vpop.f32.mrb[0].mxu0
    %v1043 = vadd.f32 %v896, %v1042
    %v1044 = vpop.f32.mrb[0].mxu0
    %v1045 = vadd.f32 %v900, %v1044
    %1046 = vmatprep.mubr.bf16.mxu0 0
    %1047 = vmatmul.mubr.bf16.gmra.mrb[0].mxu0 %v280
    %v1048 = vpop.f32.mrb[0].mxu0
    %v1049 = vadd.f32 %v896, %v1048
    %v1050 = vpop.f32.mrb[0].mxu0
    %v1051 = vadd.f32 %v900, %v1050
    %v1052 = vpop.f32.mrb[0].mxu0
    %v1053 = vadd.f32 %v896, %v1052
    %v1054 = vpop.f32.mrb[0].mxu0
    %v1055 = vadd.f32 %v900, %v1054
    %1056 = vmatprep.mubr.bf16.mxu0 0
    %1057 = vmatmul.mubr.bf16.gmra.mrb[0].mxu0 %v283
    %v1058 = vpop.f32.mrb[0].mxu0
    %v1059 = vadd.f32 %v896, %v1058
    %v1060 = vpop.f32.mrb[0].mxu0
    %v1061 = vadd.f32 %v900, %v1060
    %v1062 = vpop.f32.mrb[0].mxu0
    %v1063 = vadd.f32 %v896, %v1062
    %v1064 = vpop.f32.mrb[0].mxu0
    %v1065 = vadd.f32 %v900, %v1064
    %1066 = vmatprep.mubr.bf16.mxu0 0
    %1067 = vmatmul.mubr.bf16.gmra.mrb[0].mxu0 %v286
    %v1068 = vpop.f32.mrb[0].mxu0
    %v1069 = vadd.f32 %v896, %v1068
    %v1070 = vpop.f32.mrb[0].mxu0
    %v1071 = vadd.f32 %v900, %v1070
    %v1072 = vpop.f32.mrb[0].mxu0
    %v1073 = vadd.f32 %v896, %v1072
    %v1074 = vpop.f32.mrb[0].mxu0
    %v1075 = vadd.f32 %v900, %v1074
    %1076 = vmatprep.mubr.bf16.mxu0 0
    %1077 = vmatmul.mubr.bf16.gmra.mrb[0].mxu0 %v289
    %v1078 = vpop.f32.mrb[0].mxu0
    %v1079 = vadd.f32 %v896, %v1078
    %v1080 = vpop.f32.mrb[0].mxu0
    %v1081 = vadd.f32 %v900, %v1080
    %v1082 = vpop.f32.mrb[0].mxu0
    %v1083 = vadd.f32 %v896, %v1082
    %v1084 = vpop.f32.mrb[0].mxu0
    %v1085 = vadd.f32 %v900, %v1084
    %1086 = vmatprep.mubr.bf16.mxu0 0
    %1087 = vmatmul.mubr.bf16.gmra.mrb[0].mxu0 %v292
    %v1088 = vpop.f32.mrb[0].mxu0
    %v1089 = vadd.f32 %v896, %v1088
    %v1090 = vpop.f32.mrb[0].mxu0
    %v1091 = vadd.f32 %v900, %v1090
    %v1092 = vpop.f32.mrb[0].mxu0
    %v1093 = vadd.f32 %v896, %v1092
    %v1094 = vpop.f32.mrb[0].mxu0
    %v1095 = vadd.f32 %v900, %v1094
    %1096 = vmatprep.mubr.bf16.mxu0 0
    %1097 = vmatmul.mubr.bf16.gmra.mrb[0].mxu0 %v295
    %v1098 = vpop.f32.mrb[0].mxu0
    %v1099 = vadd.f32 %v896, %v1098
    %v1100 = vpop.f32.mrb[0].mxu0
    %v1101 = vadd.f32 %v900, %v1100
    %v1102 = vpop.f32.mrb[0].mxu0
    %v1103 = vadd.f32 %v896, %v1102
    %v1104 = vpop.f32.mrb[0].mxu0
    %v1105 = vadd.f32 %v900, %v1104
    %1106 = vmatprep.mubr.bf16.mxu0 0
    %1107 = vmatmul.mubr.bf16.gmra.mrb[0].mxu0 %v298
    %v1108 = vpop.f32.mrb[0].mxu0
    %v1109 = vadd.f32 %v896, %v1108
    %v1110 = vpop.f32.mrb[0].mxu0
    %v1111 = vadd.f32 %v900, %v1110
    %v1112 = vpop.f32.mrb[0].mxu0
    %v1113 = vadd.f32 %v896, %v1112
    %v1114 = vpop.f32.mrb[0].mxu0
    %v1115 = vadd.f32 %v900, %v1114
    %1116 = vmatprep.mubr.bf16.mxu0 0
    %1117 = vmatmul.mubr.bf16.gmra.mrb[0].mxu0 %v301
    %v1118 = vpop.f32.mrb[0].mxu0
    %v1119 = vadd.f32 %v896, %v1118
    %v1120 = vpop.f32.mrb[0].mxu0
    %v1121 = vadd.f32 %v900, %v1120
    %v1122 = vpop.f32.mrb[0].mxu0
    %v1123 = vadd.f32 %v896, %v1122
    %v1124 = vpop.f32.mrb[0].mxu0
    %v1125 = vadd.f32 %v900, %v1124
    %1126 = vmatprep.mubr.bf16.mxu0 0
    %1127 = vmatmul.mubr.bf16.gmra.mrb[0].mxu0 %v304
    %v1128 = vpop.f32.mrb[0].mxu0
    %v1129 = vadd.f32 %v896, %v1128
    %v1130 = vpop.f32.mrb[0].mxu0
    %v1131 = vadd.f32 %v900, %v1130
    %v1132 = vpop.f32.mrb[0].mxu0
    %v1133 = vadd.f32 %v896, %v1132
    %v1134 = vpop.f32.mrb[0].mxu0
    %v1135 = vadd.f32 %v900, %v1134
    %1136 = vmatprep.mubr.bf16.mxu0 0
    %1137 = vmatmul.mubr.bf16.gmra.mrb[0].mxu0 %v307
    %v1138 = vpop.f32.mrb[0].mxu0
    %v1139 = vadd.f32 %v896, %v1138
    %v1140 = vpop.f32.mrb[0].mxu0
    %v1141 = vadd.f32 %v900, %v1140
    %v1142 = vpop.f32.mrb[0].mxu0
    %v1143 = vadd.f32 %v896, %v1142
    %v1144 = vpop.f32.mrb[0].mxu0
    %v1145 = vadd.f32 %v900, %v1144
    %1146 = vmatprep.mubr.bf16.mxu0 0
    %1147 = vmatmul.mubr.bf16.gmra.mrb[0].mxu0 %v310
    %v1148 = vpop.f32.mrb[0].mxu0
    %v1149 = vadd.f32 %v896, %v1148
    %v1150 = vpop.f32.mrb[0].mxu0
    %v1151 = vadd.f32 %v900, %v1150
    %v1152 = vpop.f32.mrb[0].mxu0
    %v1153 = vadd.f32 %v896, %v1152
    %v1154 = vpop.f32.mrb[0].mxu0
    %v1155 = vadd.f32 %v900, %v1154
    %1156 = vmatprep.mubr.bf16.mxu0 0
    %1157 = vmatmul.mubr.bf16.gmra.mrb[0].mxu0 %v313
    %v1158 = vpop.f32.mrb[0].mxu0
    %v1159 = vadd.f32 %v896, %v1158
    %v1160 = vpop.f32.mrb[0].mxu0
    %v1161 = vadd.f32 %v900, %v1160
    %v1162 = vpop.f32.mrb[0].mxu0
    %v1163 = vadd.f32 %v896, %v1162
    %v1164 = vpop.f32.mrb[0].mxu0
    %v1165 = vadd.f32 %v900, %v1164
    %1166 = vmatprep.mubr.bf16.mxu0 0
    %1167 = vmatmul.mubr.bf16.gmra.mrb[0].mxu0 %v316
    %v1168 = vpop.f32.mrb[0].mxu0
    %v1169 = vadd.f32 %v896, %v1168
    %v1170 = vpop.f32.mrb[0].mxu0
    %v1171 = vadd.f32 %v900, %v1170
    %v1172 = vpop.f32.mrb[0].mxu0
    %v1173 = vadd.f32 %v896, %v1172
    %v1174 = vpop.f32.mrb[0].mxu0
    %v1175 = vadd.f32 %v900, %v1174
    %1176 = vmatprep.mubr.bf16.mxu0 0
    %1177 = vmatmul.mubr.bf16.gmra.mrb[0].mxu0 %v319
    %v1178 = vpop.f32.mrb[0].mxu0
    %v1179 = vadd.f32 %v896, %v1178
    %v1180 = vpop.f32.mrb[0].mxu0
    %v1181 = vadd.f32 %v900, %v1180
    %v1182 = vpop.f32.mrb[0].mxu0
    %v1183 = vadd.f32 %v896, %v1182
    %v1184 = vpop.f32.mrb[0].mxu0
    %v1185 = vadd.f32 %v900, %v1184
    %1186 = vmatprep.mubr.bf16.mxu0 0
    %1187 = vmatmul.mubr.bf16.gmra.mrb[0].mxu0 %v322
    %v1188 = vpop.f32.mrb[0].mxu0
    %v1189 = vadd.f32 %v896, %v1188
    %v1190 = vpop.f32.mrb[0].mxu0
    %v1191 = vadd.f32 %v900, %v1190
    %v1192 = vpop.f32.mrb[0].mxu0
    %v1193 = vadd.f32 %v896, %v1192
    %v1194 = vpop.f32.mrb[0].mxu0
    %v1195 = vadd.f32 %v900, %v1194
    %1196 = vmatprep.mubr.bf16.mxu0 0
    %1197 = vmatmul.mubr.bf16.gmra.mrb[0].mxu0 %v325
    %v1198 = vpop.f32.mrb[0].mxu0
    %v1199 = vadd.f32 %v896, %v1198
    %v1200 = vpop.f32.mrb[0].mxu0
    %v1201 = vadd.f32 %v900, %v1200
    %v1202 = vpop.f32.mrb[0].mxu0
    %v1203 = vadd.f32 %v896, %v1202
    %v1204 = vpop.f32.mrb[0].mxu0
    %v1205 = vadd.f32 %v900, %v1204
    %1206 = vmatprep.mubr.bf16.mxu0 0
    %1207 = vmatmul.mubr.bf16.gmra.mrb[0].mxu0 %v328
    %v1208 = vpop.f32.mrb[0].mxu0
    %v1209 = vadd.f32 %v896, %v1208
    %v1210 = vpop.f32.mrb[0].mxu0
    %v1211 = vadd.f32 %v900, %v1210
    %v1212 = vpop.f32.mrb[0].mxu0
    %v1213 = vpop.f32.mrb[0].mxu0
    %1214 = vdwg.mxu0
    %v1215 = vmax.f32 %v969, 0.0
    %v1216 = vmax.f32 %v971, 0.0
    %v1217 = vmax.f32 %v973, 0.0
    %v1218 = vmax.f32 %v975, 0.0
    %v1219 = vmax.f32 %v979, 0.0
    %v1220 = vmax.f32 %v981, 0.0
    %v1221 = vmax.f32 %v983, 0.0
    %v1222 = vmax.f32 %v985, 0.0
    %v1223 = vmax.f32 %v989, 0.0
    %v1224 = vmax.f32 %v991, 0.0
    %v1225 = vmax.f32 %v993, 0.0
    %v1226 = vmax.f32 %v995, 0.0
    %v1227 = vmax.f32 %v999, 0.0
    %v1228 = vmax.f32 %v1001, 0.0
    %v1229 = vmax.f32 %v1003, 0.0
    %v1230 = vmax.f32 %v1005, 0.0
    %v1231 = vmax.f32 %v1009, 0.0
    %v1232 = vmax.f32 %v1011, 0.0
    %v1233 = vmax.f32 %v1013, 0.0
    %v1234 = vmax.f32 %v1015, 0.0
    %v1235 = vmax.f32 %v1019, 0.0
    %v1236 = vmax.f32 %v1021, 0.0
    %v1237 = vmax.f32 %v1023, 0.0
    %v1238 = vmax.f32 %v1025, 0.0
    %v1239 = vmax.f32 %v1029, 0.0
    %v1240 = vmax.f32 %v1031, 0.0
    %v1241 = vmax.f32 %v1033, 0.0
    %v1242 = vmax.f32 %v1035, 0.0
    %v1243 = vmax.f32 %v1039, 0.0
    %v1244 = vmax.f32 %v1041, 0.0
    %v1245 = vmax.f32 %v1043, 0.0
    %v1246 = vmax.f32 %v1045, 0.0
    %v1247 = vmax.f32 %v1049, 0.0
    %v1248 = vmax.f32 %v1051, 0.0
    %v1249 = vmax.f32 %v1053, 0.0
    %v1250 = vmax.f32 %v1055, 0.0
    %v1251 = vmax.f32 %v1059, 0.0
    %v1252 = vmax.f32 %v1061, 0.0
    %v1253 = vmax.f32 %v1063, 0.0
    %v1254 = vmax.f32 %v1065, 0.0
    %v1255 = vmax.f32 %v1069, 0.0
    %v1256 = vmax.f32 %v1071, 0.0
    %v1257 = vmax.f32 %v1073, 0.0
    %v1258 = vmax.f32 %v1075, 0.0
    %v1259 = vmax.f32 %v1079, 0.0
    %v1260 = vmax.f32 %v1081, 0.0
    %v1261 = vmax.f32 %v1083, 0.0
    %v1262 = vmax.f32 %v1085, 0.0
    %v1263 = vmax.f32 %v1089, 0.0
    %v1264 = vmax.f32 %v1091, 0.0
    %v1265 = vmax.f32 %v1093, 0.0
    %v1266 = vmax.f32 %v1095, 0.0
    %v1267 = vmax.f32 %v1099, 0.0
    %v1268 = vmax.f32 %v1101, 0.0
    %v1269 = vmax.f32 %v1103, 0.0
    %v1270 = vmax.f32 %v1105, 0.0
    %v1271 = vmax.f32 %v1109, 0.0
    %v1272 = vmax.f32 %v1111, 0.0
    %v1273 = vmax.f32 %v1113, 0.0
    %v1274 = vmax.f32 %v1115, 0.0
    %v1275 = vmax.f32 %v1119, 0.0
    %v1276 = vmax.f32 %v1121, 0.0
    %v1277 = vmax.f32 %v1123, 0.0
    %v1278 = vmax.f32 %v1125, 0.0
    %v1279 = vmax.f32 %v1129, 0.0
    %v1280 = vmax.f32 %v1131, 0.0
    %v1281 = vmax.f32 %v1133, 0.0
    %v1282 = vmax.f32 %v1135, 0.0
    %v1283 = vmax.f32 %v1139, 0.0
    %v1284 = vmax.f32 %v1141, 0.0
    %v1285 = vmax.f32 %v1143, 0.0
    %v1286 = vmax.f32 %v1145, 0.0
    %v1287 = vmax.f32 %v1149, 0.0
    %v1288 = vmax.f32 %v1151, 0.0
    %v1289 = vmax.f32 %v1153, 0.0
    %v1290 = vmax.f32 %v1155, 0.0
    %v1291 = vmax.f32 %v1159, 0.0
    %v1292 = vmax.f32 %v1161, 0.0
    %v1293 = vmax.f32 %v1163, 0.0
    %v1294 = vmax.f32 %v1165, 0.0
    %v1295 = vmax.f32 %v1169, 0.0
    %v1296 = vmax.f32 %v1171, 0.0
    %v1297 = vmax.f32 %v1173, 0.0
    %v1298 = vmax.f32 %v1175, 0.0
    %v1299 = vmax.f32 %v1179, 0.0
    %v1300 = vmax.f32 %v1181, 0.0
    %v1301 = vmax.f32 %v1183, 0.0
    %v1302 = vmax.f32 %v1185, 0.0
    %v1303 = vmax.f32 %v1189, 0.0
    %v1304 = vmax.f32 %v1191, 0.0
    %v1305 = vmax.f32 %v1193, 0.0
    %v1306 = vmax.f32 %v1195, 0.0
    %v1307 = vmax.f32 %v1199, 0.0
    %v1308 = vmax.f32 %v1201, 0.0
    %v1309 = vmax.f32 %v1203, 0.0
    %v1310 = vmax.f32 %v1205, 0.0
    %v1311 = vmax.f32 %v1209, 0.0
    %v1312 = vmax.f32 %v1211, 0.0
    %1313 = vmatprep.subr.mxu0 %v1216
    %1314 = vmatpush1.msra.mxu0 %v1215
    %1315 = vmatprep.subr.mxu0 %v1218
    %1316 = vmatpush1.msra.mxu0 %v1217
    %1317 = vmatprep.subr.mxu0 %v1220
    %1318 = vmatpush1.msra.mxu0 %v1219
    %1319 = vmatprep.subr.mxu0 %v1222
    %1320 = vmatpush1.msra.mxu0 %v1221
    %1321 = vmatprep.subr.mxu0 %v1224
    %1322 = vmatpush1.msra.mxu0 %v1223
    %1323 = vmatprep.subr.mxu0 %v1226
    %1324 = vmatpush1.msra.mxu0 %v1225
    %1325 = vmatprep.subr.mxu0 %v1228
    %1326 = vmatpush1.msra.mxu0 %v1227
    %1327 = vmatprep.subr.mxu0 %v1230
    %1328 = vmatpush1.msra.mxu0 %v1229
    %1329 = vmatprep.subr.mxu0 %v1232
    %1330 = vmatpush1.msra.mxu0 %v1231
    %1331 = vmatprep.subr.mxu0 %v1234
    %1332 = vmatpush1.msra.mxu0 %v1233
    %1333 = vmatprep.subr.mxu0 %v1236
    %1334 = vmatpush1.msra.mxu0 %v1235
    %1335 = vmatprep.subr.mxu0 %v1238
    %1336 = vmatpush1.msra.mxu0 %v1237
    %1337 = vmatprep.subr.mxu0 %v1240
    %1338 = vmatpush1.msra.mxu0 %v1239
    %1339 = vmatprep.subr.mxu0 %v1242
    %1340 = vmatpush1.msra.mxu0 %v1241
    %1341 = vmatprep.subr.mxu0 %v1244
    %1342 = vmatpush1.msra.mxu0 %v1243
    %1343 = vmatprep.subr.mxu0 %v1246
    %1344 = vmatpush1.msra.mxu0 %v1245
    %1345 = vmatprep.subr.mxu0 %v1248
    %1346 = vmatpush1.msra.mxu0 %v1247
    %1347 = vmatprep.subr.mxu0 %v1250
    %1348 = vmatpush1.msra.mxu0 %v1249
    %1349 = vmatprep.subr.mxu0 %v1252
    %1350 = vmatpush1.msra.mxu0 %v1251
    %1351 = vmatprep.subr.mxu0 %v1254
    %1352 = vmatpush1.msra.mxu0 %v1253
    %1353 = vmatprep.subr.mxu0 %v1256
    %1354 = vmatpush1.msra.mxu0 %v1255
    %1355 = vmatprep.subr.mxu0 %v1258
    %1356 = vmatpush1.msra.mxu0 %v1257
    %1357 = vmatprep.subr.mxu0 %v1260
    %1358 = vmatpush1.msra.mxu0 %v1259
    %1359 = vmatprep.subr.mxu0 %v1262
    %1360 = vmatpush1.msra.mxu0 %v1261
    %1361 = vmatprep.subr.mxu0 %v1264
    %1362 = vmatpush1.msra.mxu0 %v1263
    %1363 = vmatprep.subr.mxu0 %v1266
    %1364 = vmatpush1.msra.mxu0 %v1265
    %1365 = vmatprep.subr.mxu0 %v1268
    %1366 = vmatpush1.msra.mxu0 %v1267
    %1367 = vmatprep.subr.mxu0 %v1270
    %1368 = vmatpush1.msra.mxu0 %v1269
    %1369 = vmatprep.subr.mxu0 %v1272
    %1370 = vmatpush1.msra.mxu0 %v1271
    %1371 = vmatprep.subr.mxu0 %v1274
    %1372 = vmatpush1.msra.mxu0 %v1273
    %1373 = vmatprep.subr.mxu0 %v1276
    %1374 = vmatpush1.msra.mxu0 %v1275
    %1375 = vmatprep.subr.mxu0 %v1278
    %1376 = vmatpush1.msra.mxu0 %v1277
    %1377 = vmatprep.mubr.f32.mxu0 %v732
    %1378 = vmatmul.mubr.f32.gmra.mrb[0].mxu0 %v724
    %v1379 = vpop.f32.mrb[0].mxu0
    %v1380 = vadd.f32 0.0, %v1379
    %v1381 = vpop.f32.mrb[0].mxu0
    %v1382 = vadd.f32 0.0, %v1381
    %1383 = vdwg.mxu0
    %1384 = vmatprep.subr.mxu0 %v1280
    %1385 = vmatpush1.msra.mxu0 %v1279
    %1386 = vmatprep.subr.mxu0 %v1282
    %1387 = vmatpush1.msra.mxu0 %v1281
    %1388 = vmatprep.subr.mxu0 %v1284
    %1389 = vmatpush1.msra.mxu0 %v1283
    %1390 = vmatprep.subr.mxu0 %v1286
    %1391 = vmatpush1.msra.mxu0 %v1285
    %1392 = vmatprep.subr.mxu0 %v1288
    %1393 = vmatpush1.msra.mxu0 %v1287
    %1394 = vmatprep.subr.mxu0 %v1290
    %1395 = vmatpush1.msra.mxu0 %v1289
    %1396 = vmatprep.subr.mxu0 %v1292
    %1397 = vmatpush1.msra.mxu0 %v1291
    %1398 = vmatprep.subr.mxu0 %v1294
    %1399 = vmatpush1.msra.mxu0 %v1293
    %1400 = vmatprep.subr.mxu0 %v1296
    %1401 = vmatpush1.msra.mxu0 %v1295
    %1402 = vmatprep.subr.mxu0 %v1298
    %1403 = vmatpush1.msra.mxu0 %v1297
    %1404 = vmatprep.subr.mxu0 %v1300
    %1405 = vmatpush1.msra.mxu0 %v1299
    %1406 = vmatprep.subr.mxu0 %v1302
    %1407 = vmatpush1.msra.mxu0 %v1301
    %1408 = vmatprep.subr.mxu0 %v1304
    %1409 = vmatpush1.msra.mxu0 %v1303
    %1410 = vmatprep.subr.mxu0 %v1306
    %1411 = vmatpush1.msra.mxu0 %v1305
    %1412 = vmatprep.subr.mxu0 %v1308
    %1413 = vmatpush1.msra.mxu0 %v1307
    %1414 = vmatprep.subr.mxu0 %v1310
    %1415 = vmatpush1.msra.mxu0 %v1309
    %1416 = vmatprep.subr.mxu0 %v1312
    %1417 = vmatpush1.msra.mxu0 %v1311
    %1418 = vmatprep.subr.mxu0 0.0
    %1419 = vmatpush1.msra.mxu0 0.0
    %1420 = vmatprep.subr.mxu0 0.0
    %1421 = vmatpush1.msra.mxu0 0.0
    %1422 = vmatprep.subr.mxu0 0.0
    %1423 = vmatpush1.msra.mxu0 0.0
    %1424 = vmatprep.subr.mxu0 0.0
    %1425 = vmatpush1.msra.mxu0 0.0
    %1426 = vmatprep.subr.mxu0 0.0
    %1427 = vmatpush1.msra.mxu0 0.0
    %1428 = vmatprep.subr.mxu0 0.0
    %1429 = vmatpush1.msra.mxu0 0.0
    %1430 = vmatprep.subr.mxu0 0.0
    %1431 = vmatpush1.msra.mxu0 0.0
    %1432 = vmatprep.subr.mxu0 0.0
    %1433 = vmatpush1.msra.mxu0 0.0
    %1434 = vmatprep.subr.mxu0 0.0
    %1435 = vmatpush1.msra.mxu0 0.0
    %1436 = vmatprep.subr.mxu0 0.0
    %1437 = vmatpush1.msra.mxu0 0.0
    %1438 = vmatprep.subr.mxu0 0.0
    %1439 = vmatpush1.msra.mxu0 0.0
    %1440 = vmatprep.subr.mxu0 0.0
    %1441 = vmatpush1.msra.mxu0 0.0
    %1442 = vmatprep.subr.mxu0 0.0
    %1443 = vmatpush1.msra.mxu0 0.0
    %1444 = vmatprep.subr.mxu0 0.0
    %1445 = vmatpush1.msra.mxu0 0.0
    %1446 = vmatprep.subr.mxu0 0.0
    %1447 = vmatpush1.msra.mxu0 0.0
    %1448 = vmatprep.mubr.f32.mxu0 %v738
    %1449 = vmatmul.mubr.f32.gmra.mrb[0].mxu0 %v731
    %v1450 = vpop.f32.mrb[0].mxu0
    %v1451 = vadd.f32 %v1380, %v1450
    %v1452 = vpop.f32.mrb[0].mxu0
    %v1453 = vadd.f32 %v1382, %v1452
    %1454 = vdwg.mxu0
    %v1455 = vpack.c.bf16 %v1451, %v1451
    %v1456 = vpack.c.bf16 %v1453, %v1453
    %v1457 = vld [vmem:[%s4 + $0x8] sm:$0xff]
    %v1458 = vld [vmem:[%s4 + $0x48] sm:$0xff]
    %v1461 = vunpack.c.l.b16 %v1457
    %v1462 = vunpack.c.h.b16 %v1457
    %v1463 = vunpack.c.l.b16 %v1458
    %v1464 = vunpack.c.h.b16 %v1458
    %v1465 = vpack.c.b16 %v1463, %v1461
    %v1466 = vpack.c.b16 %v1464, %v1462
    %1469 = vmatprep.subr.bf16.mxu0 %v1466
    %1470 = vmatpush1.bf16.xpose.msra.mxu0 %v1465
    %1471 = vmatprep.subr.bf16.mxu0 0
    %1472 = vmatpush1.bf16.xpose.msra.mxu0 0
    %1473 = vmatprep.subr.bf16.mxu0 0
    %1474 = vmatpush1.bf16.xpose.msra.mxu0 0
    %1475 = vmatprep.subr.bf16.mxu0 0
    %1476 = vmatpush1.bf16.xpose.msra.mxu0 0
    %1477 = vmatprep.subr.bf16.mxu0 0
    %1478 = vmatpush1.bf16.xpose.msra.mxu0 0
    %1479 = vmatprep.subr.bf16.mxu0 0
    %1480 = vmatpush1.bf16.xpose.msra.mxu0 0
    %1481 = vmatprep.subr.bf16.mxu0 0
    %1482 = vmatpush1.bf16.xpose.msra.mxu0 0
    %1483 = vmatprep.subr.bf16.mxu0 0
    %1484 = vmatpush1.bf16.xpose.msra.mxu0 0
    %1485 = vmatprep.subr.bf16.mxu0 0
    %1486 = vmatpush1.bf16.xpose.msra.mxu0 0
    %1487 = vmatprep.subr.bf16.mxu0 0
    %1488 = vmatpush1.bf16.xpose.msra.mxu0 0
    %1489 = vmatprep.subr.bf16.mxu0 0
    %1490 = vmatpush1.bf16.xpose.msra.mxu0 0
    %1491 = vmatprep.subr.bf16.mxu0 0
    %1492 = vmatpush1.bf16.xpose.msra.mxu0 0
    %1493 = vmatprep.subr.bf16.mxu0 0
    %1494 = vmatpush1.bf16.xpose.msra.mxu0 0
    %1495 = vmatprep.subr.bf16.mxu0 0
    %1496 = vmatpush1.bf16.xpose.msra.mxu0 0
    %1497 = vmatprep.subr.bf16.mxu0 0
    %1498 = vmatpush1.bf16.xpose.msra.mxu0 0
    %1499 = vmatprep.subr.bf16.mxu0 0
    %1500 = vmatpush1.bf16.xpose.msra.mxu0 0
    %1501 = vmatprep.mubr.bf16.mxu0 %v1456
    %1502 = vmatmul.mubr.bf16.gmra.mrb[0].mxu0 %v1455
    %v1503 = vpop.f32.mrb[0].mxu0
    %v1504 = vadd.f32 0.0, %v1503
    %v1505 = vpop.f32.mrb[0].mxu0
    %v1506 = vpop.f32.mrb[0].mxu0
    %v1507 = vpop.f32.mrb[0].mxu0
    %1508 = vdwg.mxu0
    %v1511 = vunpack.c.l.b16 %v884
    %v1512 = vunpack.c.h.b16 %v884
    %v1513 = vunpack.c.l.b16 %v885
    %v1514 = vunpack.c.h.b16 %v885
    %v1515 = vpack.c.b16 %v1513, %v1511
    %v1516 = vpack.c.b16 %v1514, %v1512
    %1519 = vmatprep.subr.bf16.mxu0 %v1516
    %1520 = vmatpush1.bf16.xpose.msra.mxu0 %v1515
    %1521 = vmatprep.subr.bf16.mxu0 0
    %1522 = vmatpush1.bf16.xpose.msra.mxu0 0
    %1523 = vmatprep.subr.bf16.mxu0 0
    %1524 = vmatpush1.bf16.xpose.msra.mxu0 0
    %1525 = vmatprep.subr.bf16.mxu0 0
    %1526 = vmatpush1.bf16.xpose.msra.mxu0 0
    %1527 = vmatprep.subr.bf16.mxu0 0
    %1528 = vmatpush1.bf16.xpose.msra.mxu0 0
    %1529 = vmatprep.subr.bf16.mxu0 0
    %1530 = vmatpush1.bf16.xpose.msra.mxu0 0
    %1531 = vmatprep.subr.bf16.mxu0 0
    %1532 = vmatpush1.bf16.xpose.msra.mxu0 0
    %1533 = vmatprep.subr.bf16.mxu0 0
    %1534 = vmatpush1.bf16.xpose.msra.mxu0 0
    %1535 = vmatprep.subr.bf16.mxu0 0
    %1536 = vmatpush1.bf16.xpose.msra.mxu0 0
    %1537 = vmatprep.subr.bf16.mxu0 0
    %1538 = vmatpush1.bf16.xpose.msra.mxu0 0
    %1539 = vmatprep.subr.bf16.mxu0 0
    %1540 = vmatpush1.bf16.xpose.msra.mxu0 0
    %1541 = vmatprep.subr.bf16.mxu0 0
    %1542 = vmatpush1.bf16.xpose.msra.mxu0 0
    %1543 = vmatprep.subr.bf16.mxu0 0
    %1544 = vmatpush1.bf16.xpose.msra.mxu0 0
    %1545 = vmatprep.subr.bf16.mxu0 0
    %1546 = vmatpush1.bf16.xpose.msra.mxu0 0
    %1547 = vmatprep.subr.bf16.mxu0 0
    %1548 = vmatpush1.bf16.xpose.msra.mxu0 0
    %1549 = vmatprep.subr.bf16.mxu0 0
    %1550 = vmatpush1.bf16.xpose.msra.mxu0 0
    %1551 = vmatprep.mubr.bf16.mxu0 %v883
    %1552 = vmatmul.mubr.bf16.gmra.mrb[0].mxu0 %v882
    %v1553 = vpop.f32.mrb[0].mxu0
    %v1554 = vadd.f32 %v1504, %v1553
    %v1555 = vpop.f32.mrb[0].mxu0
    %v1556 = vpop.f32.mrb[0].mxu0
    %v1557 = vpop.f32.mrb[0].mxu0
    %1558 = vdwg.mxu0
    %v1559 = vld [vmem:[#allocation2 + $0x10] sm:$0xff]
    %v1560 = vld [vmem:[#allocation2 + $0x50] sm:$0xff]
    %v1561 = vld [vmem:[#allocation2 + $0x90] sm:$0xff]
    %v1562 = vld [vmem:[#allocation2 + $0xd0] sm:$0xff]
    %v1563 = vld [vmem:[#allocation2 + $0x110] sm:$0x33]
    %v1564 = vld [vmem:[%s3 + $0x4] sm:$0x3]
    %v1566 = vlaneseq
    %v1567 = vshrl.u32 %v1566, 7
    %v1568 = vsub.s32 0, %v1567
    %v1569 = vrot.slane %v1564, %v1568
    %v1570 = vlaneseq
    %v1571 = vshrl.u32 %v1570, 7
    %v1572 = vsub.s32 1, %v1571
    %v1573 = vrot.slane %v1564, %v1572
    %v1581 = vunpack.c.l.b16 %v1559
    %v1582 = vunpack.c.h.b16 %v1559
    %v1583 = vunpack.c.l.b16 %v1560
    %v1584 = vunpack.c.h.b16 %v1560
    %v1585 = vunpack.c.l.b16 %v1561
    %v1586 = vunpack.c.h.b16 %v1561
    %v1587 = vunpack.c.l.b16 %v1562
    %v1588 = vunpack.c.h.b16 %v1562
    %v1589 = vunpack.c.l.b16 %v1563
    %v1590 = vunpack.c.h.b16 %v1563
    %v1591 = vpack.c.b16 %v1583, %v1581
    %v1592 = vpack.c.b16 %v1584, %v1582
    %v1593 = vpack.c.b16 %v1587, %v1585
    %v1594 = vpack.c.b16 %v1588, %v1586
    %v1595 = vpack.c.b16 %v1589, %v1589
    %v1596 = vpack.c.b16 %v1590, %v1590
    %v1602 = vsel %vm330, %v1595, 0
    %v1605 = vsel %vm330, %v1596, 0
    %1607 = vmatprep.subr.bf16.mxu0 %v1592
    %1608 = vmatpush1.bf16.msra.mxu0 %v1591
    %1609 = vmatprep.subr.bf16.mxu0 %v1594
    %1610 = vmatpush1.bf16.msra.mxu0 %v1593
    %1611 = vmatprep.subr.bf16.mxu0 %v1605
    %1612 = vmatpush1.bf16.msra.mxu0 %v1602
    %1613 = vmatprep.subr.bf16.mxu0 0
    %1614 = vmatpush1.bf16.msra.mxu0 0
    %1615 = vmatprep.subr.bf16.mxu0 0
    %1616 = vmatpush1.bf16.msra.mxu0 0
    %1617 = vmatprep.subr.bf16.mxu0 0
    %1618 = vmatpush1.bf16.msra.mxu0 0
    %1619 = vmatprep.subr.bf16.mxu0 0
    %1620 = vmatpush1.bf16.msra.mxu0 0
    %1621 = vmatprep.subr.bf16.mxu0 0
    %1622 = vmatpush1.bf16.msra.mxu0 0
    %1623 = vmatprep.subr.bf16.mxu0 0
    %1624 = vmatpush1.bf16.msra.mxu0 0
    %1625 = vmatprep.subr.bf16.mxu0 0
    %1626 = vmatpush1.bf16.msra.mxu0 0
    %1627 = vmatprep.subr.bf16.mxu0 0
    %1628 = vmatpush1.bf16.msra.mxu0 0
    %1629 = vmatprep.subr.bf16.mxu0 0
    %1630 = vmatpush1.bf16.msra.mxu0 0
    %1631 = vmatprep.subr.bf16.mxu0 0
    %1632 = vmatpush1.bf16.msra.mxu0 0
    %1633 = vmatprep.subr.bf16.mxu0 0
    %1634 = vmatpush1.bf16.msra.mxu0 0
    %1635 = vmatprep.subr.bf16.mxu0 0
    %1636 = vmatpush1.bf16.msra.mxu0 0
    %1637 = vmatprep.subr.bf16.mxu0 0
    %1638 = vmatpush1.bf16.msra.mxu0 0
    %1639 = vmatprep.mubr.bf16.mxu0 0
    %1640 = vmatmul.mubr.bf16.gmra.mrb[0].mxu0 %v256
    %v1641 = vpop.f32.mrb[0].mxu0
    %v1642 = vadd.f32 %v1569, %v1641
    %v1643 = vpop.f32.mrb[0].mxu0
    %v1644 = vadd.f32 %v1573, %v1643
    %v1645 = vpop.f32.mrb[0].mxu0
    %v1646 = vadd.f32 %v1569, %v1645
    %v1647 = vpop.f32.mrb[0].mxu0
    %v1648 = vadd.f32 %v1573, %v1647
    %1649 = vmatprep.mubr.bf16.mxu0 0
    %1650 = vmatmul.mubr.bf16.gmra.mrb[0].mxu0 %v259
    %v1651 = vpop.f32.mrb[0].mxu0
    %v1652 = vadd.f32 %v1569, %v1651
    %v1653 = vpop.f32.mrb[0].mxu0
    %v1654 = vadd.f32 %v1573, %v1653
    %v1655 = vpop.f32.mrb[0].mxu0
    %v1656 = vadd.f32 %v1569, %v1655
    %v1657 = vpop.f32.mrb[0].mxu0
    %v1658 = vadd.f32 %v1573, %v1657
    %1659 = vmatprep.mubr.bf16.mxu0 0
    %1660 = vmatmul.mubr.bf16.gmra.mrb[0].mxu0 %v262
    %v1661 = vpop.f32.mrb[0].mxu0
    %v1662 = vadd.f32 %v1569, %v1661
    %v1663 = vpop.f32.mrb[0].mxu0
    %v1664 = vadd.f32 %v1573, %v1663
    %v1665 = vpop.f32.mrb[0].mxu0
    %v1666 = vadd.f32 %v1569, %v1665
    %v1667 = vpop.f32.mrb[0].mxu0
    %v1668 = vadd.f32 %v1573, %v1667
    %1669 = vmatprep.mubr.bf16.mxu0 0
    %1670 = vmatmul.mubr.bf16.gmra.mrb[0].mxu0 %v265
    %v1671 = vpop.f32.mrb[0].mxu0
    %v1672 = vadd.f32 %v1569, %v1671
    %v1673 = vpop.f32.mrb[0].mxu0
    %v1674 = vadd.f32 %v1573, %v1673
    %v1675 = vpop.f32.mrb[0].mxu0
    %v1676 = vadd.f32 %v1569, %v1675
    %v1677 = vpop.f32.mrb[0].mxu0
    %v1678 = vadd.f32 %v1573, %v1677
    %1679 = vmatprep.mubr.bf16.mxu0 0
    %1680 = vmatmul.mubr.bf16.gmra.mrb[0].mxu0 %v268
    %v1681 = vpop.f32.mrb[0].mxu0
    %v1682 = vadd.f32 %v1569, %v1681
    %v1683 = vpop.f32.mrb[0].mxu0
    %v1684 = vadd.f32 %v1573, %v1683
    %v1685 = vpop.f32.mrb[0].mxu0
    %v1686 = vadd.f32 %v1569, %v1685
    %v1687 = vpop.f32.mrb[0].mxu0
    %v1688 = vadd.f32 %v1573, %v1687
    %1689 = vmatprep.mubr.bf16.mxu0 0
    %1690 = vmatmul.mubr.bf16.gmra.mrb[0].mxu0 %v271
    %v1691 = vpop.f32.mrb[0].mxu0
    %v1692 = vadd.f32 %v1569, %v1691
    %v1693 = vpop.f32.mrb[0].mxu0
    %v1694 = vadd.f32 %v1573, %v1693
    %v1695 = vpop.f32.mrb[0].mxu0
    %v1696 = vadd.f32 %v1569, %v1695
    %v1697 = vpop.f32.mrb[0].mxu0
    %v1698 = vadd.f32 %v1573, %v1697
    %1699 = vmatprep.mubr.bf16.mxu0 0
    %1700 = vmatmul.mubr.bf16.gmra.mrb[0].mxu0 %v274
    %v1701 = vpop.f32.mrb[0].mxu0
    %v1702 = vadd.f32 %v1569, %v1701
    %v1703 = vpop.f32.mrb[0].mxu0
    %v1704 = vadd.f32 %v1573, %v1703
    %v1705 = vpop.f32.mrb[0].mxu0
    %v1706 = vadd.f32 %v1569, %v1705
    %v1707 = vpop.f32.mrb[0].mxu0
    %v1708 = vadd.f32 %v1573, %v1707
    %1709 = vmatprep.mubr.bf16.mxu0 0
    %1710 = vmatmul.mubr.bf16.gmra.mrb[0].mxu0 %v277
    %v1711 = vpop.f32.mrb[0].mxu0
    %v1712 = vadd.f32 %v1569, %v1711
    %v1713 = vpop.f32.mrb[0].mxu0
    %v1714 = vadd.f32 %v1573, %v1713
    %v1715 = vpop.f32.mrb[0].mxu0
    %v1716 = vadd.f32 %v1569, %v1715
    %v1717 = vpop.f32.mrb[0].mxu0
    %v1718 = vadd.f32 %v1573, %v1717
    %1719 = vmatprep.mubr.bf16.mxu0 0
    %1720 = vmatmul.mubr.bf16.gmra.mrb[0].mxu0 %v280
    %v1721 = vpop.f32.mrb[0].mxu0
    %v1722 = vadd.f32 %v1569, %v1721
    %v1723 = vpop.f32.mrb[0].mxu0
    %v1724 = vadd.f32 %v1573, %v1723
    %v1725 = vpop.f32.mrb[0].mxu0
    %v1726 = vadd.f32 %v1569, %v1725
    %v1727 = vpop.f32.mrb[0].mxu0
    %v1728 = vadd.f32 %v1573, %v1727
    %1729 = vmatprep.mubr.bf16.mxu0 0
    %1730 = vmatmul.mubr.bf16.gmra.mrb[0].mxu0 %v283
    %v1731 = vpop.f32.mrb[0].mxu0
    %v1732 = vadd.f32 %v1569, %v1731
    %v1733 = vpop.f32.mrb[0].mxu0
    %v1734 = vadd.f32 %v1573, %v1733
    %v1735 = vpop.f32.mrb[0].mxu0
    %v1736 = vadd.f32 %v1569, %v1735
    %v1737 = vpop.f32.mrb[0].mxu0
    %v1738 = vadd.f32 %v1573, %v1737
    %1739 = vmatprep.mubr.bf16.mxu0 0
    %1740 = vmatmul.mubr.bf16.gmra.mrb[0].mxu0 %v286
    %v1741 = vpop.f32.mrb[0].mxu0
    %v1742 = vadd.f32 %v1569, %v1741
    %v1743 = vpop.f32.mrb[0].mxu0
    %v1744 = vadd.f32 %v1573, %v1743
    %v1745 = vpop.f32.mrb[0].mxu0
    %v1746 = vadd.f32 %v1569, %v1745
    %v1747 = vpop.f32.mrb[0].mxu0
    %v1748 = vadd.f32 %v1573, %v1747
    %1749 = vmatprep.mubr.bf16.mxu0 0
    %1750 = vmatmul.mubr.bf16.gmra.mrb[0].mxu0 %v289
    %v1751 = vpop.f32.mrb[0].mxu0
    %v1752 = vadd.f32 %v1569, %v1751
    %v1753 = vpop.f32.mrb[0].mxu0
    %v1754 = vadd.f32 %v1573, %v1753
    %v1755 = vpop.f32.mrb[0].mxu0
    %v1756 = vadd.f32 %v1569, %v1755
    %v1757 = vpop.f32.mrb[0].mxu0
    %v1758 = vadd.f32 %v1573, %v1757
    %1759 = vmatprep.mubr.bf16.mxu0 0
    %1760 = vmatmul.mubr.bf16.gmra.mrb[0].mxu0 %v292
    %v1761 = vpop.f32.mrb[0].mxu0
    %v1762 = vadd.f32 %v1569, %v1761
    %v1763 = vpop.f32.mrb[0].mxu0
    %v1764 = vadd.f32 %v1573, %v1763
    %v1765 = vpop.f32.mrb[0].mxu0
    %v1766 = vadd.f32 %v1569, %v1765
    %v1767 = vpop.f32.mrb[0].mxu0
    %v1768 = vadd.f32 %v1573, %v1767
    %1769 = vmatprep.mubr.bf16.mxu0 0
    %1770 = vmatmul.mubr.bf16.gmra.mrb[0].mxu0 %v295
    %v1771 = vpop.f32.mrb[0].mxu0
    %v1772 = vadd.f32 %v1569, %v1771
    %v1773 = vpop.f32.mrb[0].mxu0
    %v1774 = vadd.f32 %v1573, %v1773
    %v1775 = vpop.f32.mrb[0].mxu0
    %v1776 = vadd.f32 %v1569, %v1775
    %v1777 = vpop.f32.mrb[0].mxu0
    %v1778 = vadd.f32 %v1573, %v1777
    %1779 = vmatprep.mubr.bf16.mxu0 0
    %1780 = vmatmul.mubr.bf16.gmra.mrb[0].mxu0 %v298
    %v1781 = vpop.f32.mrb[0].mxu0
    %v1782 = vadd.f32 %v1569, %v1781
    %v1783 = vpop.f32.mrb[0].mxu0
    %v1784 = vadd.f32 %v1573, %v1783
    %v1785 = vpop.f32.mrb[0].mxu0
    %v1786 = vadd.f32 %v1569, %v1785
    %v1787 = vpop.f32.mrb[0].mxu0
    %v1788 = vadd.f32 %v1573, %v1787
    %1789 = vmatprep.mubr.bf16.mxu0 0
    %1790 = vmatmul.mubr.bf16.gmra.mrb[0].mxu0 %v301
    %v1791 = vpop.f32.mrb[0].mxu0
    %v1792 = vadd.f32 %v1569, %v1791
    %v1793 = vpop.f32.mrb[0].mxu0
    %v1794 = vadd.f32 %v1573, %v1793
    %v1795 = vpop.f32.mrb[0].mxu0
    %v1796 = vadd.f32 %v1569, %v1795
    %v1797 = vpop.f32.mrb[0].mxu0
    %v1798 = vadd.f32 %v1573, %v1797
    %1799 = vmatprep.mubr.bf16.mxu0 0
    %1800 = vmatmul.mubr.bf16.gmra.mrb[0].mxu0 %v304
    %v1801 = vpop.f32.mrb[0].mxu0
    %v1802 = vadd.f32 %v1569, %v1801
    %v1803 = vpop.f32.mrb[0].mxu0
    %v1804 = vadd.f32 %v1573, %v1803
    %v1805 = vpop.f32.mrb[0].mxu0
    %v1806 = vadd.f32 %v1569, %v1805
    %v1807 = vpop.f32.mrb[0].mxu0
    %v1808 = vadd.f32 %v1573, %v1807
    %1809 = vmatprep.mubr.bf16.mxu0 0
    %1810 = vmatmul.mubr.bf16.gmra.mrb[0].mxu0 %v307
    %v1811 = vpop.f32.mrb[0].mxu0
    %v1812 = vadd.f32 %v1569, %v1811
    %v1813 = vpop.f32.mrb[0].mxu0
    %v1814 = vadd.f32 %v1573, %v1813
    %v1815 = vpop.f32.mrb[0].mxu0
    %v1816 = vadd.f32 %v1569, %v1815
    %v1817 = vpop.f32.mrb[0].mxu0
    %v1818 = vadd.f32 %v1573, %v1817
    %1819 = vmatprep.mubr.bf16.mxu0 0
    %1820 = vmatmul.mubr.bf16.gmra.mrb[0].mxu0 %v310
    %v1821 = vpop.f32.mrb[0].mxu0
    %v1822 = vadd.f32 %v1569, %v1821
    %v1823 = vpop.f32.mrb[0].mxu0
    %v1824 = vadd.f32 %v1573, %v1823
    %v1825 = vpop.f32.mrb[0].mxu0
    %v1826 = vadd.f32 %v1569, %v1825
    %v1827 = vpop.f32.mrb[0].mxu0
    %v1828 = vadd.f32 %v1573, %v1827
    %1829 = vmatprep.mubr.bf16.mxu0 0
    %1830 = vmatmul.mubr.bf16.gmra.mrb[0].mxu0 %v313
    %v1831 = vpop.f32.mrb[0].mxu0
    %v1832 = vadd.f32 %v1569, %v1831
    %v1833 = vpop.f32.mrb[0].mxu0
    %v1834 = vadd.f32 %v1573, %v1833
    %v1835 = vpop.f32.mrb[0].mxu0
    %v1836 = vadd.f32 %v1569, %v1835
    %v1837 = vpop.f32.mrb[0].mxu0
    %v1838 = vadd.f32 %v1573, %v1837
    %1839 = vmatprep.mubr.bf16.mxu0 0
    %1840 = vmatmul.mubr.bf16.gmra.mrb[0].mxu0 %v316
    %v1841 = vpop.f32.mrb[0].mxu0
    %v1842 = vadd.f32 %v1569, %v1841
    %v1843 = vpop.f32.mrb[0].mxu0
    %v1844 = vadd.f32 %v1573, %v1843
    %v1845 = vpop.f32.mrb[0].mxu0
    %v1846 = vadd.f32 %v1569, %v1845
    %v1847 = vpop.f32.mrb[0].mxu0
    %v1848 = vadd.f32 %v1573, %v1847
    %1849 = vmatprep.mubr.bf16.mxu0 0
    %1850 = vmatmul.mubr.bf16.gmra.mrb[0].mxu0 %v319
    %v1851 = vpop.f32.mrb[0].mxu0
    %v1852 = vadd.f32 %v1569, %v1851
    %v1853 = vpop.f32.mrb[0].mxu0
    %v1854 = vadd.f32 %v1573, %v1853
    %v1855 = vpop.f32.mrb[0].mxu0
    %v1856 = vadd.f32 %v1569, %v1855
    %v1857 = vpop.f32.mrb[0].mxu0
    %v1858 = vadd.f32 %v1573, %v1857
    %1859 = vmatprep.mubr.bf16.mxu0 0
    %1860 = vmatmul.mubr.bf16.gmra.mrb[0].mxu0 %v322
    %v1861 = vpop.f32.mrb[0].mxu0
    %v1862 = vadd.f32 %v1569, %v1861
    %v1863 = vpop.f32.mrb[0].mxu0
    %v1864 = vadd.f32 %v1573, %v1863
    %v1865 = vpop.f32.mrb[0].mxu0
    %v1866 = vadd.f32 %v1569, %v1865
    %v1867 = vpop.f32.mrb[0].mxu0
    %v1868 = vadd.f32 %v1573, %v1867
    %1869 = vmatprep.mubr.bf16.mxu0 0
    %1870 = vmatmul.mubr.bf16.gmra.mrb[0].mxu0 %v325
    %v1871 = vpop.f32.mrb[0].mxu0
    %v1872 = vadd.f32 %v1569, %v1871
    %v1873 = vpop.f32.mrb[0].mxu0
    %v1874 = vadd.f32 %v1573, %v1873
    %v1875 = vpop.f32.mrb[0].mxu0
    %v1876 = vadd.f32 %v1569, %v1875
    %v1877 = vpop.f32.mrb[0].mxu0
    %v1878 = vadd.f32 %v1573, %v1877
    %1879 = vmatprep.mubr.bf16.mxu0 0
    %1880 = vmatmul.mubr.bf16.gmra.mrb[0].mxu0 %v328
    %v1881 = vpop.f32.mrb[0].mxu0
    %v1882 = vadd.f32 %v1569, %v1881
    %v1883 = vpop.f32.mrb[0].mxu0
    %v1884 = vadd.f32 %v1573, %v1883
    %v1885 = vpop.f32.mrb[0].mxu0
    %v1886 = vpop.f32.mrb[0].mxu0
    %1887 = vdwg.mxu0
    %v1888 = vmax.f32 %v1642, 0.0
    %v1889 = vmax.f32 %v1644, 0.0
    %v1890 = vmax.f32 %v1646, 0.0
    %v1891 = vmax.f32 %v1648, 0.0
    %v1892 = vmax.f32 %v1652, 0.0
    %v1893 = vmax.f32 %v1654, 0.0
    %v1894 = vmax.f32 %v1656, 0.0
    %v1895 = vmax.f32 %v1658, 0.0
    %v1896 = vmax.f32 %v1662, 0.0
    %v1897 = vmax.f32 %v1664, 0.0
    %v1898 = vmax.f32 %v1666, 0.0
    %v1899 = vmax.f32 %v1668, 0.0
    %v1900 = vmax.f32 %v1672, 0.0
    %v1901 = vmax.f32 %v1674, 0.0
    %v1902 = vmax.f32 %v1676, 0.0
    %v1903 = vmax.f32 %v1678, 0.0
    %v1904 = vmax.f32 %v1682, 0.0
    %v1905 = vmax.f32 %v1684, 0.0
    %v1906 = vmax.f32 %v1686, 0.0
    %v1907 = vmax.f32 %v1688, 0.0
    %v1908 = vmax.f32 %v1692, 0.0
    %v1909 = vmax.f32 %v1694, 0.0
    %v1910 = vmax.f32 %v1696, 0.0
    %v1911 = vmax.f32 %v1698, 0.0
    %v1912 = vmax.f32 %v1702, 0.0
    %v1913 = vmax.f32 %v1704, 0.0
    %v1914 = vmax.f32 %v1706, 0.0
    %v1915 = vmax.f32 %v1708, 0.0
    %v1916 = vmax.f32 %v1712, 0.0
    %v1917 = vmax.f32 %v1714, 0.0
    %v1918 = vmax.f32 %v1716, 0.0
    %v1919 = vmax.f32 %v1718, 0.0
    %v1920 = vmax.f32 %v1722, 0.0
    %v1921 = vmax.f32 %v1724, 0.0
    %v1922 = vmax.f32 %v1726, 0.0
    %v1923 = vmax.f32 %v1728, 0.0
    %v1924 = vmax.f32 %v1732, 0.0
    %v1925 = vmax.f32 %v1734, 0.0
    %v1926 = vmax.f32 %v1736, 0.0
    %v1927 = vmax.f32 %v1738, 0.0
    %v1928 = vmax.f32 %v1742, 0.0
    %v1929 = vmax.f32 %v1744, 0.0
    %v1930 = vmax.f32 %v1746, 0.0
    %v1931 = vmax.f32 %v1748, 0.0
    %v1932 = vmax.f32 %v1752, 0.0
    %v1933 = vmax.f32 %v1754, 0.0
    %v1934 = vmax.f32 %v1756, 0.0
    %v1935 = vmax.f32 %v1758, 0.0
    %v1936 = vmax.f32 %v1762, 0.0
    %v1937 = vmax.f32 %v1764, 0.0
    %v1938 = vmax.f32 %v1766, 0.0
    %v1939 = vmax.f32 %v1768, 0.0
    %v1940 = vmax.f32 %v1772, 0.0
    %v1941 = vmax.f32 %v1774, 0.0
    %v1942 = vmax.f32 %v1776, 0.0
    %v1943 = vmax.f32 %v1778, 0.0
    %v1944 = vmax.f32 %v1782, 0.0
    %v1945 = vmax.f32 %v1784, 0.0
    %v1946 = vmax.f32 %v1786, 0.0
    %v1947 = vmax.f32 %v1788, 0.0
    %v1948 = vmax.f32 %v1792, 0.0
    %v1949 = vmax.f32 %v1794, 0.0
    %v1950 = vmax.f32 %v1796, 0.0
    %v1951 = vmax.f32 %v1798, 0.0
    %v1952 = vmax.f32 %v1802, 0.0
    %v1953 = vmax.f32 %v1804, 0.0
    %v1954 = vmax.f32 %v1806, 0.0
    %v1955 = vmax.f32 %v1808, 0.0
    %v1956 = vmax.f32 %v1812, 0.0
    %v1957 = vmax.f32 %v1814, 0.0
    %v1958 = vmax.f32 %v1816, 0.0
    %v1959 = vmax.f32 %v1818, 0.0
    %v1960 = vmax.f32 %v1822, 0.0
    %v1961 = vmax.f32 %v1824, 0.0
    %v1962 = vmax.f32 %v1826, 0.0
    %v1963 = vmax.f32 %v1828, 0.0
    %v1964 = vmax.f32 %v1832, 0.0
    %v1965 = vmax.f32 %v1834, 0.0
    %v1966 = vmax.f32 %v1836, 0.0
    %v1967 = vmax.f32 %v1838, 0.0
    %v1968 = vmax.f32 %v1842, 0.0
    %v1969 = vmax.f32 %v1844, 0.0
    %v1970 = vmax.f32 %v1846, 0.0
    %v1971 = vmax.f32 %v1848, 0.0
    %v1972 = vmax.f32 %v1852, 0.0
    %v1973 = vmax.f32 %v1854, 0.0
    %v1974 = vmax.f32 %v1856, 0.0
    %v1975 = vmax.f32 %v1858, 0.0
    %v1976 = vmax.f32 %v1862, 0.0
    %v1977 = vmax.f32 %v1864, 0.0
    %v1978 = vmax.f32 %v1866, 0.0
    %v1979 = vmax.f32 %v1868, 0.0
    %v1980 = vmax.f32 %v1872, 0.0
    %v1981 = vmax.f32 %v1874, 0.0
    %v1982 = vmax.f32 %v1876, 0.0
    %v1983 = vmax.f32 %v1878, 0.0
    %v1984 = vmax.f32 %v1882, 0.0
    %v1985 = vmax.f32 %v1884, 0.0
    %1986 = vmatprep.subr.mxu0 %v1889
    %1987 = vmatpush1.msra.mxu0 %v1888
    %1988 = vmatprep.subr.mxu0 %v1891
    %1989 = vmatpush1.msra.mxu0 %v1890
    %1990 = vmatprep.subr.mxu0 %v1893
    %1991 = vmatpush1.msra.mxu0 %v1892
    %1992 = vmatprep.subr.mxu0 %v1895
    %1993 = vmatpush1.msra.mxu0 %v1894
    %1994 = vmatprep.subr.mxu0 %v1897
    %1995 = vmatpush1.msra.mxu0 %v1896
    %1996 = vmatprep.subr.mxu0 %v1899
    %1997 = vmatpush1.msra.mxu0 %v1898
    %1998 = vmatprep.subr.mxu0 %v1901
    %1999 = vmatpush1.msra.mxu0 %v1900
    %2000 = vmatprep.subr.mxu0 %v1903
    %2001 = vmatpush1.msra.mxu0 %v1902
    %2002 = vmatprep.subr.mxu0 %v1905
    %2003 = vmatpush1.msra.mxu0 %v1904
    %2004 = vmatprep.subr.mxu0 %v1907
    %2005 = vmatpush1.msra.mxu0 %v1906
    %2006 = vmatprep.subr.mxu0 %v1909
    %2007 = vmatpush1.msra.mxu0 %v1908
    %2008 = vmatprep.subr.mxu0 %v1911
    %2009 = vmatpush1.msra.mxu0 %v1910
    %2010 = vmatprep.subr.mxu0 %v1913
    %2011 = vmatpush1.msra.mxu0 %v1912
    %2012 = vmatprep.subr.mxu0 %v1915
    %2013 = vmatpush1.msra.mxu0 %v1914
    %2014 = vmatprep.subr.mxu0 %v1917
    %2015 = vmatpush1.msra.mxu0 %v1916
    %2016 = vmatprep.subr.mxu0 %v1919
    %2017 = vmatpush1.msra.mxu0 %v1918
    %2018 = vmatprep.subr.mxu0 %v1921
    %2019 = vmatpush1.msra.mxu0 %v1920
    %2020 = vmatprep.subr.mxu0 %v1923
    %2021 = vmatpush1.msra.mxu0 %v1922
    %2022 = vmatprep.subr.mxu0 %v1925
    %2023 = vmatpush1.msra.mxu0 %v1924
    %2024 = vmatprep.subr.mxu0 %v1927
    %2025 = vmatpush1.msra.mxu0 %v1926
    %2026 = vmatprep.subr.mxu0 %v1929
    %2027 = vmatpush1.msra.mxu0 %v1928
    %2028 = vmatprep.subr.mxu0 %v1931
    %2029 = vmatpush1.msra.mxu0 %v1930
    %2030 = vmatprep.subr.mxu0 %v1933
    %2031 = vmatpush1.msra.mxu0 %v1932
    %2032 = vmatprep.subr.mxu0 %v1935
    %2033 = vmatpush1.msra.mxu0 %v1934
    %2034 = vmatprep.subr.mxu0 %v1937
    %2035 = vmatpush1.msra.mxu0 %v1936
    %2036 = vmatprep.subr.mxu0 %v1939
    %2037 = vmatpush1.msra.mxu0 %v1938
    %2038 = vmatprep.subr.mxu0 %v1941
    %2039 = vmatpush1.msra.mxu0 %v1940
    %2040 = vmatprep.subr.mxu0 %v1943
    %2041 = vmatpush1.msra.mxu0 %v1942
    %2042 = vmatprep.subr.mxu0 %v1945
    %2043 = vmatpush1.msra.mxu0 %v1944
    %2044 = vmatprep.subr.mxu0 %v1947
    %2045 = vmatpush1.msra.mxu0 %v1946
    %2046 = vmatprep.subr.mxu0 %v1949
    %2047 = vmatpush1.msra.mxu0 %v1948
    %2048 = vmatprep.subr.mxu0 %v1951
    %2049 = vmatpush1.msra.mxu0 %v1950
    %2050 = vmatprep.mubr.f32.mxu0 %v732
    %2051 = vmatmul.mubr.f32.gmra.mrb[0].mxu0 %v724
    %v2052 = vpop.f32.mrb[0].mxu0
    %v2053 = vadd.f32 0.0, %v2052
    %v2054 = vpop.f32.mrb[0].mxu0
    %v2055 = vadd.f32 0.0, %v2054
    %2056 = vdwg.mxu0
    %2057 = vmatprep.subr.mxu0 %v1953
    %2058 = vmatpush1.msra.mxu0 %v1952
    %2059 = vmatprep.subr.mxu0 %v1955
    %2060 = vmatpush1.msra.mxu0 %v1954
    %2061 = vmatprep.subr.mxu0 %v1957
    %2062 = vmatpush1.msra.mxu0 %v1956
    %2063 = vmatprep.subr.mxu0 %v1959
    %2064 = vmatpush1.msra.mxu0 %v1958
    %2065 = vmatprep.subr.mxu0 %v1961
    %2066 = vmatpush1.msra.mxu0 %v1960
    %2067 = vmatprep.subr.mxu0 %v1963
    %2068 = vmatpush1.msra.mxu0 %v1962
    %2069 = vmatprep.subr.mxu0 %v1965
    %2070 = vmatpush1.msra.mxu0 %v1964
    %2071 = vmatprep.subr.mxu0 %v1967
    %2072 = vmatpush1.msra.mxu0 %v1966
    %2073 = vmatprep.subr.mxu0 %v1969
    %2074 = vmatpush1.msra.mxu0 %v1968
    %2075 = vmatprep.subr.mxu0 %v1971
    %2076 = vmatpush1.msra.mxu0 %v1970
    %2077 = vmatprep.subr.mxu0 %v1973
    %2078 = vmatpush1.msra.mxu0 %v1972
    %2079 = vmatprep.subr.mxu0 %v1975
    %2080 = vmatpush1.msra.mxu0 %v1974
    %2081 = vmatprep.subr.mxu0 %v1977
    %2082 = vmatpush1.msra.mxu0 %v1976
    %2083 = vmatprep.subr.mxu0 %v1979
    %2084 = vmatpush1.msra.mxu0 %v1978
    %2085 = vmatprep.subr.mxu0 %v1981
    %2086 = vmatpush1.msra.mxu0 %v1980
    %2087 = vmatprep.subr.mxu0 %v1983
    %2088 = vmatpush1.msra.mxu0 %v1982
    %2089 = vmatprep.subr.mxu0 %v1985
    %2090 = vmatpush1.msra.mxu0 %v1984
    %2091 = vmatprep.subr.mxu0 0.0
    %2092 = vmatpush1.msra.mxu0 0.0
    %2093 = vmatprep.subr.mxu0 0.0
    %2094 = vmatpush1.msra.mxu0 0.0
    %2095 = vmatprep.subr.mxu0 0.0
    %2096 = vmatpush1.msra.mxu0 0.0
    %2097 = vmatprep.subr.mxu0 0.0
    %2098 = vmatpush1.msra.mxu0 0.0
    %2099 = vmatprep.subr.mxu0 0.0
    %2100 = vmatpush1.msra.mxu0 0.0
    %2101 = vmatprep.subr.mxu0 0.0
    %2102 = vmatpush1.msra.mxu0 0.0
    %2103 = vmatprep.subr.mxu0 0.0
    %2104 = vmatpush1.msra.mxu0 0.0
    %2105 = vmatprep.subr.mxu0 0.0
    %2106 = vmatpush1.msra.mxu0 0.0
    %2107 = vmatprep.subr.mxu0 0.0
    %2108 = vmatpush1.msra.mxu0 0.0
    %2109 = vmatprep.subr.mxu0 0.0
    %2110 = vmatpush1.msra.mxu0 0.0
    %2111 = vmatprep.subr.mxu0 0.0
    %2112 = vmatpush1.msra.mxu0 0.0
    %2113 = vmatprep.subr.mxu0 0.0
    %2114 = vmatpush1.msra.mxu0 0.0
    %2115 = vmatprep.subr.mxu0 0.0
    %2116 = vmatpush1.msra.mxu0 0.0
    %2117 = vmatprep.subr.mxu0 0.0
    %2118 = vmatpush1.msra.mxu0 0.0
    %2119 = vmatprep.subr.mxu0 0.0
    %2120 = vmatpush1.msra.mxu0 0.0
    %2121 = vmatprep.mubr.f32.mxu0 %v738
    %2122 = vmatmul.mubr.f32.gmra.mrb[0].mxu0 %v731
    %v2123 = vpop.f32.mrb[0].mxu0
    %v2124 = vadd.f32 %v2053, %v2123
    %v2125 = vpop.f32.mrb[0].mxu0
    %v2126 = vadd.f32 %v2055, %v2125
    %2127 = vdwg.mxu0
    %v2128 = vpack.c.bf16 %v2124, %v2124
    %v2129 = vpack.c.bf16 %v2126, %v2126
    %v2130 = vld [vmem:[%s4 + $0x10] sm:$0xff]
    %v2131 = vld [vmem:[%s4 + $0x50] sm:$0xff]
    %v2134 = vunpack.c.l.b16 %v2130
    %v2135 = vunpack.c.h.b16 %v2130
    %v2136 = vunpack.c.l.b16 %v2131
    %v2137 = vunpack.c.h.b16 %v2131
    %v2138 = vpack.c.b16 %v2136, %v2134
    %v2139 = vpack.c.b16 %v2137, %v2135
    %2142 = vmatprep.subr.bf16.mxu0 %v2139
    %2143 = vmatpush1.bf16.xpose.msra.mxu0 %v2138
    %2144 = vmatprep.subr.bf16.mxu0 0
    %2145 = vmatpush1.bf16.xpose.msra.mxu0 0
    %2146 = vmatprep.subr.bf16.mxu0 0
    %2147 = vmatpush1.bf16.xpose.msra.mxu0 0
    %2148 = vmatprep.subr.bf16.mxu0 0
    %2149 = vmatpush1.bf16.xpose.msra.mxu0 0
    %2150 = vmatprep.subr.bf16.mxu0 0
    %2151 = vmatpush1.bf16.xpose.msra.mxu0 0
    %2152 = vmatprep.subr.bf16.mxu0 0
    %2153 = vmatpush1.bf16.xpose.msra.mxu0 0
    %2154 = vmatprep.subr.bf16.mxu0 0
    %2155 = vmatpush1.bf16.xpose.msra.mxu0 0
    %2156 = vmatprep.subr.bf16.mxu0 0
    %2157 = vmatpush1.bf16.xpose.msra.mxu0 0
    %2158 = vmatprep.subr.bf16.mxu0 0
    %2159 = vmatpush1.bf16.xpose.msra.mxu0 0
    %2160 = vmatprep.subr.bf16.mxu0 0
    %2161 = vmatpush1.bf16.xpose.msra.mxu0 0
    %2162 = vmatprep.subr.bf16.mxu0 0
    %2163 = vmatpush1.bf16.xpose.msra.mxu0 0
    %2164 = vmatprep.subr.bf16.mxu0 0
    %2165 = vmatpush1.bf16.xpose.msra.mxu0 0
    %2166 = vmatprep.subr.bf16.mxu0 0
    %2167 = vmatpush1.bf16.xpose.msra.mxu0 0
    %2168 = vmatprep.subr.bf16.mxu0 0
    %2169 = vmatpush1.bf16.xpose.msra.mxu0 0
    %2170 = vmatprep.subr.bf16.mxu0 0
    %2171 = vmatpush1.bf16.xpose.msra.mxu0 0
    %2172 = vmatprep.subr.bf16.mxu0 0
    %2173 = vmatpush1.bf16.xpose.msra.mxu0 0
    %2174 = vmatprep.mubr.bf16.mxu0 %v2129
    %2175 = vmatmul.mubr.bf16.gmra.mrb[0].mxu0 %v2128
    %v2176 = vpop.f32.mrb[0].mxu0
    %v2177 = vadd.f32 0.0, %v2176
    %v2178 = vpop.f32.mrb[0].mxu0
    %v2179 = vpop.f32.mrb[0].mxu0
    %v2180 = vpop.f32.mrb[0].mxu0
    %2181 = vdwg.mxu0
    %v2182 = vadd.f32 %v1554, %v2177
    %v2183 = vld [vmem:[#allocation2 + $0x18] sm:$0xff]
    %v2184 = vld [vmem:[#allocation2 + $0x58] sm:$0xff]
    %v2185 = vld [vmem:[#allocation2 + $0x98] sm:$0xff]
    %v2186 = vld [vmem:[#allocation2 + $0xd8] sm:$0xff]
    %v2187 = vld [vmem:[#allocation2 + $0x118] sm:$0x33]
    %v2188 = vld [vmem:[%s3 + $0x6] sm:$0x3]
    %v2190 = vlaneseq
    %v2191 = vshrl.u32 %v2190, 7
    %v2192 = vsub.s32 0, %v2191
    %v2193 = vrot.slane %v2188, %v2192
    %v2194 = vlaneseq
    %v2195 = vshrl.u32 %v2194, 7
    %v2196 = vsub.s32 1, %v2195
    %v2197 = vrot.slane %v2188, %v2196
    %v2205 = vunpack.c.l.b16 %v2183
    %v2206 = vunpack.c.h.b16 %v2183
    %v2207 = vunpack.c.l.b16 %v2184
    %v2208 = vunpack.c.h.b16 %v2184
    %v2209 = vunpack.c.l.b16 %v2185
    %v2210 = vunpack.c.h.b16 %v2185
    %v2211 = vunpack.c.l.b16 %v2186
    %v2212 = vunpack.c.h.b16 %v2186
    %v2213 = vunpack.c.l.b16 %v2187
    %v2214 = vunpack.c.h.b16 %v2187
    %v2215 = vpack.c.b16 %v2207, %v2205
    %v2216 = vpack.c.b16 %v2208, %v2206
    %v2217 = vpack.c.b16 %v2211, %v2209
    %v2218 = vpack.c.b16 %v2212, %v2210
    %v2219 = vpack.c.b16 %v2213, %v2213
    %v2220 = vpack.c.b16 %v2214, %v2214
    %v2226 = vsel %vm330, %v2219, 0
    %v2229 = vsel %vm330, %v2220, 0
    %2231 = vmatprep.subr.bf16.mxu0 %v2216
    %2232 = vmatpush1.bf16.msra.mxu0 %v2215
    %2233 = vmatprep.subr.bf16.mxu0 %v2218
    %2234 = vmatpush1.bf16.msra.mxu0 %v2217
    %2235 = vmatprep.subr.bf16.mxu0 %v2229
    %2236 = vmatpush1.bf16.msra.mxu0 %v2226
    %2237 = vmatprep.subr.bf16.mxu0 0
    %2238 = vmatpush1.bf16.msra.mxu0 0
    %2239 = vmatprep.subr.bf16.mxu0 0
    %2240 = vmatpush1.bf16.msra.mxu0 0
    %2241 = vmatprep.subr.bf16.mxu0 0
    %2242 = vmatpush1.bf16.msra.mxu0 0
    %2243 = vmatprep.subr.bf16.mxu0 0
    %2244 = vmatpush1.bf16.msra.mxu0 0
    %2245 = vmatprep.subr.bf16.mxu0 0
    %2246 = vmatpush1.bf16.msra.mxu0 0
    %2247 = vmatprep.subr.bf16.mxu0 0
    %2248 = vmatpush1.bf16.msra.mxu0 0
    %2249 = vmatprep.subr.bf16.mxu0 0
    %2250 = vmatpush1.bf16.msra.mxu0 0
    %2251 = vmatprep.subr.bf16.mxu0 0
    %2252 = vmatpush1.bf16.msra.mxu0 0
    %2253 = vmatprep.subr.bf16.mxu0 0
    %2254 = vmatpush1.bf16.msra.mxu0 0
    %2255 = vmatprep.subr.bf16.mxu0 0
    %2256 = vmatpush1.bf16.msra.mxu0 0
    %2257 = vmatprep.subr.bf16.mxu0 0
    %2258 = vmatpush1.bf16.msra.mxu0 0
    %2259 = vmatprep.subr.bf16.mxu0 0
    %2260 = vmatpush1.bf16.msra.mxu0 0
    %2261 = vmatprep.subr.bf16.mxu0 0
    %2262 = vmatpush1.bf16.msra.mxu0 0
    %2263 = vmatprep.mubr.bf16.mxu0 0
    %2264 = vmatmul.mubr.bf16.gmra.mrb[0].mxu0 %v256
    %v2265 = vpop.f32.mrb[0].mxu0
    %v2266 = vadd.f32 %v2193, %v2265
    %v2267 = vpop.f32.mrb[0].mxu0
    %v2268 = vadd.f32 %v2197, %v2267
    %v2269 = vpop.f32.mrb[0].mxu0
    %v2270 = vadd.f32 %v2193, %v2269
    %v2271 = vpop.f32.mrb[0].mxu0
    %v2272 = vadd.f32 %v2197, %v2271
    %2273 = vmatprep.mubr.bf16.mxu0 0
    %2274 = vmatmul.mubr.bf16.gmra.mrb[0].mxu0 %v259
    %v2275 = vpop.f32.mrb[0].mxu0
    %v2276 = vadd.f32 %v2193, %v2275
    %v2277 = vpop.f32.mrb[0].mxu0
    %v2278 = vadd.f32 %v2197, %v2277
    %v2279 = vpop.f32.mrb[0].mxu0
    %v2280 = vadd.f32 %v2193, %v2279
    %v2281 = vpop.f32.mrb[0].mxu0
    %v2282 = vadd.f32 %v2197, %v2281
    %2283 = vmatprep.mubr.bf16.mxu0 0
    %2284 = vmatmul.mubr.bf16.gmra.mrb[0].mxu0 %v262
    %v2285 = vpop.f32.mrb[0].mxu0
    %v2286 = vadd.f32 %v2193, %v2285
    %v2287 = vpop.f32.mrb[0].mxu0
    %v2288 = vadd.f32 %v2197, %v2287
    %v2289 = vpop.f32.mrb[0].mxu0
    %v2290 = vadd.f32 %v2193, %v2289
    %v2291 = vpop.f32.mrb[0].mxu0
    %v2292 = vadd.f32 %v2197, %v2291
    %2293 = vmatprep.mubr.bf16.mxu0 0
    %2294 = vmatmul.mubr.bf16.gmra.mrb[0].mxu0 %v265
    %v2295 = vpop.f32.mrb[0].mxu0
    %v2296 = vadd.f32 %v2193, %v2295
    %v2297 = vpop.f32.mrb[0].mxu0
    %v2298 = vadd.f32 %v2197, %v2297
    %v2299 = vpop.f32.mrb[0].mxu0
    %v2300 = vadd.f32 %v2193, %v2299
    %v2301 = vpop.f32.mrb[0].mxu0
    %v2302 = vadd.f32 %v2197, %v2301
    %2303 = vmatprep.mubr.bf16.mxu0 0
    %2304 = vmatmul.mubr.bf16.gmra.mrb[0].mxu0 %v268
    %v2305 = vpop.f32.mrb[0].mxu0
    %v2306 = vadd.f32 %v2193, %v2305
    %v2307 = vpop.f32.mrb[0].mxu0
    %v2308 = vadd.f32 %v2197, %v2307
    %v2309 = vpop.f32.mrb[0].mxu0
    %v2310 = vadd.f32 %v2193, %v2309
    %v2311 = vpop.f32.mrb[0].mxu0
    %v2312 = vadd.f32 %v2197, %v2311
    %2313 = vmatprep.mubr.bf16.mxu0 0
    %2314 = vmatmul.mubr.bf16.gmra.mrb[0].mxu0 %v271
    %v2315 = vpop.f32.mrb[0].mxu0
    %v2316 = vadd.f32 %v2193, %v2315
    %v2317 = vpop.f32.mrb[0].mxu0
    %v2318 = vadd.f32 %v2197, %v2317
    %v2319 = vpop.f32.mrb[0].mxu0
    %v2320 = vadd.f32 %v2193, %v2319
    %v2321 = vpop.f32.mrb[0].mxu0
    %v2322 = vadd.f32 %v2197, %v2321
    %2323 = vmatprep.mubr.bf16.mxu0 0
    %2324 = vmatmul.mubr.bf16.gmra.mrb[0].mxu0 %v274
    %v2325 = vpop.f32.mrb[0].mxu0
    %v2326 = vadd.f32 %v2193, %v2325
    %v2327 = vpop.f32.mrb[0].mxu0
    %v2328 = vadd.f32 %v2197, %v2327
    %v2329 = vpop.f32.mrb[0].mxu0
    %v2330 = vadd.f32 %v2193, %v2329
    %v2331 = vpop.f32.mrb[0].mxu0
    %v2332 = vadd.f32 %v2197, %v2331
    %2333 = vmatprep.mubr.bf16.mxu0 0
    %2334 = vmatmul.mubr.bf16.gmra.mrb[0].mxu0 %v277
    %v2335 = vpop.f32.mrb[0].mxu0
    %v2336 = vadd.f32 %v2193, %v2335
    %v2337 = vpop.f32.mrb[0].mxu0
    %v2338 = vadd.f32 %v2197, %v2337
    %v2339 = vpop.f32.mrb[0].mxu0
    %v2340 = vadd.f32 %v2193, %v2339
    %v2341 = vpop.f32.mrb[0].mxu0
    %v2342 = vadd.f32 %v2197, %v2341
    %2343 = vmatprep.mubr.bf16.mxu0 0
    %2344 = vmatmul.mubr.bf16.gmra.mrb[0].mxu0 %v280
    %v2345 = vpop.f32.mrb[0].mxu0
    %v2346 = vadd.f32 %v2193, %v2345
    %v2347 = vpop.f32.mrb[0].mxu0
    %v2348 = vadd.f32 %v2197, %v2347
    %v2349 = vpop.f32.mrb[0].mxu0
    %v2350 = vadd.f32 %v2193, %v2349
    %v2351 = vpop.f32.mrb[0].mxu0
    %v2352 = vadd.f32 %v2197, %v2351
    %2353 = vmatprep.mubr.bf16.mxu0 0
    %2354 = vmatmul.mubr.bf16.gmra.mrb[0].mxu0 %v283
    %v2355 = vpop.f32.mrb[0].mxu0
    %v2356 = vadd.f32 %v2193, %v2355
    %v2357 = vpop.f32.mrb[0].mxu0
    %v2358 = vadd.f32 %v2197, %v2357
    %v2359 = vpop.f32.mrb[0].mxu0
    %v2360 = vadd.f32 %v2193, %v2359
    %v2361 = vpop.f32.mrb[0].mxu0
    %v2362 = vadd.f32 %v2197, %v2361
    %2363 = vmatprep.mubr.bf16.mxu0 0
    %2364 = vmatmul.mubr.bf16.gmra.mrb[0].mxu0 %v286
    %v2365 = vpop.f32.mrb[0].mxu0
    %v2366 = vadd.f32 %v2193, %v2365
    %v2367 = vpop.f32.mrb[0].mxu0
    %v2368 = vadd.f32 %v2197, %v2367
    %v2369 = vpop.f32.mrb[0].mxu0
    %v2370 = vadd.f32 %v2193, %v2369
    %v2371 = vpop.f32.mrb[0].mxu0
    %v2372 = vadd.f32 %v2197, %v2371
    %2373 = vmatprep.mubr.bf16.mxu0 0
    %2374 = vmatmul.mubr.bf16.gmra.mrb[0].mxu0 %v289
    %v2375 = vpop.f32.mrb[0].mxu0
    %v2376 = vadd.f32 %v2193, %v2375
    %v2377 = vpop.f32.mrb[0].mxu0
    %v2378 = vadd.f32 %v2197, %v2377
    %v2379 = vpop.f32.mrb[0].mxu0
    %v2380 = vadd.f32 %v2193, %v2379
    %v2381 = vpop.f32.mrb[0].mxu0
    %v2382 = vadd.f32 %v2197, %v2381
    %2383 = vmatprep.mubr.bf16.mxu0 0
    %2384 = vmatmul.mubr.bf16.gmra.mrb[0].mxu0 %v292
    %v2385 = vpop.f32.mrb[0].mxu0
    %v2386 = vadd.f32 %v2193, %v2385
    %v2387 = vpop.f32.mrb[0].mxu0
    %v2388 = vadd.f32 %v2197, %v2387
    %v2389 = vpop.f32.mrb[0].mxu0
    %v2390 = vadd.f32 %v2193, %v2389
    %v2391 = vpop.f32.mrb[0].mxu0
    %v2392 = vadd.f32 %v2197, %v2391
    %2393 = vmatprep.mubr.bf16.mxu0 0
    %2394 = vmatmul.mubr.bf16.gmra.mrb[0].mxu0 %v295
    %v2395 = vpop.f32.mrb[0].mxu0
    %v2396 = vadd.f32 %v2193, %v2395
    %v2397 = vpop.f32.mrb[0].mxu0
    %v2398 = vadd.f32 %v2197, %v2397
    %v2399 = vpop.f32.mrb[0].mxu0
    %v2400 = vadd.f32 %v2193, %v2399
    %v2401 = vpop.f32.mrb[0].mxu0
    %v2402 = vadd.f32 %v2197, %v2401
    %2403 = vmatprep.mubr.bf16.mxu0 0
    %2404 = vmatmul.mubr.bf16.gmra.mrb[0].mxu0 %v298
    %v2405 = vpop.f32.mrb[0].mxu0
    %v2406 = vadd.f32 %v2193, %v2405
    %v2407 = vpop.f32.mrb[0].mxu0
    %v2408 = vadd.f32 %v2197, %v2407
    %v2409 = vpop.f32.mrb[0].mxu0
    %v2410 = vadd.f32 %v2193, %v2409
    %v2411 = vpop.f32.mrb[0].mxu0
    %v2412 = vadd.f32 %v2197, %v2411
    %2413 = vmatprep.mubr.bf16.mxu0 0
    %2414 = vmatmul.mubr.bf16.gmra.mrb[0].mxu0 %v301
    %v2415 = vpop.f32.mrb[0].mxu0
    %v2416 = vadd.f32 %v2193, %v2415
    %v2417 = vpop.f32.mrb[0].mxu0
    %v2418 = vadd.f32 %v2197, %v2417
    %v2419 = vpop.f32.mrb[0].mxu0
    %v2420 = vadd.f32 %v2193, %v2419
    %v2421 = vpop.f32.mrb[0].mxu0
    %v2422 = vadd.f32 %v2197, %v2421
    %2423 = vmatprep.mubr.bf16.mxu0 0
    %2424 = vmatmul.mubr.bf16.gmra.mrb[0].mxu0 %v304
    %v2425 = vpop.f32.mrb[0].mxu0
    %v2426 = vadd.f32 %v2193, %v2425
    %v2427 = vpop.f32.mrb[0].mxu0
    %v2428 = vadd.f32 %v2197, %v2427
    %v2429 = vpop.f32.mrb[0].mxu0
    %v2430 = vadd.f32 %v2193, %v2429
    %v2431 = vpop.f32.mrb[0].mxu0
    %v2432 = vadd.f32 %v2197, %v2431
    %2433 = vmatprep.mubr.bf16.mxu0 0
    %2434 = vmatmul.mubr.bf16.gmra.mrb[0].mxu0 %v307
    %v2435 = vpop.f32.mrb[0].mxu0
    %v2436 = vadd.f32 %v2193, %v2435
    %v2437 = vpop.f32.mrb[0].mxu0
    %v2438 = vadd.f32 %v2197, %v2437
    %v2439 = vpop.f32.mrb[0].mxu0
    %v2440 = vadd.f32 %v2193, %v2439
    %v2441 = vpop.f32.mrb[0].mxu0
    %v2442 = vadd.f32 %v2197, %v2441
    %2443 = vmatprep.mubr.bf16.mxu0 0
    %2444 = vmatmul.mubr.bf16.gmra.mrb[0].mxu0 %v310
    %v2445 = vpop.f32.mrb[0].mxu0
    %v2446 = vadd.f32 %v2193, %v2445
    %v2447 = vpop.f32.mrb[0].mxu0
    %v2448 = vadd.f32 %v2197, %v2447
    %v2449 = vpop.f32.mrb[0].mxu0
    %v2450 = vadd.f32 %v2193, %v2449
    %v2451 = vpop.f32.mrb[0].mxu0
    %v2452 = vadd.f32 %v2197, %v2451
    %2453 = vmatprep.mubr.bf16.mxu0 0
    %2454 = vmatmul.mubr.bf16.gmra.mrb[0].mxu0 %v313
    %v2455 = vpop.f32.mrb[0].mxu0
    %v2456 = vadd.f32 %v2193, %v2455
    %v2457 = vpop.f32.mrb[0].mxu0
    %v2458 = vadd.f32 %v2197, %v2457
    %v2459 = vpop.f32.mrb[0].mxu0
    %v2460 = vadd.f32 %v2193, %v2459
    %v2461 = vpop.f32.mrb[0].mxu0
    %v2462 = vadd.f32 %v2197, %v2461
    %2463 = vmatprep.mubr.bf16.mxu0 0
    %2464 = vmatmul.mubr.bf16.gmra.mrb[0].mxu0 %v316
    %v2465 = vpop.f32.mrb[0].mxu0
    %v2466 = vadd.f32 %v2193, %v2465
    %v2467 = vpop.f32.mrb[0].mxu0
    %v2468 = vadd.f32 %v2197, %v2467
    %v2469 = vpop.f32.mrb[0].mxu0
    %v2470 = vadd.f32 %v2193, %v2469
    %v2471 = vpop.f32.mrb[0].mxu0
    %v2472 = vadd.f32 %v2197, %v2471
    %2473 = vmatprep.mubr.bf16.mxu0 0
    %2474 = vmatmul.mubr.bf16.gmra.mrb[0].mxu0 %v319
    %v2475 = vpop.f32.mrb[0].mxu0
    %v2476 = vadd.f32 %v2193, %v2475
    %v2477 = vpop.f32.mrb[0].mxu0
    %v2478 = vadd.f32 %v2197, %v2477
    %v2479 = vpop.f32.mrb[0].mxu0
    %v2480 = vadd.f32 %v2193, %v2479
    %v2481 = vpop.f32.mrb[0].mxu0
    %v2482 = vadd.f32 %v2197, %v2481
    %2483 = vmatprep.mubr.bf16.mxu0 0
    %2484 = vmatmul.mubr.bf16.gmra.mrb[0].mxu0 %v322
    %v2485 = vpop.f32.mrb[0].mxu0
    %v2486 = vadd.f32 %v2193, %v2485
    %v2487 = vpop.f32.mrb[0].mxu0
    %v2488 = vadd.f32 %v2197, %v2487
    %v2489 = vpop.f32.mrb[0].mxu0
    %v2490 = vadd.f32 %v2193, %v2489
    %v2491 = vpop.f32.mrb[0].mxu0
    %v2492 = vadd.f32 %v2197, %v2491
    %2493 = vmatprep.mubr.bf16.mxu0 0
    %2494 = vmatmul.mubr.bf16.gmra.mrb[0].mxu0 %v325
    %v2495 = vpop.f32.mrb[0].mxu0
    %v2496 = vadd.f32 %v2193, %v2495
    %v2497 = vpop.f32.mrb[0].mxu0
    %v2498 = vadd.f32 %v2197, %v2497
    %v2499 = vpop.f32.mrb[0].mxu0
    %v2500 = vadd.f32 %v2193, %v2499
    %v2501 = vpop.f32.mrb[0].mxu0
    %v2502 = vadd.f32 %v2197, %v2501
    %2503 = vmatprep.mubr.bf16.mxu0 0
    %2504 = vmatmul.mubr.bf16.gmra.mrb[0].mxu0 %v328
    %v2505 = vpop.f32.mrb[0].mxu0
    %v2506 = vadd.f32 %v2193, %v2505
    %v2507 = vpop.f32.mrb[0].mxu0
    %v2508 = vadd.f32 %v2197, %v2507
    %v2509 = vpop.f32.mrb[0].mxu0
    %v2510 = vpop.f32.mrb[0].mxu0
    %2511 = vdwg.mxu0
    %v2512 = vmax.f32 %v2266, 0.0
    %v2513 = vmax.f32 %v2268, 0.0
    %v2514 = vmax.f32 %v2270, 0.0
    %v2515 = vmax.f32 %v2272, 0.0
    %v2516 = vmax.f32 %v2276, 0.0
    %v2517 = vmax.f32 %v2278, 0.0
    %v2518 = vmax.f32 %v2280, 0.0
    %v2519 = vmax.f32 %v2282, 0.0
    %v2520 = vmax.f32 %v2286, 0.0
    %v2521 = vmax.f32 %v2288, 0.0
    %v2522 = vmax.f32 %v2290, 0.0
    %v2523 = vmax.f32 %v2292, 0.0
    %v2524 = vmax.f32 %v2296, 0.0
    %v2525 = vmax.f32 %v2298, 0.0
    %v2526 = vmax.f32 %v2300, 0.0
    %v2527 = vmax.f32 %v2302, 0.0
    %v2528 = vmax.f32 %v2306, 0.0
    %v2529 = vmax.f32 %v2308, 0.0
    %v2530 = vmax.f32 %v2310, 0.0
    %v2531 = vmax.f32 %v2312, 0.0
    %v2532 = vmax.f32 %v2316, 0.0
    %v2533 = vmax.f32 %v2318, 0.0
    %v2534 = vmax.f32 %v2320, 0.0
    %v2535 = vmax.f32 %v2322, 0.0
    %v2536 = vmax.f32 %v2326, 0.0
    %v2537 = vmax.f32 %v2328, 0.0
    %v2538 = vmax.f32 %v2330, 0.0
    %v2539 = vmax.f32 %v2332, 0.0
    %v2540 = vmax.f32 %v2336, 0.0
    %v2541 = vmax.f32 %v2338, 0.0
    %v2542 = vmax.f32 %v2340, 0.0
    %v2543 = vmax.f32 %v2342, 0.0
    %v2544 = vmax.f32 %v2346, 0.0
    %v2545 = vmax.f32 %v2348, 0.0
    %v2546 = vmax.f32 %v2350, 0.0
    %v2547 = vmax.f32 %v2352, 0.0
    %v2548 = vmax.f32 %v2356, 0.0
    %v2549 = vmax.f32 %v2358, 0.0
    %v2550 = vmax.f32 %v2360, 0.0
    %v2551 = vmax.f32 %v2362, 0.0
    %v2552 = vmax.f32 %v2366, 0.0
    %v2553 = vmax.f32 %v2368, 0.0
    %v2554 = vmax.f32 %v2370, 0.0
    %v2555 = vmax.f32 %v2372, 0.0
    %v2556 = vmax.f32 %v2376, 0.0
    %v2557 = vmax.f32 %v2378, 0.0
    %v2558 = vmax.f32 %v2380, 0.0
    %v2559 = vmax.f32 %v2382, 0.0
    %v2560 = vmax.f32 %v2386, 0.0
    %v2561 = vmax.f32 %v2388, 0.0
    %v2562 = vmax.f32 %v2390, 0.0
    %v2563 = vmax.f32 %v2392, 0.0
    %v2564 = vmax.f32 %v2396, 0.0
    %v2565 = vmax.f32 %v2398, 0.0
    %v2566 = vmax.f32 %v2400, 0.0
    %v2567 = vmax.f32 %v2402, 0.0
    %v2568 = vmax.f32 %v2406, 0.0
    %v2569 = vmax.f32 %v2408, 0.0
    %v2570 = vmax.f32 %v2410, 0.0
    %v2571 = vmax.f32 %v2412, 0.0
    %v2572 = vmax.f32 %v2416, 0.0
    %v2573 = vmax.f32 %v2418, 0.0
    %v2574 = vmax.f32 %v2420, 0.0
    %v2575 = vmax.f32 %v2422, 0.0
    %v2576 = vmax.f32 %v2426, 0.0
    %v2577 = vmax.f32 %v2428, 0.0
    %v2578 = vmax.f32 %v2430, 0.0
    %v2579 = vmax.f32 %v2432, 0.0
    %v2580 = vmax.f32 %v2436, 0.0
    %v2581 = vmax.f32 %v2438, 0.0
    %v2582 = vmax.f32 %v2440, 0.0
    %v2583 = vmax.f32 %v2442, 0.0
    %v2584 = vmax.f32 %v2446, 0.0
    %v2585 = vmax.f32 %v2448, 0.0
    %v2586 = vmax.f32 %v2450, 0.0
    %v2587 = vmax.f32 %v2452, 0.0
    %v2588 = vmax.f32 %v2456, 0.0
    %v2589 = vmax.f32 %v2458, 0.0
    %v2590 = vmax.f32 %v2460, 0.0
    %v2591 = vmax.f32 %v2462, 0.0
    %v2592 = vmax.f32 %v2466, 0.0
    %v2593 = vmax.f32 %v2468, 0.0
    %v2594 = vmax.f32 %v2470, 0.0
    %v2595 = vmax.f32 %v2472, 0.0
    %v2596 = vmax.f32 %v2476, 0.0
    %v2597 = vmax.f32 %v2478, 0.0
    %v2598 = vmax.f32 %v2480, 0.0
    %v2599 = vmax.f32 %v2482, 0.0
    %v2600 = vmax.f32 %v2486, 0.0
    %v2601 = vmax.f32 %v2488, 0.0
    %v2602 = vmax.f32 %v2490, 0.0
    %v2603 = vmax.f32 %v2492, 0.0
    %v2604 = vmax.f32 %v2496, 0.0
    %v2605 = vmax.f32 %v2498, 0.0
    %v2606 = vmax.f32 %v2500, 0.0
    %v2607 = vmax.f32 %v2502, 0.0
    %v2608 = vmax.f32 %v2506, 0.0
    %v2609 = vmax.f32 %v2508, 0.0
    %2610 = vmatprep.subr.mxu0 %v2513
    %2611 = vmatpush1.msra.mxu0 %v2512
    %2612 = vmatprep.subr.mxu0 %v2515
    %2613 = vmatpush1.msra.mxu0 %v2514
    %2614 = vmatprep.subr.mxu0 %v2517
    %2615 = vmatpush1.msra.mxu0 %v2516
    %2616 = vmatprep.subr.mxu0 %v2519
    %2617 = vmatpush1.msra.mxu0 %v2518
    %2618 = vmatprep.subr.mxu0 %v2521
    %2619 = vmatpush1.msra.mxu0 %v2520
    %2620 = vmatprep.subr.mxu0 %v2523
    %2621 = vmatpush1.msra.mxu0 %v2522
    %2622 = vmatprep.subr.mxu0 %v2525
    %2623 = vmatpush1.msra.mxu0 %v2524
    %2624 = vmatprep.subr.mxu0 %v2527
    %2625 = vmatpush1.msra.mxu0 %v2526
    %2626 = vmatprep.subr.mxu0 %v2529
    %2627 = vmatpush1.msra.mxu0 %v2528
    %2628 = vmatprep.subr.mxu0 %v2531
    %2629 = vmatpush1.msra.mxu0 %v2530
    %2630 = vmatprep.subr.mxu0 %v2533
    %2631 = vmatpush1.msra.mxu0 %v2532
    %2632 = vmatprep.subr.mxu0 %v2535
    %2633 = vmatpush1.msra.mxu0 %v2534
    %2634 = vmatprep.subr.mxu0 %v2537
    %2635 = vmatpush1.msra.mxu0 %v2536
    %2636 = vmatprep.subr.mxu0 %v2539
    %2637 = vmatpush1.msra.mxu0 %v2538
    %2638 = vmatprep.subr.mxu0 %v2541
    %2639 = vmatpush1.msra.mxu0 %v2540
    %2640 = vmatprep.subr.mxu0 %v2543
    %2641 = vmatpush1.msra.mxu0 %v2542
    %2642 = vmatprep.subr.mxu0 %v2545
    %2643 = vmatpush1.msra.mxu0 %v2544
    %2644 = vmatprep.subr.mxu0 %v2547
    %2645 = vmatpush1.msra.mxu0 %v2546
    %2646 = vmatprep.subr.mxu0 %v2549
    %2647 = vmatpush1.msra.mxu0 %v2548
    %2648 = vmatprep.subr.mxu0 %v2551
    %2649 = vmatpush1.msra.mxu0 %v2550
    %2650 = vmatprep.subr.mxu0 %v2553
    %2651 = vmatpush1.msra.mxu0 %v2552
    %2652 = vmatprep.subr.mxu0 %v2555
    %2653 = vmatpush1.msra.mxu0 %v2554
    %2654 = vmatprep.subr.mxu0 %v2557
    %2655 = vmatpush1.msra.mxu0 %v2556
    %2656 = vmatprep.subr.mxu0 %v2559
    %2657 = vmatpush1.msra.mxu0 %v2558
    %2658 = vmatprep.subr.mxu0 %v2561
    %2659 = vmatpush1.msra.mxu0 %v2560
    %2660 = vmatprep.subr.mxu0 %v2563
    %2661 = vmatpush1.msra.mxu0 %v2562
    %2662 = vmatprep.subr.mxu0 %v2565
    %2663 = vmatpush1.msra.mxu0 %v2564
    %2664 = vmatprep.subr.mxu0 %v2567
    %2665 = vmatpush1.msra.mxu0 %v2566
    %2666 = vmatprep.subr.mxu0 %v2569
    %2667 = vmatpush1.msra.mxu0 %v2568
    %2668 = vmatprep.subr.mxu0 %v2571
    %2669 = vmatpush1.msra.mxu0 %v2570
    %2670 = vmatprep.subr.mxu0 %v2573
    %2671 = vmatpush1.msra.mxu0 %v2572
    %2672 = vmatprep.subr.mxu0 %v2575
    %2673 = vmatpush1.msra.mxu0 %v2574
    %2674 = vmatprep.mubr.f32.mxu0 %v732
    %2675 = vmatmul.mubr.f32.gmra.mrb[0].mxu0 %v724
    %v2676 = vpop.f32.mrb[0].mxu0
    %v2677 = vadd.f32 0.0, %v2676
    %v2678 = vpop.f32.mrb[0].mxu0
    %v2679 = vadd.f32 0.0, %v2678
    %2680 = vdwg.mxu0
    %2681 = vmatprep.subr.mxu0 %v2577
    %2682 = vmatpush1.msra.mxu0 %v2576
    %2683 = vmatprep.subr.mxu0 %v2579
    %2684 = vmatpush1.msra.mxu0 %v2578
    %2685 = vmatprep.subr.mxu0 %v2581
    %2686 = vmatpush1.msra.mxu0 %v2580
    %2687 = vmatprep.subr.mxu0 %v2583
    %2688 = vmatpush1.msra.mxu0 %v2582
    %2689 = vmatprep.subr.mxu0 %v2585
    %2690 = vmatpush1.msra.mxu0 %v2584
    %2691 = vmatprep.subr.mxu0 %v2587
    %2692 = vmatpush1.msra.mxu0 %v2586
    %2693 = vmatprep.subr.mxu0 %v2589
    %2694 = vmatpush1.msra.mxu0 %v2588
    %2695 = vmatprep.subr.mxu0 %v2591
    %2696 = vmatpush1.msra.mxu0 %v2590
    %2697 = vmatprep.subr.mxu0 %v2593
    %2698 = vmatpush1.msra.mxu0 %v2592
    %2699 = vmatprep.subr.mxu0 %v2595
    %2700 = vmatpush1.msra.mxu0 %v2594
    %2701 = vmatprep.subr.mxu0 %v2597
    %2702 = vmatpush1.msra.mxu0 %v2596
    %2703 = vmatprep.subr.mxu0 %v2599
    %2704 = vmatpush1.msra.mxu0 %v2598
    %2705 = vmatprep.subr.mxu0 %v2601
    %2706 = vmatpush1.msra.mxu0 %v2600
    %2707 = vmatprep.subr.mxu0 %v2603
    %2708 = vmatpush1.msra.mxu0 %v2602
    %2709 = vmatprep.subr.mxu0 %v2605
    %2710 = vmatpush1.msra.mxu0 %v2604
    %2711 = vmatprep.subr.mxu0 %v2607
    %2712 = vmatpush1.msra.mxu0 %v2606
    %2713 = vmatprep.subr.mxu0 %v2609
    %2714 = vmatpush1.msra.mxu0 %v2608
    %2715 = vmatprep.subr.mxu0 0.0
    %2716 = vmatpush1.msra.mxu0 0.0
    %2717 = vmatprep.subr.mxu0 0.0
    %2718 = vmatpush1.msra.mxu0 0.0
    %2719 = vmatprep.subr.mxu0 0.0
    %2720 = vmatpush1.msra.mxu0 0.0
    %2721 = vmatprep.subr.mxu0 0.0
    %2722 = vmatpush1.msra.mxu0 0.0
    %2723 = vmatprep.subr.mxu0 0.0
    %2724 = vmatpush1.msra.mxu0 0.0
    %2725 = vmatprep.subr.mxu0 0.0
    %2726 = vmatpush1.msra.mxu0 0.0
    %2727 = vmatprep.subr.mxu0 0.0
    %2728 = vmatpush1.msra.mxu0 0.0
    %2729 = vmatprep.subr.mxu0 0.0
    %2730 = vmatpush1.msra.mxu0 0.0
    %2731 = vmatprep.subr.mxu0 0.0
    %2732 = vmatpush1.msra.mxu0 0.0
    %2733 = vmatprep.subr.mxu0 0.0
    %2734 = vmatpush1.msra.mxu0 0.0
    %2735 = vmatprep.subr.mxu0 0.0
    %2736 = vmatpush1.msra.mxu0 0.0
    %2737 = vmatprep.subr.mxu0 0.0
    %2738 = vmatpush1.msra.mxu0 0.0
    %2739 = vmatprep.subr.mxu0 0.0
    %2740 = vmatpush1.msra.mxu0 0.0
    %2741 = vmatprep.subr.mxu0 0.0
    %2742 = vmatpush1.msra.mxu0 0.0
    %2743 = vmatprep.subr.mxu0 0.0
    %2744 = vmatpush1.msra.mxu0 0.0
    %2745 = vmatprep.mubr.f32.mxu0 %v738
    %2746 = vmatmul.mubr.f32.gmra.mrb[0].mxu0 %v731
    %v2747 = vpop.f32.mrb[0].mxu0
    %v2748 = vadd.f32 %v2677, %v2747
    %v2749 = vpop.f32.mrb[0].mxu0
    %v2750 = vadd.f32 %v2679, %v2749
    %2751 = vdwg.mxu0
    %v2752 = vpack.c.bf16 %v2748, %v2748
    %v2753 = vpack.c.bf16 %v2750, %v2750
    %v2754 = vld [vmem:[%s4 + $0x18] sm:$0xff]
    %v2755 = vld [vmem:[%s4 + $0x58] sm:$0xff]
    %v2758 = vunpack.c.l.b16 %v2754
    %v2759 = vunpack.c.h.b16 %v2754
    %v2760 = vunpack.c.l.b16 %v2755
    %v2761 = vunpack.c.h.b16 %v2755
    %v2762 = vpack.c.b16 %v2760, %v2758
    %v2763 = vpack.c.b16 %v2761, %v2759
    %2766 = vmatprep.subr.bf16.mxu0 %v2763
    %2767 = vmatpush1.bf16.xpose.msra.mxu0 %v2762
    %2768 = vmatprep.subr.bf16.mxu0 0
    %2769 = vmatpush1.bf16.xpose.msra.mxu0 0
    %2770 = vmatprep.subr.bf16.mxu0 0
    %2771 = vmatpush1.bf16.xpose.msra.mxu0 0
    %2772 = vmatprep.subr.bf16.mxu0 0
    %2773 = vmatpush1.bf16.xpose.msra.mxu0 0
    %2774 = vmatprep.subr.bf16.mxu0 0
    %2775 = vmatpush1.bf16.xpose.msra.mxu0 0
    %2776 = vmatprep.subr.bf16.mxu0 0
    %2777 = vmatpush1.bf16.xpose.msra.mxu0 0
    %2778 = vmatprep.subr.bf16.mxu0 0
    %2779 = vmatpush1.bf16.xpose.msra.mxu0 0
    %2780 = vmatprep.subr.bf16.mxu0 0
    %2781 = vmatpush1.bf16.xpose.msra.mxu0 0
    %2782 = vmatprep.subr.bf16.mxu0 0
    %2783 = vmatpush1.bf16.xpose.msra.mxu0 0
    %2784 = vmatprep.subr.bf16.mxu0 0
    %2785 = vmatpush1.bf16.xpose.msra.mxu0 0
    %2786 = vmatprep.subr.bf16.mxu0 0
    %2787 = vmatpush1.bf16.xpose.msra.mxu0 0
    %2788 = vmatprep.subr.bf16.mxu0 0
    %2789 = vmatpush1.bf16.xpose.msra.mxu0 0
    %2790 = vmatprep.subr.bf16.mxu0 0
    %2791 = vmatpush1.bf16.xpose.msra.mxu0 0
    %2792 = vmatprep.subr.bf16.mxu0 0
    %2793 = vmatpush1.bf16.xpose.msra.mxu0 0
    %2794 = vmatprep.subr.bf16.mxu0 0
    %2795 = vmatpush1.bf16.xpose.msra.mxu0 0
    %2796 = vmatprep.subr.bf16.mxu0 0
    %2797 = vmatpush1.bf16.xpose.msra.mxu0 0
    %2798 = vmatprep.mubr.bf16.mxu0 %v2753
    %2799 = vmatmul.mubr.bf16.gmra.mrb[0].mxu0 %v2752
    %v2800 = vpop.f32.mrb[0].mxu0
    %v2801 = vadd.f32 0.0, %v2800
    %v2802 = vpop.f32.mrb[0].mxu0
    %v2803 = vpop.f32.mrb[0].mxu0
    %v2804 = vpop.f32.mrb[0].mxu0
    %2805 = vdwg.mxu0
    %v2806 = vadd.f32 %v2182, %v2801
    %v2807 = vld [vmem:[#allocation2 + $0x20] sm:$0xff]
    %v2808 = vld [vmem:[#allocation2 + $0x60] sm:$0xff]
    %v2809 = vld [vmem:[#allocation2 + $0xa0] sm:$0xff]
    %v2810 = vld [vmem:[#allocation2 + $0xe0] sm:$0xff]
    %v2811 = vld [vmem:[#allocation2 + $0x120] sm:$0x33]
    %v2812 = vld [vmem:[%s3 + $0x8] sm:$0x3]
    %v2814 = vlaneseq
    %v2815 = vshrl.u32 %v2814, 7
    %v2816 = vsub.s32 0, %v2815
    %v2817 = vrot.slane %v2812, %v2816
    %v2818 = vlaneseq
    %v2819 = vshrl.u32 %v2818, 7
    %v2820 = vsub.s32 1, %v2819
    %v2821 = vrot.slane %v2812, %v2820
    %v2829 = vunpack.c.l.b16 %v2807
    %v2830 = vunpack.c.h.b16 %v2807
    %v2831 = vunpack.c.l.b16 %v2808
    %v2832 = vunpack.c.h.b16 %v2808
    %v2833 = vunpack.c.l.b16 %v2809
    %v2834 = vunpack.c.h.b16 %v2809
    %v2835 = vunpack.c.l.b16 %v2810
    %v2836 = vunpack.c.h.b16 %v2810
    %v2837 = vunpack.c.l.b16 %v2811
    %v2838 = vunpack.c.h.b16 %v2811
    %v2839 = vpack.c.b16 %v2831, %v2829
    %v2840 = vpack.c.b16 %v2832, %v2830
    %v2841 = vpack.c.b16 %v2835, %v2833
    %v2842 = vpack.c.b16 %v2836, %v2834
    %v2843 = vpack.c.b16 %v2837, %v2837
    %v2844 = vpack.c.b16 %v2838, %v2838
    %v2850 = vsel %vm330, %v2843, 0
    %v2853 = vsel %vm330, %v2844, 0
    %2855 = vmatprep.subr.bf16.mxu0 %v2840
    %2856 = vmatpush1.bf16.msra.mxu0 %v2839
    %2857 = vmatprep.subr.bf16.mxu0 %v2842
    %2858 = vmatpush1.bf16.msra.mxu0 %v2841
    %2859 = vmatprep.subr.bf16.mxu0 %v2853
    %2860 = vmatpush1.bf16.msra.mxu0 %v2850
    %2861 = vmatprep.subr.bf16.mxu0 0
    %2862 = vmatpush1.bf16.msra.mxu0 0
    %2863 = vmatprep.subr.bf16.mxu0 0
    %2864 = vmatpush1.bf16.msra.mxu0 0
    %2865 = vmatprep.subr.bf16.mxu0 0
    %2866 = vmatpush1.bf16.msra.mxu0 0
    %2867 = vmatprep.subr.bf16.mxu0 0
    %2868 = vmatpush1.bf16.msra.mxu0 0
    %2869 = vmatprep.subr.bf16.mxu0 0
    %2870 = vmatpush1.bf16.msra.mxu0 0
    %2871 = vmatprep.subr.bf16.mxu0 0
    %2872 = vmatpush1.bf16.msra.mxu0 0
    %2873 = vmatprep.subr.bf16.mxu0 0
    %2874 = vmatpush1.bf16.msra.mxu0 0
    %2875 = vmatprep.subr.bf16.mxu0 0
    %2876 = vmatpush1.bf16.msra.mxu0 0
    %2877 = vmatprep.subr.bf16.mxu0 0
    %2878 = vmatpush1.bf16.msra.mxu0 0
    %2879 = vmatprep.subr.bf16.mxu0 0
    %2880 = vmatpush1.bf16.msra.mxu0 0
    %2881 = vmatprep.subr.bf16.mxu0 0
    %2882 = vmatpush1.bf16.msra.mxu0 0
    %2883 = vmatprep.subr.bf16.mxu0 0
    %2884 = vmatpush1.bf16.msra.mxu0 0
    %2885 = vmatprep.subr.bf16.mxu0 0
    %2886 = vmatpush1.bf16.msra.mxu0 0
    %2887 = vmatprep.mubr.bf16.mxu0 0
    %2888 = vmatmul.mubr.bf16.gmra.mrb[0].mxu0 %v256
    %v2889 = vpop.f32.mrb[0].mxu0
    %v2890 = vadd.f32 %v2817, %v2889
    %v2891 = vpop.f32.mrb[0].mxu0
    %v2892 = vadd.f32 %v2821, %v2891
    %v2893 = vpop.f32.mrb[0].mxu0
    %v2894 = vadd.f32 %v2817, %v2893
    %v2895 = vpop.f32.mrb[0].mxu0
    %v2896 = vadd.f32 %v2821, %v2895
    %2897 = vmatprep.mubr.bf16.mxu0 0
    %2898 = vmatmul.mubr.bf16.gmra.mrb[0].mxu0 %v259
    %v2899 = vpop.f32.mrb[0].mxu0
    %v2900 = vadd.f32 %v2817, %v2899
    %v2901 = vpop.f32.mrb[0].mxu0
    %v2902 = vadd.f32 %v2821, %v2901
    %v2903 = vpop.f32.mrb[0].mxu0
    %v2904 = vadd.f32 %v2817, %v2903
    %v2905 = vpop.f32.mrb[0].mxu0
    %v2906 = vadd.f32 %v2821, %v2905
    %2907 = vmatprep.mubr.bf16.mxu0 0
    %2908 = vmatmul.mubr.bf16.gmra.mrb[0].mxu0 %v262
    %v2909 = vpop.f32.mrb[0].mxu0
    %v2910 = vadd.f32 %v2817, %v2909
    %v2911 = vpop.f32.mrb[0].mxu0
    %v2912 = vadd.f32 %v2821, %v2911
    %v2913 = vpop.f32.mrb[0].mxu0
    %v2914 = vadd.f32 %v2817, %v2913
    %v2915 = vpop.f32.mrb[0].mxu0
    %v2916 = vadd.f32 %v2821, %v2915
    %2917 = vmatprep.mubr.bf16.mxu0 0
    %2918 = vmatmul.mubr.bf16.gmra.mrb[0].mxu0 %v265
    %v2919 = vpop.f32.mrb[0].mxu0
    %v2920 = vadd.f32 %v2817, %v2919
    %v2921 = vpop.f32.mrb[0].mxu0
    %v2922 = vadd.f32 %v2821, %v2921
    %v2923 = vpop.f32.mrb[0].mxu0
    %v2924 = vadd.f32 %v2817, %v2923
    %v2925 = vpop.f32.mrb[0].mxu0
    %v2926 = vadd.f32 %v2821, %v2925
    %2927 = vmatprep.mubr.bf16.mxu0 0
    %2928 = vmatmul.mubr.bf16.gmra.mrb[0].mxu0 %v268
    %v2929 = vpop.f32.mrb[0].mxu0
    %v2930 = vadd.f32 %v2817, %v2929
    %v2931 = vpop.f32.mrb[0].mxu0
    %v2932 = vadd.f32 %v2821, %v2931
    %v2933 = vpop.f32.mrb[0].mxu0
    %v2934 = vadd.f32 %v2817, %v2933
    %v2935 = vpop.f32.mrb[0].mxu0
    %v2936 = vadd.f32 %v2821, %v2935
    %2937 = vmatprep.mubr.bf16.mxu0 0
    %2938 = vmatmul.mubr.bf16.gmra.mrb[0].mxu0 %v271
    %v2939 = vpop.f32.mrb[0].mxu0
    %v2940 = vadd.f32 %v2817, %v2939
    %v2941 = vpop.f32.mrb[0].mxu0
    %v2942 = vadd.f32 %v2821, %v2941
    %v2943 = vpop.f32.mrb[0].mxu0
    %v2944 = vadd.f32 %v2817, %v2943
    %v2945 = vpop.f32.mrb[0].mxu0
    %v2946 = vadd.f32 %v2821, %v2945
    %2947 = vmatprep.mubr.bf16.mxu0 0
    %2948 = vmatmul.mubr.bf16.gmra.mrb[0].mxu0 %v274
    %v2949 = vpop.f32.mrb[0].mxu0
    %v2950 = vadd.f32 %v2817, %v2949
    %v2951 = vpop.f32.mrb[0].mxu0
    %v2952 = vadd.f32 %v2821, %v2951
    %v2953 = vpop.f32.mrb[0].mxu0
    %v2954 = vadd.f32 %v2817, %v2953
    %v2955 = vpop.f32.mrb[0].mxu0
    %v2956 = vadd.f32 %v2821, %v2955
    %2957 = vmatprep.mubr.bf16.mxu0 0
    %2958 = vmatmul.mubr.bf16.gmra.mrb[0].mxu0 %v277
    %v2959 = vpop.f32.mrb[0].mxu0
    %v2960 = vadd.f32 %v2817, %v2959
    %v2961 = vpop.f32.mrb[0].mxu0
    %v2962 = vadd.f32 %v2821, %v2961
    %v2963 = vpop.f32.mrb[0].mxu0
    %v2964 = vadd.f32 %v2817, %v2963
    %v2965 = vpop.f32.mrb[0].mxu0
    %v2966 = vadd.f32 %v2821, %v2965
    %2967 = vmatprep.mubr.bf16.mxu0 0
    %2968 = vmatmul.mubr.bf16.gmra.mrb[0].mxu0 %v280
    %v2969 = vpop.f32.mrb[0].mxu0
    %v2970 = vadd.f32 %v2817, %v2969
    %v2971 = vpop.f32.mrb[0].mxu0
    %v2972 = vadd.f32 %v2821, %v2971
    %v2973 = vpop.f32.mrb[0].mxu0
    %v2974 = vadd.f32 %v2817, %v2973
    %v2975 = vpop.f32.mrb[0].mxu0
    %v2976 = vadd.f32 %v2821, %v2975
    %2977 = vmatprep.mubr.bf16.mxu0 0
    %2978 = vmatmul.mubr.bf16.gmra.mrb[0].mxu0 %v283
    %v2979 = vpop.f32.mrb[0].mxu0
    %v2980 = vadd.f32 %v2817, %v2979
    %v2981 = vpop.f32.mrb[0].mxu0
    %v2982 = vadd.f32 %v2821, %v2981
    %v2983 = vpop.f32.mrb[0].mxu0
    %v2984 = vadd.f32 %v2817, %v2983
    %v2985 = vpop.f32.mrb[0].mxu0
    %v2986 = vadd.f32 %v2821, %v2985
    %2987 = vmatprep.mubr.bf16.mxu0 0
    %2988 = vmatmul.mubr.bf16.gmra.mrb[0].mxu0 %v286
    %v2989 = vpop.f32.mrb[0].mxu0
    %v2990 = vadd.f32 %v2817, %v2989
    %v2991 = vpop.f32.mrb[0].mxu0
    %v2992 = vadd.f32 %v2821, %v2991
    %v2993 = vpop.f32.mrb[0].mxu0
    %v2994 = vadd.f32 %v2817, %v2993
    %v2995 = vpop.f32.mrb[0].mxu0
    %v2996 = vadd.f32 %v2821, %v2995
    %2997 = vmatprep.mubr.bf16.mxu0 0
    %2998 = vmatmul.mubr.bf16.gmra.mrb[0].mxu0 %v289
    %v2999 = vpop.f32.mrb[0].mxu0
    %v3000 = vadd.f32 %v2817, %v2999
    %v3001 = vpop.f32.mrb[0].mxu0
    %v3002 = vadd.f32 %v2821, %v3001
    %v3003 = vpop.f32.mrb[0].mxu0
    %v3004 = vadd.f32 %v2817, %v3003
    %v3005 = vpop.f32.mrb[0].mxu0
    %v3006 = vadd.f32 %v2821, %v3005
    %3007 = vmatprep.mubr.bf16.mxu0 0
    %3008 = vmatmul.mubr.bf16.gmra.mrb[0].mxu0 %v292
    %v3009 = vpop.f32.mrb[0].mxu0
    %v3010 = vadd.f32 %v2817, %v3009
    %v3011 = vpop.f32.mrb[0].mxu0
    %v3012 = vadd.f32 %v2821, %v3011
    %v3013 = vpop.f32.mrb[0].mxu0
    %v3014 = vadd.f32 %v2817, %v3013
    %v3015 = vpop.f32.mrb[0].mxu0
    %v3016 = vadd.f32 %v2821, %v3015
    %3017 = vmatprep.mubr.bf16.mxu0 0
    %3018 = vmatmul.mubr.bf16.gmra.mrb[0].mxu0 %v295
    %v3019 = vpop.f32.mrb[0].mxu0
    %v3020 = vadd.f32 %v2817, %v3019
    %v3021 = vpop.f32.mrb[0].mxu0
    %v3022 = vadd.f32 %v2821, %v3021
    %v3023 = vpop.f32.mrb[0].mxu0
    %v3024 = vadd.f32 %v2817, %v3023
    %v3025 = vpop.f32.mrb[0].mxu0
    %v3026 = vadd.f32 %v2821, %v3025
    %3027 = vmatprep.mubr.bf16.mxu0 0
    %3028 = vmatmul.mubr.bf16.gmra.mrb[0].mxu0 %v298
    %v3029 = vpop.f32.mrb[0].mxu0
    %v3030 = vadd.f32 %v2817, %v3029
    %v3031 = vpop.f32.mrb[0].mxu0
    %v3032 = vadd.f32 %v2821, %v3031
    %v3033 = vpop.f32.mrb[0].mxu0
    %v3034 = vadd.f32 %v2817, %v3033
    %v3035 = vpop.f32.mrb[0].mxu0
    %v3036 = vadd.f32 %v2821, %v3035
    %3037 = vmatprep.mubr.bf16.mxu0 0
    %3038 = vmatmul.mubr.bf16.gmra.mrb[0].mxu0 %v301
    %v3039 = vpop.f32.mrb[0].mxu0
    %v3040 = vadd.f32 %v2817, %v3039
    %v3041 = vpop.f32.mrb[0].mxu0
    %v3042 = vadd.f32 %v2821, %v3041
    %v3043 = vpop.f32.mrb[0].mxu0
    %v3044 = vadd.f32 %v2817, %v3043
    %v3045 = vpop.f32.mrb[0].mxu0
    %v3046 = vadd.f32 %v2821, %v3045
    %3047 = vmatprep.mubr.bf16.mxu0 0
    %3048 = vmatmul.mubr.bf16.gmra.mrb[0].mxu0 %v304
    %v3049 = vpop.f32.mrb[0].mxu0
    %v3050 = vadd.f32 %v2817, %v3049
    %v3051 = vpop.f32.mrb[0].mxu0
    %v3052 = vadd.f32 %v2821, %v3051
    %v3053 = vpop.f32.mrb[0].mxu0
    %v3054 = vadd.f32 %v2817, %v3053
    %v3055 = vpop.f32.mrb[0].mxu0
    %v3056 = vadd.f32 %v2821, %v3055
    %3057 = vmatprep.mubr.bf16.mxu0 0
    %3058 = vmatmul.mubr.bf16.gmra.mrb[0].mxu0 %v307
    %v3059 = vpop.f32.mrb[0].mxu0
    %v3060 = vadd.f32 %v2817, %v3059
    %v3061 = vpop.f32.mrb[0].mxu0
    %v3062 = vadd.f32 %v2821, %v3061
    %v3063 = vpop.f32.mrb[0].mxu0
    %v3064 = vadd.f32 %v2817, %v3063
    %v3065 = vpop.f32.mrb[0].mxu0
    %v3066 = vadd.f32 %v2821, %v3065
    %3067 = vmatprep.mubr.bf16.mxu0 0
    %3068 = vmatmul.mubr.bf16.gmra.mrb[0].mxu0 %v310
    %v3069 = vpop.f32.mrb[0].mxu0
    %v3070 = vadd.f32 %v2817, %v3069
    %v3071 = vpop.f32.mrb[0].mxu0
    %v3072 = vadd.f32 %v2821, %v3071
    %v3073 = vpop.f32.mrb[0].mxu0
    %v3074 = vadd.f32 %v2817, %v3073
    %v3075 = vpop.f32.mrb[0].mxu0
    %v3076 = vadd.f32 %v2821, %v3075
    %3077 = vmatprep.mubr.bf16.mxu0 0
    %3078 = vmatmul.mubr.bf16.gmra.mrb[0].mxu0 %v313
    %v3079 = vpop.f32.mrb[0].mxu0
    %v3080 = vadd.f32 %v2817, %v3079
    %v3081 = vpop.f32.mrb[0].mxu0
    %v3082 = vadd.f32 %v2821, %v3081
    %v3083 = vpop.f32.mrb[0].mxu0
    %v3084 = vadd.f32 %v2817, %v3083
    %v3085 = vpop.f32.mrb[0].mxu0
    %v3086 = vadd.f32 %v2821, %v3085
    %3087 = vmatprep.mubr.bf16.mxu0 0
    %3088 = vmatmul.mubr.bf16.gmra.mrb[0].mxu0 %v316
    %v3089 = vpop.f32.mrb[0].mxu0
    %v3090 = vadd.f32 %v2817, %v3089
    %v3091 = vpop.f32.mrb[0].mxu0
    %v3092 = vadd.f32 %v2821, %v3091
    %v3093 = vpop.f32.mrb[0].mxu0
    %v3094 = vadd.f32 %v2817, %v3093
    %v3095 = vpop.f32.mrb[0].mxu0
    %v3096 = vadd.f32 %v2821, %v3095
    %3097 = vmatprep.mubr.bf16.mxu0 0
    %3098 = vmatmul.mubr.bf16.gmra.mrb[0].mxu0 %v319
    %v3099 = vpop.f32.mrb[0].mxu0
    %v3100 = vadd.f32 %v2817, %v3099
    %v3101 = vpop.f32.mrb[0].mxu0
    %v3102 = vadd.f32 %v2821, %v3101
    %v3103 = vpop.f32.mrb[0].mxu0
    %v3104 = vadd.f32 %v2817, %v3103
    %v3105 = vpop.f32.mrb[0].mxu0
    %v3106 = vadd.f32 %v2821, %v3105
    %3107 = vmatprep.mubr.bf16.mxu0 0
    %3108 = vmatmul.mubr.bf16.gmra.mrb[0].mxu0 %v322
    %v3109 = vpop.f32.mrb[0].mxu0
    %v3110 = vadd.f32 %v2817, %v3109
    %v3111 = vpop.f32.mrb[0].mxu0
    %v3112 = vadd.f32 %v2821, %v3111
    %v3113 = vpop.f32.mrb[0].mxu0
    %v3114 = vadd.f32 %v2817, %v3113
    %v3115 = vpop.f32.mrb[0].mxu0
    %v3116 = vadd.f32 %v2821, %v3115
    %3117 = vmatprep.mubr.bf16.mxu0 0
    %3118 = vmatmul.mubr.bf16.gmra.mrb[0].mxu0 %v325
    %v3119 = vpop.f32.mrb[0].mxu0
    %v3120 = vadd.f32 %v2817, %v3119
    %v3121 = vpop.f32.mrb[0].mxu0
    %v3122 = vadd.f32 %v2821, %v3121
    %v3123 = vpop.f32.mrb[0].mxu0
    %v3124 = vadd.f32 %v2817, %v3123
    %v3125 = vpop.f32.mrb[0].mxu0
    %v3126 = vadd.f32 %v2821, %v3125
    %3127 = vmatprep.mubr.bf16.mxu0 0
    %3128 = vmatmul.mubr.bf16.gmra.mrb[0].mxu0 %v328
    %v3129 = vpop.f32.mrb[0].mxu0
    %v3130 = vadd.f32 %v2817, %v3129
    %v3131 = vpop.f32.mrb[0].mxu0
    %v3132 = vadd.f32 %v2821, %v3131
    %v3133 = vpop.f32.mrb[0].mxu0
    %v3134 = vpop.f32.mrb[0].mxu0
    %3135 = vdwg.mxu0
    %v3136 = vmax.f32 %v2890, 0.0
    %v3137 = vmax.f32 %v2892, 0.0
    %v3138 = vmax.f32 %v2894, 0.0
    %v3139 = vmax.f32 %v2896, 0.0
    %v3140 = vmax.f32 %v2900, 0.0
    %v3141 = vmax.f32 %v2902, 0.0
    %v3142 = vmax.f32 %v2904, 0.0
    %v3143 = vmax.f32 %v2906, 0.0
    %v3144 = vmax.f32 %v2910, 0.0
    %v3145 = vmax.f32 %v2912, 0.0
    %v3146 = vmax.f32 %v2914, 0.0
    %v3147 = vmax.f32 %v2916, 0.0
    %v3148 = vmax.f32 %v2920, 0.0
    %v3149 = vmax.f32 %v2922, 0.0
    %v3150 = vmax.f32 %v2924, 0.0
    %v3151 = vmax.f32 %v2926, 0.0
    %v3152 = vmax.f32 %v2930, 0.0
    %v3153 = vmax.f32 %v2932, 0.0
    %v3154 = vmax.f32 %v2934, 0.0
    %v3155 = vmax.f32 %v2936, 0.0
    %v3156 = vmax.f32 %v2940, 0.0
    %v3157 = vmax.f32 %v2942, 0.0
    %v3158 = vmax.f32 %v2944, 0.0
    %v3159 = vmax.f32 %v2946, 0.0
    %v3160 = vmax.f32 %v2950, 0.0
    %v3161 = vmax.f32 %v2952, 0.0
    %v3162 = vmax.f32 %v2954, 0.0
    %v3163 = vmax.f32 %v2956, 0.0
    %v3164 = vmax.f32 %v2960, 0.0
    %v3165 = vmax.f32 %v2962, 0.0
    %v3166 = vmax.f32 %v2964, 0.0
    %v3167 = vmax.f32 %v2966, 0.0
    %v3168 = vmax.f32 %v2970, 0.0
    %v3169 = vmax.f32 %v2972, 0.0
    %v3170 = vmax.f32 %v2974, 0.0
    %v3171 = vmax.f32 %v2976, 0.0
    %v3172 = vmax.f32 %v2980, 0.0
    %v3173 = vmax.f32 %v2982, 0.0
    %v3174 = vmax.f32 %v2984, 0.0
    %v3175 = vmax.f32 %v2986, 0.0
    %v3176 = vmax.f32 %v2990, 0.0
    %v3177 = vmax.f32 %v2992, 0.0
    %v3178 = vmax.f32 %v2994, 0.0
    %v3179 = vmax.f32 %v2996, 0.0
    %v3180 = vmax.f32 %v3000, 0.0
    %v3181 = vmax.f32 %v3002, 0.0
    %v3182 = vmax.f32 %v3004, 0.0
    %v3183 = vmax.f32 %v3006, 0.0
    %v3184 = vmax.f32 %v3010, 0.0
    %v3185 = vmax.f32 %v3012, 0.0
    %v3186 = vmax.f32 %v3014, 0.0
    %v3187 = vmax.f32 %v3016, 0.0
    %v3188 = vmax.f32 %v3020, 0.0
    %v3189 = vmax.f32 %v3022, 0.0
    %v3190 = vmax.f32 %v3024, 0.0
    %v3191 = vmax.f32 %v3026, 0.0
    %v3192 = vmax.f32 %v3030, 0.0
    %v3193 = vmax.f32 %v3032, 0.0
    %v3194 = vmax.f32 %v3034, 0.0
    %v3195 = vmax.f32 %v3036, 0.0
    %v3196 = vmax.f32 %v3040, 0.0
    %v3197 = vmax.f32 %v3042, 0.0
    %v3198 = vmax.f32 %v3044, 0.0
    %v3199 = vmax.f32 %v3046, 0.0
    %v3200 = vmax.f32 %v3050, 0.0
    %v3201 = vmax.f32 %v3052, 0.0
    %v3202 = vmax.f32 %v3054, 0.0
    %v3203 = vmax.f32 %v3056, 0.0
    %v3204 = vmax.f32 %v3060, 0.0
    %v3205 = vmax.f32 %v3062, 0.0
    %v3206 = vmax.f32 %v3064, 0.0
    %v3207 = vmax.f32 %v3066, 0.0
    %v3208 = vmax.f32 %v3070, 0.0
    %v3209 = vmax.f32 %v3072, 0.0
    %v3210 = vmax.f32 %v3074, 0.0
    %v3211 = vmax.f32 %v3076, 0.0
    %v3212 = vmax.f32 %v3080, 0.0
    %v3213 = vmax.f32 %v3082, 0.0
    %v3214 = vmax.f32 %v3084, 0.0
    %v3215 = vmax.f32 %v3086, 0.0
    %v3216 = vmax.f32 %v3090, 0.0
    %v3217 = vmax.f32 %v3092, 0.0
    %v3218 = vmax.f32 %v3094, 0.0
    %v3219 = vmax.f32 %v3096, 0.0
    %v3220 = vmax.f32 %v3100, 0.0
    %v3221 = vmax.f32 %v3102, 0.0
    %v3222 = vmax.f32 %v3104, 0.0
    %v3223 = vmax.f32 %v3106, 0.0
    %v3224 = vmax.f32 %v3110, 0.0
    %v3225 = vmax.f32 %v3112, 0.0
    %v3226 = vmax.f32 %v3114, 0.0
    %v3227 = vmax.f32 %v3116, 0.0
    %v3228 = vmax.f32 %v3120, 0.0
    %v3229 = vmax.f32 %v3122, 0.0
    %v3230 = vmax.f32 %v3124, 0.0
    %v3231 = vmax.f32 %v3126, 0.0
    %v3232 = vmax.f32 %v3130, 0.0
    %v3233 = vmax.f32 %v3132, 0.0
    %3234 = vmatprep.subr.mxu0 %v3137
    %3235 = vmatpush1.msra.mxu0 %v3136
    %3236 = vmatprep.subr.mxu0 %v3139
    %3237 = vmatpush1.msra.mxu0 %v3138
    %3238 = vmatprep.subr.mxu0 %v3141
    %3239 = vmatpush1.msra.mxu0 %v3140
    %3240 = vmatprep.subr.mxu0 %v3143
    %3241 = vmatpush1.msra.mxu0 %v3142
    %3242 = vmatprep.subr.mxu0 %v3145
    %3243 = vmatpush1.msra.mxu0 %v3144
    %3244 = vmatprep.subr.mxu0 %v3147
    %3245 = vmatpush1.msra.mxu0 %v3146
    %3246 = vmatprep.subr.mxu0 %v3149
    %3247 = vmatpush1.msra.mxu0 %v3148
    %3248 = vmatprep.subr.mxu0 %v3151
    %3249 = vmatpush1.msra.mxu0 %v3150
    %3250 = vmatprep.subr.mxu0 %v3153
    %3251 = vmatpush1.msra.mxu0 %v3152
    %3252 = vmatprep.subr.mxu0 %v3155
    %3253 = vmatpush1.msra.mxu0 %v3154
    %3254 = vmatprep.subr.mxu0 %v3157
    %3255 = vmatpush1.msra.mxu0 %v3156
    %3256 = vmatprep.subr.mxu0 %v3159
    %3257 = vmatpush1.msra.mxu0 %v3158
    %3258 = vmatprep.subr.mxu0 %v3161
    %3259 = vmatpush1.msra.mxu0 %v3160
    %3260 = vmatprep.subr.mxu0 %v3163
    %3261 = vmatpush1.msra.mxu0 %v3162
    %3262 = vmatprep.subr.mxu0 %v3165
    %3263 = vmatpush1.msra.mxu0 %v3164
    %3264 = vmatprep.subr.mxu0 %v3167
    %3265 = vmatpush1.msra.mxu0 %v3166
    %3266 = vmatprep.subr.mxu0 %v3169
    %3267 = vmatpush1.msra.mxu0 %v3168
    %3268 = vmatprep.subr.mxu0 %v3171
    %3269 = vmatpush1.msra.mxu0 %v3170
    %3270 = vmatprep.subr.mxu0 %v3173
    %3271 = vmatpush1.msra.mxu0 %v3172
    %3272 = vmatprep.subr.mxu0 %v3175
    %3273 = vmatpush1.msra.mxu0 %v3174
    %3274 = vmatprep.subr.mxu0 %v3177
    %3275 = vmatpush1.msra.mxu0 %v3176
    %3276 = vmatprep.subr.mxu0 %v3179
    %3277 = vmatpush1.msra.mxu0 %v3178
    %3278 = vmatprep.subr.mxu0 %v3181
    %3279 = vmatpush1.msra.mxu0 %v3180
    %3280 = vmatprep.subr.mxu0 %v3183
    %3281 = vmatpush1.msra.mxu0 %v3182
    %3282 = vmatprep.subr.mxu0 %v3185
    %3283 = vmatpush1.msra.mxu0 %v3184
    %3284 = vmatprep.subr.mxu0 %v3187
    %3285 = vmatpush1.msra.mxu0 %v3186
    %3286 = vmatprep.subr.mxu0 %v3189
    %3287 = vmatpush1.msra.mxu0 %v3188
    %3288 = vmatprep.subr.mxu0 %v3191
    %3289 = vmatpush1.msra.mxu0 %v3190
    %3290 = vmatprep.subr.mxu0 %v3193
    %3291 = vmatpush1.msra.mxu0 %v3192
    %3292 = vmatprep.subr.mxu0 %v3195
    %3293 = vmatpush1.msra.mxu0 %v3194
    %3294 = vmatprep.subr.mxu0 %v3197
    %3295 = vmatpush1.msra.mxu0 %v3196
    %3296 = vmatprep.subr.mxu0 %v3199
    %3297 = vmatpush1.msra.mxu0 %v3198
    %3298 = vmatprep.mubr.f32.mxu0 %v732
    %3299 = vmatmul.mubr.f32.gmra.mrb[0].mxu0 %v724
    %v3300 = vpop.f32.mrb[0].mxu0
    %v3301 = vadd.f32 0.0, %v3300
    %v3302 = vpop.f32.mrb[0].mxu0
    %v3303 = vadd.f32 0.0, %v3302
    %3304 = vdwg.mxu0
    %3305 = vmatprep.subr.mxu0 %v3201
    %3306 = vmatpush1.msra.mxu0 %v3200
    %3307 = vmatprep.subr.mxu0 %v3203
    %3308 = vmatpush1.msra.mxu0 %v3202
    %3309 = vmatprep.subr.mxu0 %v3205
    %3310 = vmatpush1.msra.mxu0 %v3204
    %3311 = vmatprep.subr.mxu0 %v3207
    %3312 = vmatpush1.msra.mxu0 %v3206
    %3313 = vmatprep.subr.mxu0 %v3209
    %3314 = vmatpush1.msra.mxu0 %v3208
    %3315 = vmatprep.subr.mxu0 %v3211
    %3316 = vmatpush1.msra.mxu0 %v3210
    %3317 = vmatprep.subr.mxu0 %v3213
    %3318 = vmatpush1.msra.mxu0 %v3212
    %3319 = vmatprep.subr.mxu0 %v3215
    %3320 = vmatpush1.msra.mxu0 %v3214
    %3321 = vmatprep.subr.mxu0 %v3217
    %3322 = vmatpush1.msra.mxu0 %v3216
    %3323 = vmatprep.subr.mxu0 %v3219
    %3324 = vmatpush1.msra.mxu0 %v3218
    %3325 = vmatprep.subr.mxu0 %v3221
    %3326 = vmatpush1.msra.mxu0 %v3220
    %3327 = vmatprep.subr.mxu0 %v3223
    %3328 = vmatpush1.msra.mxu0 %v3222
    %3329 = vmatprep.subr.mxu0 %v3225
    %3330 = vmatpush1.msra.mxu0 %v3224
    %3331 = vmatprep.subr.mxu0 %v3227
    %3332 = vmatpush1.msra.mxu0 %v3226
    %3333 = vmatprep.subr.mxu0 %v3229
    %3334 = vmatpush1.msra.mxu0 %v3228
    %3335 = vmatprep.subr.mxu0 %v3231
    %3336 = vmatpush1.msra.mxu0 %v3230
    %3337 = vmatprep.subr.mxu0 %v3233
    %3338 = vmatpush1.msra.mxu0 %v3232
    %3339 = vmatprep.subr.mxu0 0.0
    %3340 = vmatpush1.msra.mxu0 0.0
    %3341 = vmatprep.subr.mxu0 0.0
    %3342 = vmatpush1.msra.mxu0 0.0
    %3343 = vmatprep.subr.mxu0 0.0
    %3344 = vmatpush1.msra.mxu0 0.0
    %3345 = vmatprep.subr.mxu0 0.0
    %3346 = vmatpush1.msra.mxu0 0.0
    %3347 = vmatprep.subr.mxu0 0.0
    %3348 = vmatpush1.msra.mxu0 0.0
    %3349 = vmatprep.subr.mxu0 0.0
    %3350 = vmatpush1.msra.mxu0 0.0
    %3351 = vmatprep.subr.mxu0 0.0
    %3352 = vmatpush1.msra.mxu0 0.0
    %3353 = vmatprep.subr.mxu0 0.0
    %3354 = vmatpush1.msra.mxu0 0.0
    %3355 = vmatprep.subr.mxu0 0.0
    %3356 = vmatpush1.msra.mxu0 0.0
    %3357 = vmatprep.subr.mxu0 0.0
    %3358 = vmatpush1.msra.mxu0 0.0
    %3359 = vmatprep.subr.mxu0 0.0
    %3360 = vmatpush1.msra.mxu0 0.0
    %3361 = vmatprep.subr.mxu0 0.0
    %3362 = vmatpush1.msra.mxu0 0.0
    %3363 = vmatprep.subr.mxu0 0.0
    %3364 = vmatpush1.msra.mxu0 0.0
    %3365 = vmatprep.subr.mxu0 0.0
    %3366 = vmatpush1.msra.mxu0 0.0
    %3367 = vmatprep.subr.mxu0 0.0
    %3368 = vmatpush1.msra.mxu0 0.0
    %3369 = vmatprep.mubr.f32.mxu0 %v738
    %3370 = vmatmul.mubr.f32.gmra.mrb[0].mxu0 %v731
    %v3371 = vpop.f32.mrb[0].mxu0
    %v3372 = vadd.f32 %v3301, %v3371
    %v3373 = vpop.f32.mrb[0].mxu0
    %v3374 = vadd.f32 %v3303, %v3373
    %3375 = vdwg.mxu0
    %v3376 = vpack.c.bf16 %v3372, %v3372
    %v3377 = vpack.c.bf16 %v3374, %v3374
    %v3378 = vld [vmem:[%s4 + $0x20] sm:$0xff]
    %v3379 = vld [vmem:[%s4 + $0x60] sm:$0xff]
    %v3382 = vunpack.c.l.b16 %v3378
    %v3383 = vunpack.c.h.b16 %v3378
    %v3384 = vunpack.c.l.b16 %v3379
    %v3385 = vunpack.c.h.b16 %v3379
    %v3386 = vpack.c.b16 %v3384, %v3382
    %v3387 = vpack.c.b16 %v3385, %v3383
    %3390 = vmatprep.subr.bf16.mxu0 %v3387
    %3391 = vmatpush1.bf16.xpose.msra.mxu0 %v3386
    %3392 = vmatprep.subr.bf16.mxu0 0
    %3393 = vmatpush1.bf16.xpose.msra.mxu0 0
    %3394 = vmatprep.subr.bf16.mxu0 0
    %3395 = vmatpush1.bf16.xpose.msra.mxu0 0
    %3396 = vmatprep.subr.bf16.mxu0 0
    %3397 = vmatpush1.bf16.xpose.msra.mxu0 0
    %3398 = vmatprep.subr.bf16.mxu0 0
    %3399 = vmatpush1.bf16.xpose.msra.mxu0 0
    %3400 = vmatprep.subr.bf16.mxu0 0
    %3401 = vmatpush1.bf16.xpose.msra.mxu0 0
    %3402 = vmatprep.subr.bf16.mxu0 0
    %3403 = vmatpush1.bf16.xpose.msra.mxu0 0
    %3404 = vmatprep.subr.bf16.mxu0 0
    %3405 = vmatpush1.bf16.xpose.msra.mxu0 0
    %3406 = vmatprep.subr.bf16.mxu0 0
    %3407 = vmatpush1.bf16.xpose.msra.mxu0 0
    %3408 = vmatprep.subr.bf16.mxu0 0
    %3409 = vmatpush1.bf16.xpose.msra.mxu0 0
    %3410 = vmatprep.subr.bf16.mxu0 0
    %3411 = vmatpush1.bf16.xpose.msra.mxu0 0
    %3412 = vmatprep.subr.bf16.mxu0 0
    %3413 = vmatpush1.bf16.xpose.msra.mxu0 0
    %3414 = vmatprep.subr.bf16.mxu0 0
    %3415 = vmatpush1.bf16.xpose.msra.mxu0 0
    %3416 = vmatprep.subr.bf16.mxu0 0
    %3417 = vmatpush1.bf16.xpose.msra.mxu0 0
    %3418 = vmatprep.subr.bf16.mxu0 0
    %3419 = vmatpush1.bf16.xpose.msra.mxu0 0
    %3420 = vmatprep.subr.bf16.mxu0 0
    %3421 = vmatpush1.bf16.xpose.msra.mxu0 0
    %3422 = vmatprep.mubr.bf16.mxu0 %v3377
    %3423 = vmatmul.mubr.bf16.gmra.mrb[0].mxu0 %v3376
    %v3424 = vpop.f32.mrb[0].mxu0
    %v3425 = vadd.f32 0.0, %v3424
    %v3426 = vpop.f32.mrb[0].mxu0
    %v3427 = vpop.f32.mrb[0].mxu0
    %v3428 = vpop.f32.mrb[0].mxu0
    %3429 = vdwg.mxu0
    %v3430 = vadd.f32 %v2806, %v3425
    %v3431 = vld [vmem:[#allocation2 + $0x28] sm:$0xff]
    %v3432 = vld [vmem:[#allocation2 + $0x68] sm:$0xff]
    %v3433 = vld [vmem:[#allocation2 + $0xa8] sm:$0xff]
    %v3434 = vld [vmem:[#allocation2 + $0xe8] sm:$0xff]
    %v3435 = vld [vmem:[#allocation2 + $0x128] sm:$0x33]
    %v3436 = vld [vmem:[%s3 + $0xa] sm:$0x3]
    %v3438 = vlaneseq
    %v3439 = vshrl.u32 %v3438, 7
    %v3440 = vsub.s32 0, %v3439
    %v3441 = vrot.slane %v3436, %v3440
    %v3442 = vlaneseq
    %v3443 = vshrl.u32 %v3442, 7
    %v3444 = vsub.s32 1, %v3443
    %v3445 = vrot.slane %v3436, %v3444
    %v3453 = vunpack.c.l.b16 %v3431
    %v3454 = vunpack.c.h.b16 %v3431
    %v3455 = vunpack.c.l.b16 %v3432
    %v3456 = vunpack.c.h.b16 %v3432
    %v3457 = vunpack.c.l.b16 %v3433
    %v3458 = vunpack.c.h.b16 %v3433
    %v3459 = vunpack.c.l.b16 %v3434
    %v3460 = vunpack.c.h.b16 %v3434
    %v3461 = vunpack.c.l.b16 %v3435
    %v3462 = vunpack.c.h.b16 %v3435
    %v3463 = vpack.c.b16 %v3455, %v3453
    %v3464 = vpack.c.b16 %v3456, %v3454
    %v3465 = vpack.c.b16 %v3459, %v3457
    %v3466 = vpack.c.b16 %v3460, %v3458
    %v3467 = vpack.c.b16 %v3461, %v3461
    %v3468 = vpack.c.b16 %v3462, %v3462
    %v3474 = vsel %vm330, %v3467, 0
    %v3477 = vsel %vm330, %v3468, 0
    %3479 = vmatprep.subr.bf16.mxu0 %v3464
    %3480 = vmatpush1.bf16.msra.mxu0 %v3463
    %3481 = vmatprep.subr.bf16.mxu0 %v3466
    %3482 = vmatpush1.bf16.msra.mxu0 %v3465
    %3483 = vmatprep.subr.bf16.mxu0 %v3477
    %3484 = vmatpush1.bf16.msra.mxu0 %v3474
    %3485 = vmatprep.subr.bf16.mxu0 0
    %3486 = vmatpush1.bf16.msra.mxu0 0
    %3487 = vmatprep.subr.bf16.mxu0 0
    %3488 = vmatpush1.bf16.msra.mxu0 0
    %3489 = vmatprep.subr.bf16.mxu0 0
    %3490 = vmatpush1.bf16.msra.mxu0 0
    %3491 = vmatprep.subr.bf16.mxu0 0
    %3492 = vmatpush1.bf16.msra.mxu0 0
    %3493 = vmatprep.subr.bf16.mxu0 0
    %3494 = vmatpush1.bf16.msra.mxu0 0
    %3495 = vmatprep.subr.bf16.mxu0 0
    %3496 = vmatpush1.bf16.msra.mxu0 0
    %3497 = vmatprep.subr.bf16.mxu0 0
    %3498 = vmatpush1.bf16.msra.mxu0 0
    %3499 = vmatprep.subr.bf16.mxu0 0
    %3500 = vmatpush1.bf16.msra.mxu0 0
    %3501 = vmatprep.subr.bf16.mxu0 0
    %3502 = vmatpush1.bf16.msra.mxu0 0
    %3503 = vmatprep.subr.bf16.mxu0 0
    %3504 = vmatpush1.bf16.msra.mxu0 0
    %3505 = vmatprep.subr.bf16.mxu0 0
    %3506 = vmatpush1.bf16.msra.mxu0 0
    %3507 = vmatprep.subr.bf16.mxu0 0
    %3508 = vmatpush1.bf16.msra.mxu0 0
    %3509 = vmatprep.subr.bf16.mxu0 0
    %3510 = vmatpush1.bf16.msra.mxu0 0
    %3511 = vmatprep.mubr.bf16.mxu0 0
    %3512 = vmatmul.mubr.bf16.gmra.mrb[0].mxu0 %v256
    %v3513 = vpop.f32.mrb[0].mxu0
    %v3514 = vadd.f32 %v3441, %v3513
    %v3515 = vpop.f32.mrb[0].mxu0
    %v3516 = vadd.f32 %v3445, %v3515
    %v3517 = vpop.f32.mrb[0].mxu0
    %v3518 = vadd.f32 %v3441, %v3517
    %v3519 = vpop.f32.mrb[0].mxu0
    %v3520 = vadd.f32 %v3445, %v3519
    %3521 = vmatprep.mubr.bf16.mxu0 0
    %3522 = vmatmul.mubr.bf16.gmra.mrb[0].mxu0 %v259
    %v3523 = vpop.f32.mrb[0].mxu0
    %v3524 = vadd.f32 %v3441, %v3523
    %v3525 = vpop.f32.mrb[0].mxu0
    %v3526 = vadd.f32 %v3445, %v3525
    %v3527 = vpop.f32.mrb[0].mxu0
    %v3528 = vadd.f32 %v3441, %v3527
    %v3529 = vpop.f32.mrb[0].mxu0
    %v3530 = vadd.f32 %v3445, %v3529
    %3531 = vmatprep.mubr.bf16.mxu0 0
    %3532 = vmatmul.mubr.bf16.gmra.mrb[0].mxu0 %v262
    %v3533 = vpop.f32.mrb[0].mxu0
    %v3534 = vadd.f32 %v3441, %v3533
    %v3535 = vpop.f32.mrb[0].mxu0
    %v3536 = vadd.f32 %v3445, %v3535
    %v3537 = vpop.f32.mrb[0].mxu0
    %v3538 = vadd.f32 %v3441, %v3537
    %v3539 = vpop.f32.mrb[0].mxu0
    %v3540 = vadd.f32 %v3445, %v3539
    %3541 = vmatprep.mubr.bf16.mxu0 0
    %3542 = vmatmul.mubr.bf16.gmra.mrb[0].mxu0 %v265
    %v3543 = vpop.f32.mrb[0].mxu0
    %v3544 = vadd.f32 %v3441, %v3543
    %v3545 = vpop.f32.mrb[0].mxu0
    %v3546 = vadd.f32 %v3445, %v3545
    %v3547 = vpop.f32.mrb[0].mxu0
    %v3548 = vadd.f32 %v3441, %v3547
    %v3549 = vpop.f32.mrb[0].mxu0
    %v3550 = vadd.f32 %v3445, %v3549
    %3551 = vmatprep.mubr.bf16.mxu0 0
    %3552 = vmatmul.mubr.bf16.gmra.mrb[0].mxu0 %v268
    %v3553 = vpop.f32.mrb[0].mxu0
    %v3554 = vadd.f32 %v3441, %v3553
    %v3555 = vpop.f32.mrb[0].mxu0
    %v3556 = vadd.f32 %v3445, %v3555
    %v3557 = vpop.f32.mrb[0].mxu0
    %v3558 = vadd.f32 %v3441, %v3557
    %v3559 = vpop.f32.mrb[0].mxu0
    %v3560 = vadd.f32 %v3445, %v3559
    %3561 = vmatprep.mubr.bf16.mxu0 0
    %3562 = vmatmul.mubr.bf16.gmra.mrb[0].mxu0 %v271
    %v3563 = vpop.f32.mrb[0].mxu0
    %v3564 = vadd.f32 %v3441, %v3563
    %v3565 = vpop.f32.mrb[0].mxu0
    %v3566 = vadd.f32 %v3445, %v3565
    %v3567 = vpop.f32.mrb[0].mxu0
    %v3568 = vadd.f32 %v3441, %v3567
    %v3569 = vpop.f32.mrb[0].mxu0
    %v3570 = vadd.f32 %v3445, %v3569
    %3571 = vmatprep.mubr.bf16.mxu0 0
    %3572 = vmatmul.mubr.bf16.gmra.mrb[0].mxu0 %v274
    %v3573 = vpop.f32.mrb[0].mxu0
    %v3574 = vadd.f32 %v3441, %v3573
    %v3575 = vpop.f32.mrb[0].mxu0
    %v3576 = vadd.f32 %v3445, %v3575
    %v3577 = vpop.f32.mrb[0].mxu0
    %v3578 = vadd.f32 %v3441, %v3577
    %v3579 = vpop.f32.mrb[0].mxu0
    %v3580 = vadd.f32 %v3445, %v3579
    %3581 = vmatprep.mubr.bf16.mxu0 0
    %3582 = vmatmul.mubr.bf16.gmra.mrb[0].mxu0 %v277
    %v3583 = vpop.f32.mrb[0].mxu0
    %v3584 = vadd.f32 %v3441, %v3583
    %v3585 = vpop.f32.mrb[0].mxu0
    %v3586 = vadd.f32 %v3445, %v3585
    %v3587 = vpop.f32.mrb[0].mxu0
    %v3588 = vadd.f32 %v3441, %v3587
    %v3589 = vpop.f32.mrb[0].mxu0
    %v3590 = vadd.f32 %v3445, %v3589
    %3591 = vmatprep.mubr.bf16.mxu0 0
    %3592 = vmatmul.mubr.bf16.gmra.mrb[0].mxu0 %v280
    %v3593 = vpop.f32.mrb[0].mxu0
    %v3594 = vadd.f32 %v3441, %v3593
    %v3595 = vpop.f32.mrb[0].mxu0
    %v3596 = vadd.f32 %v3445, %v3595
    %v3597 = vpop.f32.mrb[0].mxu0
    %v3598 = vadd.f32 %v3441, %v3597
    %v3599 = vpop.f32.mrb[0].mxu0
    %v3600 = vadd.f32 %v3445, %v3599
    %3601 = vmatprep.mubr.bf16.mxu0 0
    %3602 = vmatmul.mubr.bf16.gmra.mrb[0].mxu0 %v283
    %v3603 = vpop.f32.mrb[0].mxu0
    %v3604 = vadd.f32 %v3441, %v3603
    %v3605 = vpop.f32.mrb[0].mxu0
    %v3606 = vadd.f32 %v3445, %v3605
    %v3607 = vpop.f32.mrb[0].mxu0
    %v3608 = vadd.f32 %v3441, %v3607
    %v3609 = vpop.f32.mrb[0].mxu0
    %v3610 = vadd.f32 %v3445, %v3609
    %3611 = vmatprep.mubr.bf16.mxu0 0
    %3612 = vmatmul.mubr.bf16.gmra.mrb[0].mxu0 %v286
    %v3613 = vpop.f32.mrb[0].mxu0
    %v3614 = vadd.f32 %v3441, %v3613
    %v3615 = vpop.f32.mrb[0].mxu0
    %v3616 = vadd.f32 %v3445, %v3615
    %v3617 = vpop.f32.mrb[0].mxu0
    %v3618 = vadd.f32 %v3441, %v3617
    %v3619 = vpop.f32.mrb[0].mxu0
    %v3620 = vadd.f32 %v3445, %v3619
    %3621 = vmatprep.mubr.bf16.mxu0 0
    %3622 = vmatmul.mubr.bf16.gmra.mrb[0].mxu0 %v289
    %v3623 = vpop.f32.mrb[0].mxu0
    %v3624 = vadd.f32 %v3441, %v3623
    %v3625 = vpop.f32.mrb[0].mxu0
    %v3626 = vadd.f32 %v3445, %v3625
    %v3627 = vpop.f32.mrb[0].mxu0
    %v3628 = vadd.f32 %v3441, %v3627
    %v3629 = vpop.f32.mrb[0].mxu0
    %v3630 = vadd.f32 %v3445, %v3629
    %3631 = vmatprep.mubr.bf16.mxu0 0
    %3632 = vmatmul.mubr.bf16.gmra.mrb[0].mxu0 %v292
    %v3633 = vpop.f32.mrb[0].mxu0
    %v3634 = vadd.f32 %v3441, %v3633
    %v3635 = vpop.f32.mrb[0].mxu0
    %v3636 = vadd.f32 %v3445, %v3635
    %v3637 = vpop.f32.mrb[0].mxu0
    %v3638 = vadd.f32 %v3441, %v3637
    %v3639 = vpop.f32.mrb[0].mxu0
    %v3640 = vadd.f32 %v3445, %v3639
    %3641 = vmatprep.mubr.bf16.mxu0 0
    %3642 = vmatmul.mubr.bf16.gmra.mrb[0].mxu0 %v295
    %v3643 = vpop.f32.mrb[0].mxu0
    %v3644 = vadd.f32 %v3441, %v3643
    %v3645 = vpop.f32.mrb[0].mxu0
    %v3646 = vadd.f32 %v3445, %v3645
    %v3647 = vpop.f32.mrb[0].mxu0
    %v3648 = vadd.f32 %v3441, %v3647
    %v3649 = vpop.f32.mrb[0].mxu0
    %v3650 = vadd.f32 %v3445, %v3649
    %3651 = vmatprep.mubr.bf16.mxu0 0
    %3652 = vmatmul.mubr.bf16.gmra.mrb[0].mxu0 %v298
    %v3653 = vpop.f32.mrb[0].mxu0
    %v3654 = vadd.f32 %v3441, %v3653
    %v3655 = vpop.f32.mrb[0].mxu0
    %v3656 = vadd.f32 %v3445, %v3655
    %v3657 = vpop.f32.mrb[0].mxu0
    %v3658 = vadd.f32 %v3441, %v3657
    %v3659 = vpop.f32.mrb[0].mxu0
    %v3660 = vadd.f32 %v3445, %v3659
    %3661 = vmatprep.mubr.bf16.mxu0 0
    %3662 = vmatmul.mubr.bf16.gmra.mrb[0].mxu0 %v301
    %v3663 = vpop.f32.mrb[0].mxu0
    %v3664 = vadd.f32 %v3441, %v3663
    %v3665 = vpop.f32.mrb[0].mxu0
    %v3666 = vadd.f32 %v3445, %v3665
    %v3667 = vpop.f32.mrb[0].mxu0
    %v3668 = vadd.f32 %v3441, %v3667
    %v3669 = vpop.f32.mrb[0].mxu0
    %v3670 = vadd.f32 %v3445, %v3669
    %3671 = vmatprep.mubr.bf16.mxu0 0
    %3672 = vmatmul.mubr.bf16.gmra.mrb[0].mxu0 %v304
    %v3673 = vpop.f32.mrb[0].mxu0
    %v3674 = vadd.f32 %v3441, %v3673
    %v3675 = vpop.f32.mrb[0].mxu0
    %v3676 = vadd.f32 %v3445, %v3675
    %v3677 = vpop.f32.mrb[0].mxu0
    %v3678 = vadd.f32 %v3441, %v3677
    %v3679 = vpop.f32.mrb[0].mxu0
    %v3680 = vadd.f32 %v3445, %v3679
    %3681 = vmatprep.mubr.bf16.mxu0 0
    %3682 = vmatmul.mubr.bf16.gmra.mrb[0].mxu0 %v307
    %v3683 = vpop.f32.mrb[0].mxu0
    %v3684 = vadd.f32 %v3441, %v3683
    %v3685 = vpop.f32.mrb[0].mxu0
    %v3686 = vadd.f32 %v3445, %v3685
    %v3687 = vpop.f32.mrb[0].mxu0
    %v3688 = vadd.f32 %v3441, %v3687
    %v3689 = vpop.f32.mrb[0].mxu0
    %v3690 = vadd.f32 %v3445, %v3689
    %3691 = vmatprep.mubr.bf16.mxu0 0
    %3692 = vmatmul.mubr.bf16.gmra.mrb[0].mxu0 %v310
    %v3693 = vpop.f32.mrb[0].mxu0
    %v3694 = vadd.f32 %v3441, %v3693
    %v3695 = vpop.f32.mrb[0].mxu0
    %v3696 = vadd.f32 %v3445, %v3695
    %v3697 = vpop.f32.mrb[0].mxu0
    %v3698 = vadd.f32 %v3441, %v3697
    %v3699 = vpop.f32.mrb[0].mxu0
    %v3700 = vadd.f32 %v3445, %v3699
    %3701 = vmatprep.mubr.bf16.mxu0 0
    %3702 = vmatmul.mubr.bf16.gmra.mrb[0].mxu0 %v313
    %v3703 = vpop.f32.mrb[0].mxu0
    %v3704 = vadd.f32 %v3441, %v3703
    %v3705 = vpop.f32.mrb[0].mxu0
    %v3706 = vadd.f32 %v3445, %v3705
    %v3707 = vpop.f32.mrb[0].mxu0
    %v3708 = vadd.f32 %v3441, %v3707
    %v3709 = vpop.f32.mrb[0].mxu0
    %v3710 = vadd.f32 %v3445, %v3709
    %3711 = vmatprep.mubr.bf16.mxu0 0
    %3712 = vmatmul.mubr.bf16.gmra.mrb[0].mxu0 %v316
    %v3713 = vpop.f32.mrb[0].mxu0
    %v3714 = vadd.f32 %v3441, %v3713
    %v3715 = vpop.f32.mrb[0].mxu0
    %v3716 = vadd.f32 %v3445, %v3715
    %v3717 = vpop.f32.mrb[0].mxu0
    %v3718 = vadd.f32 %v3441, %v3717
    %v3719 = vpop.f32.mrb[0].mxu0
    %v3720 = vadd.f32 %v3445, %v3719
    %3721 = vmatprep.mubr.bf16.mxu0 0
    %3722 = vmatmul.mubr.bf16.gmra.mrb[0].mxu0 %v319
    %v3723 = vpop.f32.mrb[0].mxu0
    %v3724 = vadd.f32 %v3441, %v3723
    %v3725 = vpop.f32.mrb[0].mxu0
    %v3726 = vadd.f32 %v3445, %v3725
    %v3727 = vpop.f32.mrb[0].mxu0
    %v3728 = vadd.f32 %v3441, %v3727
    %v3729 = vpop.f32.mrb[0].mxu0
    %v3730 = vadd.f32 %v3445, %v3729
    %3731 = vmatprep.mubr.bf16.mxu0 0
    %3732 = vmatmul.mubr.bf16.gmra.mrb[0].mxu0 %v322
    %v3733 = vpop.f32.mrb[0].mxu0
    %v3734 = vadd.f32 %v3441, %v3733
    %v3735 = vpop.f32.mrb[0].mxu0
    %v3736 = vadd.f32 %v3445, %v3735
    %v3737 = vpop.f32.mrb[0].mxu0
    %v3738 = vadd.f32 %v3441, %v3737
    %v3739 = vpop.f32.mrb[0].mxu0
    %v3740 = vadd.f32 %v3445, %v3739
    %3741 = vmatprep.mubr.bf16.mxu0 0
    %3742 = vmatmul.mubr.bf16.gmra.mrb[0].mxu0 %v325
    %v3743 = vpop.f32.mrb[0].mxu0
    %v3744 = vadd.f32 %v3441, %v3743
    %v3745 = vpop.f32.mrb[0].mxu0
    %v3746 = vadd.f32 %v3445, %v3745
    %v3747 = vpop.f32.mrb[0].mxu0
    %v3748 = vadd.f32 %v3441, %v3747
    %v3749 = vpop.f32.mrb[0].mxu0
    %v3750 = vadd.f32 %v3445, %v3749
    %3751 = vmatprep.mubr.bf16.mxu0 0
    %3752 = vmatmul.mubr.bf16.gmra.mrb[0].mxu0 %v328
    %v3753 = vpop.f32.mrb[0].mxu0
    %v3754 = vadd.f32 %v3441, %v3753
    %v3755 = vpop.f32.mrb[0].mxu0
    %v3756 = vadd.f32 %v3445, %v3755
    %v3757 = vpop.f32.mrb[0].mxu0
    %v3758 = vpop.f32.mrb[0].mxu0
    %3759 = vdwg.mxu0
    %v3760 = vmax.f32 %v3514, 0.0
    %v3761 = vmax.f32 %v3516, 0.0
    %v3762 = vmax.f32 %v3518, 0.0
    %v3763 = vmax.f32 %v3520, 0.0
    %v3764 = vmax.f32 %v3524, 0.0
    %v3765 = vmax.f32 %v3526, 0.0
    %v3766 = vmax.f32 %v3528, 0.0
    %v3767 = vmax.f32 %v3530, 0.0
    %v3768 = vmax.f32 %v3534, 0.0
    %v3769 = vmax.f32 %v3536, 0.0
    %v3770 = vmax.f32 %v3538, 0.0
    %v3771 = vmax.f32 %v3540, 0.0
    %v3772 = vmax.f32 %v3544, 0.0
    %v3773 = vmax.f32 %v3546, 0.0
    %v3774 = vmax.f32 %v3548, 0.0
    %v3775 = vmax.f32 %v3550, 0.0
    %v3776 = vmax.f32 %v3554, 0.0
    %v3777 = vmax.f32 %v3556, 0.0
    %v3778 = vmax.f32 %v3558, 0.0
    %v3779 = vmax.f32 %v3560, 0.0
    %v3780 = vmax.f32 %v3564, 0.0
    %v3781 = vmax.f32 %v3566, 0.0
    %v3782 = vmax.f32 %v3568, 0.0
    %v3783 = vmax.f32 %v3570, 0.0
    %v3784 = vmax.f32 %v3574, 0.0
    %v3785 = vmax.f32 %v3576, 0.0
    %v3786 = vmax.f32 %v3578, 0.0
    %v3787 = vmax.f32 %v3580, 0.0
    %v3788 = vmax.f32 %v3584, 0.0
    %v3789 = vmax.f32 %v3586, 0.0
    %v3790 = vmax.f32 %v3588, 0.0
    %v3791 = vmax.f32 %v3590, 0.0
    %v3792 = vmax.f32 %v3594, 0.0
    %v3793 = vmax.f32 %v3596, 0.0
    %v3794 = vmax.f32 %v3598, 0.0
    %v3795 = vmax.f32 %v3600, 0.0
    %v3796 = vmax.f32 %v3604, 0.0
    %v3797 = vmax.f32 %v3606, 0.0
    %v3798 = vmax.f32 %v3608, 0.0
    %v3799 = vmax.f32 %v3610, 0.0
    %v3800 = vmax.f32 %v3614, 0.0
    %v3801 = vmax.f32 %v3616, 0.0
    %v3802 = vmax.f32 %v3618, 0.0
    %v3803 = vmax.f32 %v3620, 0.0
    %v3804 = vmax.f32 %v3624, 0.0
    %v3805 = vmax.f32 %v3626, 0.0
    %v3806 = vmax.f32 %v3628, 0.0
    %v3807 = vmax.f32 %v3630, 0.0
    %v3808 = vmax.f32 %v3634, 0.0
    %v3809 = vmax.f32 %v3636, 0.0
    %v3810 = vmax.f32 %v3638, 0.0
    %v3811 = vmax.f32 %v3640, 0.0
    %v3812 = vmax.f32 %v3644, 0.0
    %v3813 = vmax.f32 %v3646, 0.0
    %v3814 = vmax.f32 %v3648, 0.0
    %v3815 = vmax.f32 %v3650, 0.0
    %v3816 = vmax.f32 %v3654, 0.0
    %v3817 = vmax.f32 %v3656, 0.0
    %v3818 = vmax.f32 %v3658, 0.0
    %v3819 = vmax.f32 %v3660, 0.0
    %v3820 = vmax.f32 %v3664, 0.0
    %v3821 = vmax.f32 %v3666, 0.0
    %v3822 = vmax.f32 %v3668, 0.0
    %v3823 = vmax.f32 %v3670, 0.0
    %v3824 = vmax.f32 %v3674, 0.0
    %v3825 = vmax.f32 %v3676, 0.0
    %v3826 = vmax.f32 %v3678, 0.0
    %v3827 = vmax.f32 %v3680, 0.0
    %v3828 = vmax.f32 %v3684, 0.0
    %v3829 = vmax.f32 %v3686, 0.0
    %v3830 = vmax.f32 %v3688, 0.0
    %v3831 = vmax.f32 %v3690, 0.0
    %v3832 = vmax.f32 %v3694, 0.0
    %v3833 = vmax.f32 %v3696, 0.0
    %v3834 = vmax.f32 %v3698, 0.0
    %v3835 = vmax.f32 %v3700, 0.0
    %v3836 = vmax.f32 %v3704, 0.0
    %v3837 = vmax.f32 %v3706, 0.0
    %v3838 = vmax.f32 %v3708, 0.0
    %v3839 = vmax.f32 %v3710, 0.0
    %v3840 = vmax.f32 %v3714, 0.0
    %v3841 = vmax.f32 %v3716, 0.0
    %v3842 = vmax.f32 %v3718, 0.0
    %v3843 = vmax.f32 %v3720, 0.0
    %v3844 = vmax.f32 %v3724, 0.0
    %v3845 = vmax.f32 %v3726, 0.0
    %v3846 = vmax.f32 %v3728, 0.0
    %v3847 = vmax.f32 %v3730, 0.0
    %v3848 = vmax.f32 %v3734, 0.0
    %v3849 = vmax.f32 %v3736, 0.0
    %v3850 = vmax.f32 %v3738, 0.0
    %v3851 = vmax.f32 %v3740, 0.0
    %v3852 = vmax.f32 %v3744, 0.0
    %v3853 = vmax.f32 %v3746, 0.0
    %v3854 = vmax.f32 %v3748, 0.0
    %v3855 = vmax.f32 %v3750, 0.0
    %v3856 = vmax.f32 %v3754, 0.0
    %v3857 = vmax.f32 %v3756, 0.0
    %3858 = vmatprep.subr.mxu0 %v3761
    %3859 = vmatpush1.msra.mxu0 %v3760
    %3860 = vmatprep.subr.mxu0 %v3763
    %3861 = vmatpush1.msra.mxu0 %v3762
    %3862 = vmatprep.subr.mxu0 %v3765
    %3863 = vmatpush1.msra.mxu0 %v3764
    %3864 = vmatprep.subr.mxu0 %v3767
    %3865 = vmatpush1.msra.mxu0 %v3766
    %3866 = vmatprep.subr.mxu0 %v3769
    %3867 = vmatpush1.msra.mxu0 %v3768
    %3868 = vmatprep.subr.mxu0 %v3771
    %3869 = vmatpush1.msra.mxu0 %v3770
    %3870 = vmatprep.subr.mxu0 %v3773
    %3871 = vmatpush1.msra.mxu0 %v3772
    %3872 = vmatprep.subr.mxu0 %v3775
    %3873 = vmatpush1.msra.mxu0 %v3774
    %3874 = vmatprep.subr.mxu0 %v3777
    %3875 = vmatpush1.msra.mxu0 %v3776
    %3876 = vmatprep.subr.mxu0 %v3779
    %3877 = vmatpush1.msra.mxu0 %v3778
    %3878 = vmatprep.subr.mxu0 %v3781
    %3879 = vmatpush1.msra.mxu0 %v3780
    %3880 = vmatprep.subr.mxu0 %v3783
    %3881 = vmatpush1.msra.mxu0 %v3782
    %3882 = vmatprep.subr.mxu0 %v3785
    %3883 = vmatpush1.msra.mxu0 %v3784
    %3884 = vmatprep.subr.mxu0 %v3787
    %3885 = vmatpush1.msra.mxu0 %v3786
    %3886 = vmatprep.subr.mxu0 %v3789
    %3887 = vmatpush1.msra.mxu0 %v3788
    %3888 = vmatprep.subr.mxu0 %v3791
    %3889 = vmatpush1.msra.mxu0 %v3790
    %3890 = vmatprep.subr.mxu0 %v3793
    %3891 = vmatpush1.msra.mxu0 %v3792
    %3892 = vmatprep.subr.mxu0 %v3795
    %3893 = vmatpush1.msra.mxu0 %v3794
    %3894 = vmatprep.subr.mxu0 %v3797
    %3895 = vmatpush1.msra.mxu0 %v3796
    %3896 = vmatprep.subr.mxu0 %v3799
    %3897 = vmatpush1.msra.mxu0 %v3798
    %3898 = vmatprep.subr.mxu0 %v3801
    %3899 = vmatpush1.msra.mxu0 %v3800
    %3900 = vmatprep.subr.mxu0 %v3803
    %3901 = vmatpush1.msra.mxu0 %v3802
    %3902 = vmatprep.subr.mxu0 %v3805
    %3903 = vmatpush1.msra.mxu0 %v3804
    %3904 = vmatprep.subr.mxu0 %v3807
    %3905 = vmatpush1.msra.mxu0 %v3806
    %3906 = vmatprep.subr.mxu0 %v3809
    %3907 = vmatpush1.msra.mxu0 %v3808
    %3908 = vmatprep.subr.mxu0 %v3811
    %3909 = vmatpush1.msra.mxu0 %v3810
    %3910 = vmatprep.subr.mxu0 %v3813
    %3911 = vmatpush1.msra.mxu0 %v3812
    %3912 = vmatprep.subr.mxu0 %v3815
    %3913 = vmatpush1.msra.mxu0 %v3814
    %3914 = vmatprep.subr.mxu0 %v3817
    %3915 = vmatpush1.msra.mxu0 %v3816
    %3916 = vmatprep.subr.mxu0 %v3819
    %3917 = vmatpush1.msra.mxu0 %v3818
    %3918 = vmatprep.subr.mxu0 %v3821
    %3919 = vmatpush1.msra.mxu0 %v3820
    %3920 = vmatprep.subr.mxu0 %v3823
    %3921 = vmatpush1.msra.mxu0 %v3822
    %3922 = vmatprep.mubr.f32.mxu0 %v732
    %3923 = vmatmul.mubr.f32.gmra.mrb[0].mxu0 %v724
    %v3924 = vpop.f32.mrb[0].mxu0
    %v3925 = vadd.f32 0.0, %v3924
    %v3926 = vpop.f32.mrb[0].mxu0
    %v3927 = vadd.f32 0.0, %v3926
    %3928 = vdwg.mxu0
    %3929 = vmatprep.subr.mxu0 %v3825
    %3930 = vmatpush1.msra.mxu0 %v3824
    %3931 = vmatprep.subr.mxu0 %v3827
    %3932 = vmatpush1.msra.mxu0 %v3826
    %3933 = vmatprep.subr.mxu0 %v3829
    %3934 = vmatpush1.msra.mxu0 %v3828
    %3935 = vmatprep.subr.mxu0 %v3831
    %3936 = vmatpush1.msra.mxu0 %v3830
    %3937 = vmatprep.subr.mxu0 %v3833
    %3938 = vmatpush1.msra.mxu0 %v3832
    %3939 = vmatprep.subr.mxu0 %v3835
    %3940 = vmatpush1.msra.mxu0 %v3834
    %3941 = vmatprep.subr.mxu0 %v3837
    %3942 = vmatpush1.msra.mxu0 %v3836
    %3943 = vmatprep.subr.mxu0 %v3839
    %3944 = vmatpush1.msra.mxu0 %v3838
    %3945 = vmatprep.subr.mxu0 %v3841
    %3946 = vmatpush1.msra.mxu0 %v3840
    %3947 = vmatprep.subr.mxu0 %v3843
    %3948 = vmatpush1.msra.mxu0 %v3842
    %3949 = vmatprep.subr.mxu0 %v3845
    %3950 = vmatpush1.msra.mxu0 %v3844
    %3951 = vmatprep.subr.mxu0 %v3847
    %3952 = vmatpush1.msra.mxu0 %v3846
    %3953 = vmatprep.subr.mxu0 %v3849
    %3954 = vmatpush1.msra.mxu0 %v3848
    %3955 = vmatprep.subr.mxu0 %v3851
    %3956 = vmatpush1.msra.mxu0 %v3850
    %3957 = vmatprep.subr.mxu0 %v3853
    %3958 = vmatpush1.msra.mxu0 %v3852
    %3959 = vmatprep.subr.mxu0 %v3855
    %3960 = vmatpush1.msra.mxu0 %v3854
    %3961 = vmatprep.subr.mxu0 %v3857
    %3962 = vmatpush1.msra.mxu0 %v3856
    %3963 = vmatprep.subr.mxu0 0.0
    %3964 = vmatpush1.msra.mxu0 0.0
    %3965 = vmatprep.subr.mxu0 0.0
    %3966 = vmatpush1.msra.mxu0 0.0
    %3967 = vmatprep.subr.mxu0 0.0
    %3968 = vmatpush1.msra.mxu0 0.0
    %3969 = vmatprep.subr.mxu0 0.0
    %3970 = vmatpush1.msra.mxu0 0.0
    %3971 = vmatprep.subr.mxu0 0.0
    %3972 = vmatpush1.msra.mxu0 0.0
    %3973 = vmatprep.subr.mxu0 0.0
    %3974 = vmatpush1.msra.mxu0 0.0
    %3975 = vmatprep.subr.mxu0 0.0
    %3976 = vmatpush1.msra.mxu0 0.0
    %3977 = vmatprep.subr.mxu0 0.0
    %3978 = vmatpush1.msra.mxu0 0.0
    %3979 = vmatprep.subr.mxu0 0.0
    %3980 = vmatpush1.msra.mxu0 0.0
    %3981 = vmatprep.subr.mxu0 0.0
    %3982 = vmatpush1.msra.mxu0 0.0
    %3983 = vmatprep.subr.mxu0 0.0
    %3984 = vmatpush1.msra.mxu0 0.0
    %3985 = vmatprep.subr.mxu0 0.0
    %3986 = vmatpush1.msra.mxu0 0.0
    %3987 = vmatprep.subr.mxu0 0.0
    %3988 = vmatpush1.msra.mxu0 0.0
    %3989 = vmatprep.subr.mxu0 0.0
    %3990 = vmatpush1.msra.mxu0 0.0
    %3991 = vmatprep.subr.mxu0 0.0
    %3992 = vmatpush1.msra.mxu0 0.0
    %3993 = vmatprep.mubr.f32.mxu0 %v738
    %3994 = vmatmul.mubr.f32.gmra.mrb[0].mxu0 %v731
    %v3995 = vpop.f32.mrb[0].mxu0
    %v3996 = vadd.f32 %v3925, %v3995
    %v3997 = vpop.f32.mrb[0].mxu0
    %v3998 = vadd.f32 %v3927, %v3997
    %3999 = vdwg.mxu0
    %v4000 = vpack.c.bf16 %v3996, %v3996
    %v4001 = vpack.c.bf16 %v3998, %v3998
    %v4002 = vld [vmem:[%s4 + $0x28] sm:$0xff]
    %v4003 = vld [vmem:[%s4 + $0x68] sm:$0xff]
    %v4006 = vunpack.c.l.b16 %v4002
    %v4007 = vunpack.c.h.b16 %v4002
    %v4008 = vunpack.c.l.b16 %v4003
    %v4009 = vunpack.c.h.b16 %v4003
    %v4010 = vpack.c.b16 %v4008, %v4006
    %v4011 = vpack.c.b16 %v4009, %v4007
    %4014 = vmatprep.subr.bf16.mxu0 %v4011
    %4015 = vmatpush1.bf16.xpose.msra.mxu0 %v4010
    %4016 = vmatprep.subr.bf16.mxu0 0
    %4017 = vmatpush1.bf16.xpose.msra.mxu0 0
    %4018 = vmatprep.subr.bf16.mxu0 0
    %4019 = vmatpush1.bf16.xpose.msra.mxu0 0
    %4020 = vmatprep.subr.bf16.mxu0 0
    %4021 = vmatpush1.bf16.xpose.msra.mxu0 0
    %4022 = vmatprep.subr.bf16.mxu0 0
    %4023 = vmatpush1.bf16.xpose.msra.mxu0 0
    %4024 = vmatprep.subr.bf16.mxu0 0
    %4025 = vmatpush1.bf16.xpose.msra.mxu0 0
    %4026 = vmatprep.subr.bf16.mxu0 0
    %4027 = vmatpush1.bf16.xpose.msra.mxu0 0
    %4028 = vmatprep.subr.bf16.mxu0 0
    %4029 = vmatpush1.bf16.xpose.msra.mxu0 0
    %4030 = vmatprep.subr.bf16.mxu0 0
    %4031 = vmatpush1.bf16.xpose.msra.mxu0 0
    %4032 = vmatprep.subr.bf16.mxu0 0
    %4033 = vmatpush1.bf16.xpose.msra.mxu0 0
    %4034 = vmatprep.subr.bf16.mxu0 0
    %4035 = vmatpush1.bf16.xpose.msra.mxu0 0
    %4036 = vmatprep.subr.bf16.mxu0 0
    %4037 = vmatpush1.bf16.xpose.msra.mxu0 0
    %4038 = vmatprep.subr.bf16.mxu0 0
    %4039 = vmatpush1.bf16.xpose.msra.mxu0 0
    %4040 = vmatprep.subr.bf16.mxu0 0
    %4041 = vmatpush1.bf16.xpose.msra.mxu0 0
    %4042 = vmatprep.subr.bf16.mxu0 0
    %4043 = vmatpush1.bf16.xpose.msra.mxu0 0
    %4044 = vmatprep.subr.bf16.mxu0 0
    %4045 = vmatpush1.bf16.xpose.msra.mxu0 0
    %4046 = vmatprep.mubr.bf16.mxu0 %v4001
    %4047 = vmatmul.mubr.bf16.gmra.mrb[0].mxu0 %v4000
    %v4048 = vpop.f32.mrb[0].mxu0
    %v4049 = vadd.f32 0.0, %v4048
    %v4050 = vpop.f32.mrb[0].mxu0
    %v4051 = vpop.f32.mrb[0].mxu0
    %v4052 = vpop.f32.mrb[0].mxu0
    %4053 = vdwg.mxu0
    %v4054 = vadd.f32 %v3430, %v4049
    %v4055 = vld [vmem:[#allocation2 + $0x30] sm:$0xff]
    %v4056 = vld [vmem:[#allocation2 + $0x70] sm:$0xff]
    %v4057 = vld [vmem:[#allocation2 + $0xb0] sm:$0xff]
    %v4058 = vld [vmem:[#allocation2 + $0xf0] sm:$0xff]
    %v4059 = vld [vmem:[#allocation2 + $0x130] sm:$0x33]
    %v4060 = vld [vmem:[%s3 + $0xc] sm:$0x3]
    %v4062 = vlaneseq
    %v4063 = vshrl.u32 %v4062, 7
    %v4064 = vsub.s32 0, %v4063
    %v4065 = vrot.slane %v4060, %v4064
    %v4066 = vlaneseq
    %v4067 = vshrl.u32 %v4066, 7
    %v4068 = vsub.s32 1, %v4067
    %v4069 = vrot.slane %v4060, %v4068
    %v4077 = vunpack.c.l.b16 %v4055
    %v4078 = vunpack.c.h.b16 %v4055
    %v4079 = vunpack.c.l.b16 %v4056
    %v4080 = vunpack.c.h.b16 %v4056
    %v4081 = vunpack.c.l.b16 %v4057
    %v4082 = vunpack.c.h.b16 %v4057
    %v4083 = vunpack.c.l.b16 %v4058
    %v4084 = vunpack.c.h.b16 %v4058
    %v4085 = vunpack.c.l.b16 %v4059
    %v4086 = vunpack.c.h.b16 %v4059
    %v4087 = vpack.c.b16 %v4079, %v4077
    %v4088 = vpack.c.b16 %v4080, %v4078
    %v4089 = vpack.c.b16 %v4083, %v4081
    %v4090 = vpack.c.b16 %v4084, %v4082
    %v4091 = vpack.c.b16 %v4085, %v4085
    %v4092 = vpack.c.b16 %v4086, %v4086
    %v4098 = vsel %vm330, %v4091, 0
    %v4101 = vsel %vm330, %v4092, 0
    %4103 = vmatprep.subr.bf16.mxu0 %v4088
    %4104 = vmatpush1.bf16.msra.mxu0 %v4087
    %4105 = vmatprep.subr.bf16.mxu0 %v4090
    %4106 = vmatpush1.bf16.msra.mxu0 %v4089
    %4107 = vmatprep.subr.bf16.mxu0 %v4101
    %4108 = vmatpush1.bf16.msra.mxu0 %v4098
    %4109 = vmatprep.subr.bf16.mxu0 0
    %4110 = vmatpush1.bf16.msra.mxu0 0
    %4111 = vmatprep.subr.bf16.mxu0 0
    %4112 = vmatpush1.bf16.msra.mxu0 0
    %4113 = vmatprep.subr.bf16.mxu0 0
    %4114 = vmatpush1.bf16.msra.mxu0 0
    %4115 = vmatprep.subr.bf16.mxu0 0
    %4116 = vmatpush1.bf16.msra.mxu0 0
    %4117 = vmatprep.subr.bf16.mxu0 0
    %4118 = vmatpush1.bf16.msra.mxu0 0
    %4119 = vmatprep.subr.bf16.mxu0 0
    %4120 = vmatpush1.bf16.msra.mxu0 0
    %4121 = vmatprep.subr.bf16.mxu0 0
    %4122 = vmatpush1.bf16.msra.mxu0 0
    %4123 = vmatprep.subr.bf16.mxu0 0
    %4124 = vmatpush1.bf16.msra.mxu0 0
    %4125 = vmatprep.subr.bf16.mxu0 0
    %4126 = vmatpush1.bf16.msra.mxu0 0
    %4127 = vmatprep.subr.bf16.mxu0 0
    %4128 = vmatpush1.bf16.msra.mxu0 0
    %4129 = vmatprep.subr.bf16.mxu0 0
    %4130 = vmatpush1.bf16.msra.mxu0 0
    %4131 = vmatprep.subr.bf16.mxu0 0
    %4132 = vmatpush1.bf16.msra.mxu0 0
    %4133 = vmatprep.subr.bf16.mxu0 0
    %4134 = vmatpush1.bf16.msra.mxu0 0
    %4135 = vmatprep.mubr.bf16.mxu0 0
    %4136 = vmatmul.mubr.bf16.gmra.mrb[0].mxu0 %v256
    %v4137 = vpop.f32.mrb[0].mxu0
    %v4138 = vadd.f32 %v4065, %v4137
    %v4139 = vpop.f32.mrb[0].mxu0
    %v4140 = vadd.f32 %v4069, %v4139
    %v4141 = vpop.f32.mrb[0].mxu0
    %v4142 = vadd.f32 %v4065, %v4141
    %v4143 = vpop.f32.mrb[0].mxu0
    %v4144 = vadd.f32 %v4069, %v4143
    %4145 = vmatprep.mubr.bf16.mxu0 0
    %4146 = vmatmul.mubr.bf16.gmra.mrb[0].mxu0 %v259
    %v4147 = vpop.f32.mrb[0].mxu0
    %v4148 = vadd.f32 %v4065, %v4147
    %v4149 = vpop.f32.mrb[0].mxu0
    %v4150 = vadd.f32 %v4069, %v4149
    %v4151 = vpop.f32.mrb[0].mxu0
    %v4152 = vadd.f32 %v4065, %v4151
    %v4153 = vpop.f32.mrb[0].mxu0
    %v4154 = vadd.f32 %v4069, %v4153
    %4155 = vmatprep.mubr.bf16.mxu0 0
    %4156 = vmatmul.mubr.bf16.gmra.mrb[0].mxu0 %v262
    %v4157 = vpop.f32.mrb[0].mxu0
    %v4158 = vadd.f32 %v4065, %v4157
    %v4159 = vpop.f32.mrb[0].mxu0
    %v4160 = vadd.f32 %v4069, %v4159
    %v4161 = vpop.f32.mrb[0].mxu0
    %v4162 = vadd.f32 %v4065, %v4161
    %v4163 = vpop.f32.mrb[0].mxu0
    %v4164 = vadd.f32 %v4069, %v4163
    %4165 = vmatprep.mubr.bf16.mxu0 0
    %4166 = vmatmul.mubr.bf16.gmra.mrb[0].mxu0 %v265
    %v4167 = vpop.f32.mrb[0].mxu0
    %v4168 = vadd.f32 %v4065, %v4167
    %v4169 = vpop.f32.mrb[0].mxu0
    %v4170 = vadd.f32 %v4069, %v4169
    %v4171 = vpop.f32.mrb[0].mxu0
    %v4172 = vadd.f32 %v4065, %v4171
    %v4173 = vpop.f32.mrb[0].mxu0
    %v4174 = vadd.f32 %v4069, %v4173
    %4175 = vmatprep.mubr.bf16.mxu0 0
    %4176 = vmatmul.mubr.bf16.gmra.mrb[0].mxu0 %v268
    %v4177 = vpop.f32.mrb[0].mxu0
    %v4178 = vadd.f32 %v4065, %v4177
    %v4179 = vpop.f32.mrb[0].mxu0
    %v4180 = vadd.f32 %v4069, %v4179
    %v4181 = vpop.f32.mrb[0].mxu0
    %v4182 = vadd.f32 %v4065, %v4181
    %v4183 = vpop.f32.mrb[0].mxu0
    %v4184 = vadd.f32 %v4069, %v4183
    %4185 = vmatprep.mubr.bf16.mxu0 0
    %4186 = vmatmul.mubr.bf16.gmra.mrb[0].mxu0 %v271
    %v4187 = vpop.f32.mrb[0].mxu0
    %v4188 = vadd.f32 %v4065, %v4187
    %v4189 = vpop.f32.mrb[0].mxu0
    %v4190 = vadd.f32 %v4069, %v4189
    %v4191 = vpop.f32.mrb[0].mxu0
    %v4192 = vadd.f32 %v4065, %v4191
    %v4193 = vpop.f32.mrb[0].mxu0
    %v4194 = vadd.f32 %v4069, %v4193
    %4195 = vmatprep.mubr.bf16.mxu0 0
    %4196 = vmatmul.mubr.bf16.gmra.mrb[0].mxu0 %v274
    %v4197 = vpop.f32.mrb[0].mxu0
    %v4198 = vadd.f32 %v4065, %v4197
    %v4199 = vpop.f32.mrb[0].mxu0
    %v4200 = vadd.f32 %v4069, %v4199
    %v4201 = vpop.f32.mrb[0].mxu0
    %v4202 = vadd.f32 %v4065, %v4201
    %v4203 = vpop.f32.mrb[0].mxu0
    %v4204 = vadd.f32 %v4069, %v4203
    %4205 = vmatprep.mubr.bf16.mxu0 0
    %4206 = vmatmul.mubr.bf16.gmra.mrb[0].mxu0 %v277
    %v4207 = vpop.f32.mrb[0].mxu0
    %v4208 = vadd.f32 %v4065, %v4207
    %v4209 = vpop.f32.mrb[0].mxu0
    %v4210 = vadd.f32 %v4069, %v4209
    %v4211 = vpop.f32.mrb[0].mxu0
    %v4212 = vadd.f32 %v4065, %v4211
    %v4213 = vpop.f32.mrb[0].mxu0
    %v4214 = vadd.f32 %v4069, %v4213
    %4215 = vmatprep.mubr.bf16.mxu0 0
    %4216 = vmatmul.mubr.bf16.gmra.mrb[0].mxu0 %v280
    %v4217 = vpop.f32.mrb[0].mxu0
    %v4218 = vadd.f32 %v4065, %v4217
    %v4219 = vpop.f32.mrb[0].mxu0
    %v4220 = vadd.f32 %v4069, %v4219
    %v4221 = vpop.f32.mrb[0].mxu0
    %v4222 = vadd.f32 %v4065, %v4221
    %v4223 = vpop.f32.mrb[0].mxu0
    %v4224 = vadd.f32 %v4069, %v4223
    %4225 = vmatprep.mubr.bf16.mxu0 0
    %4226 = vmatmul.mubr.bf16.gmra.mrb[0].mxu0 %v283
    %v4227 = vpop.f32.mrb[0].mxu0
    %v4228 = vadd.f32 %v4065, %v4227
    %v4229 = vpop.f32.mrb[0].mxu0
    %v4230 = vadd.f32 %v4069, %v4229
    %v4231 = vpop.f32.mrb[0].mxu0
    %v4232 = vadd.f32 %v4065, %v4231
    %v4233 = vpop.f32.mrb[0].mxu0
    %v4234 = vadd.f32 %v4069, %v4233
    %4235 = vmatprep.mubr.bf16.mxu0 0
    %4236 = vmatmul.mubr.bf16.gmra.mrb[0].mxu0 %v286
    %v4237 = vpop.f32.mrb[0].mxu0
    %v4238 = vadd.f32 %v4065, %v4237
    %v4239 = vpop.f32.mrb[0].mxu0
    %v4240 = vadd.f32 %v4069, %v4239
    %v4241 = vpop.f32.mrb[0].mxu0
    %v4242 = vadd.f32 %v4065, %v4241
    %v4243 = vpop.f32.mrb[0].mxu0
    %v4244 = vadd.f32 %v4069, %v4243
    %4245 = vmatprep.mubr.bf16.mxu0 0
    %4246 = vmatmul.mubr.bf16.gmra.mrb[0].mxu0 %v289
    %v4247 = vpop.f32.mrb[0].mxu0
    %v4248 = vadd.f32 %v4065, %v4247
    %v4249 = vpop.f32.mrb[0].mxu0
    %v4250 = vadd.f32 %v4069, %v4249
    %v4251 = vpop.f32.mrb[0].mxu0
    %v4252 = vadd.f32 %v4065, %v4251
    %v4253 = vpop.f32.mrb[0].mxu0
    %v4254 = vadd.f32 %v4069, %v4253
    %4255 = vmatprep.mubr.bf16.mxu0 0
    %4256 = vmatmul.mubr.bf16.gmra.mrb[0].mxu0 %v292
    %v4257 = vpop.f32.mrb[0].mxu0
    %v4258 = vadd.f32 %v4065, %v4257
    %v4259 = vpop.f32.mrb[0].mxu0
    %v4260 = vadd.f32 %v4069, %v4259
    %v4261 = vpop.f32.mrb[0].mxu0
    %v4262 = vadd.f32 %v4065, %v4261
    %v4263 = vpop.f32.mrb[0].mxu0
    %v4264 = vadd.f32 %v4069, %v4263
    %4265 = vmatprep.mubr.bf16.mxu0 0
    %4266 = vmatmul.mubr.bf16.gmra.mrb[0].mxu0 %v295
    %v4267 = vpop.f32.mrb[0].mxu0
    %v4268 = vadd.f32 %v4065, %v4267
    %v4269 = vpop.f32.mrb[0].mxu0
    %v4270 = vadd.f32 %v4069, %v4269
    %v4271 = vpop.f32.mrb[0].mxu0
    %v4272 = vadd.f32 %v4065, %v4271
    %v4273 = vpop.f32.mrb[0].mxu0
    %v4274 = vadd.f32 %v4069, %v4273
    %4275 = vmatprep.mubr.bf16.mxu0 0
    %4276 = vmatmul.mubr.bf16.gmra.mrb[0].mxu0 %v298
    %v4277 = vpop.f32.mrb[0].mxu0
    %v4278 = vadd.f32 %v4065, %v4277
    %v4279 = vpop.f32.mrb[0].mxu0
    %v4280 = vadd.f32 %v4069, %v4279
    %v4281 = vpop.f32.mrb[0].mxu0
    %v4282 = vadd.f32 %v4065, %v4281
    %v4283 = vpop.f32.mrb[0].mxu0
    %v4284 = vadd.f32 %v4069, %v4283
    %4285 = vmatprep.mubr.bf16.mxu0 0
    %4286 = vmatmul.mubr.bf16.gmra.mrb[0].mxu0 %v301
    %v4287 = vpop.f32.mrb[0].mxu0
    %v4288 = vadd.f32 %v4065, %v4287
    %v4289 = vpop.f32.mrb[0].mxu0
    %v4290 = vadd.f32 %v4069, %v4289
    %v4291 = vpop.f32.mrb[0].mxu0
    %v4292 = vadd.f32 %v4065, %v4291
    %v4293 = vpop.f32.mrb[0].mxu0
    %v4294 = vadd.f32 %v4069, %v4293
    %4295 = vmatprep.mubr.bf16.mxu0 0
    %4296 = vmatmul.mubr.bf16.gmra.mrb[0].mxu0 %v304
    %v4297 = vpop.f32.mrb[0].mxu0
    %v4298 = vadd.f32 %v4065, %v4297
    %v4299 = vpop.f32.mrb[0].mxu0
    %v4300 = vadd.f32 %v4069, %v4299
    %v4301 = vpop.f32.mrb[0].mxu0
    %v4302 = vadd.f32 %v4065, %v4301
    %v4303 = vpop.f32.mrb[0].mxu0
    %v4304 = vadd.f32 %v4069, %v4303
    %4305 = vmatprep.mubr.bf16.mxu0 0
    %4306 = vmatmul.mubr.bf16.gmra.mrb[0].mxu0 %v307
    %v4307 = vpop.f32.mrb[0].mxu0
    %v4308 = vadd.f32 %v4065, %v4307
    %v4309 = vpop.f32.mrb[0].mxu0
    %v4310 = vadd.f32 %v4069, %v4309
    %v4311 = vpop.f32.mrb[0].mxu0
    %v4312 = vadd.f32 %v4065, %v4311
    %v4313 = vpop.f32.mrb[0].mxu0
    %v4314 = vadd.f32 %v4069, %v4313
    %4315 = vmatprep.mubr.bf16.mxu0 0
    %4316 = vmatmul.mubr.bf16.gmra.mrb[0].mxu0 %v310
    %v4317 = vpop.f32.mrb[0].mxu0
    %v4318 = vadd.f32 %v4065, %v4317
    %v4319 = vpop.f32.mrb[0].mxu0
    %v4320 = vadd.f32 %v4069, %v4319
    %v4321 = vpop.f32.mrb[0].mxu0
    %v4322 = vadd.f32 %v4065, %v4321
    %v4323 = vpop.f32.mrb[0].mxu0
    %v4324 = vadd.f32 %v4069, %v4323
    %4325 = vmatprep.mubr.bf16.mxu0 0
    %4326 = vmatmul.mubr.bf16.gmra.mrb[0].mxu0 %v313
    %v4327 = vpop.f32.mrb[0].mxu0
    %v4328 = vadd.f32 %v4065, %v4327
    %v4329 = vpop.f32.mrb[0].mxu0
    %v4330 = vadd.f32 %v4069, %v4329
    %v4331 = vpop.f32.mrb[0].mxu0
    %v4332 = vadd.f32 %v4065, %v4331
    %v4333 = vpop.f32.mrb[0].mxu0
    %v4334 = vadd.f32 %v4069, %v4333
    %4335 = vmatprep.mubr.bf16.mxu0 0
    %4336 = vmatmul.mubr.bf16.gmra.mrb[0].mxu0 %v316
    %v4337 = vpop.f32.mrb[0].mxu0
    %v4338 = vadd.f32 %v4065, %v4337
    %v4339 = vpop.f32.mrb[0].mxu0
    %v4340 = vadd.f32 %v4069, %v4339
    %v4341 = vpop.f32.mrb[0].mxu0
    %v4342 = vadd.f32 %v4065, %v4341
    %v4343 = vpop.f32.mrb[0].mxu0
    %v4344 = vadd.f32 %v4069, %v4343
    %4345 = vmatprep.mubr.bf16.mxu0 0
    %4346 = vmatmul.mubr.bf16.gmra.mrb[0].mxu0 %v319
    %v4347 = vpop.f32.mrb[0].mxu0
    %v4348 = vadd.f32 %v4065, %v4347
    %v4349 = vpop.f32.mrb[0].mxu0
    %v4350 = vadd.f32 %v4069, %v4349
    %v4351 = vpop.f32.mrb[0].mxu0
    %v4352 = vadd.f32 %v4065, %v4351
    %v4353 = vpop.f32.mrb[0].mxu0
    %v4354 = vadd.f32 %v4069, %v4353
    %4355 = vmatprep.mubr.bf16.mxu0 0
    %4356 = vmatmul.mubr.bf16.gmra.mrb[0].mxu0 %v322
    %v4357 = vpop.f32.mrb[0].mxu0
    %v4358 = vadd.f32 %v4065, %v4357
    %v4359 = vpop.f32.mrb[0].mxu0
    %v4360 = vadd.f32 %v4069, %v4359
    %v4361 = vpop.f32.mrb[0].mxu0
    %v4362 = vadd.f32 %v4065, %v4361
    %v4363 = vpop.f32.mrb[0].mxu0
    %v4364 = vadd.f32 %v4069, %v4363
    %4365 = vmatprep.mubr.bf16.mxu0 0
    %4366 = vmatmul.mubr.bf16.gmra.mrb[0].mxu0 %v325
    %v4367 = vpop.f32.mrb[0].mxu0
    %v4368 = vadd.f32 %v4065, %v4367
    %v4369 = vpop.f32.mrb[0].mxu0
    %v4370 = vadd.f32 %v4069, %v4369
    %v4371 = vpop.f32.mrb[0].mxu0
    %v4372 = vadd.f32 %v4065, %v4371
    %v4373 = vpop.f32.mrb[0].mxu0
    %v4374 = vadd.f32 %v4069, %v4373
    %4375 = vmatprep.mubr.bf16.mxu0 0
    %4376 = vmatmul.mubr.bf16.gmra.mrb[0].mxu0 %v328
    %v4377 = vpop.f32.mrb[0].mxu0
    %v4378 = vadd.f32 %v4065, %v4377
    %v4379 = vpop.f32.mrb[0].mxu0
    %v4380 = vadd.f32 %v4069, %v4379
    %v4381 = vpop.f32.mrb[0].mxu0
    %v4382 = vpop.f32.mrb[0].mxu0
    %4383 = vdwg.mxu0
    %v4384 = vmax.f32 %v4138, 0.0
    %v4385 = vmax.f32 %v4140, 0.0
    %v4386 = vmax.f32 %v4142, 0.0
    %v4387 = vmax.f32 %v4144, 0.0
    %v4388 = vmax.f32 %v4148, 0.0
    %v4389 = vmax.f32 %v4150, 0.0
    %v4390 = vmax.f32 %v4152, 0.0
    %v4391 = vmax.f32 %v4154, 0.0
    %v4392 = vmax.f32 %v4158, 0.0
    %v4393 = vmax.f32 %v4160, 0.0
    %v4394 = vmax.f32 %v4162, 0.0
    %v4395 = vmax.f32 %v4164, 0.0
    %v4396 = vmax.f32 %v4168, 0.0
    %v4397 = vmax.f32 %v4170, 0.0
    %v4398 = vmax.f32 %v4172, 0.0
    %v4399 = vmax.f32 %v4174, 0.0
    %v4400 = vmax.f32 %v4178, 0.0
    %v4401 = vmax.f32 %v4180, 0.0
    %v4402 = vmax.f32 %v4182, 0.0
    %v4403 = vmax.f32 %v4184, 0.0
    %v4404 = vmax.f32 %v4188, 0.0
    %v4405 = vmax.f32 %v4190, 0.0
    %v4406 = vmax.f32 %v4192, 0.0
    %v4407 = vmax.f32 %v4194, 0.0
    %v4408 = vmax.f32 %v4198, 0.0
    %v4409 = vmax.f32 %v4200, 0.0
    %v4410 = vmax.f32 %v4202, 0.0
    %v4411 = vmax.f32 %v4204, 0.0
    %v4412 = vmax.f32 %v4208, 0.0
    %v4413 = vmax.f32 %v4210, 0.0
    %v4414 = vmax.f32 %v4212, 0.0
    %v4415 = vmax.f32 %v4214, 0.0
    %v4416 = vmax.f32 %v4218, 0.0
    %v4417 = vmax.f32 %v4220, 0.0
    %v4418 = vmax.f32 %v4222, 0.0
    %v4419 = vmax.f32 %v4224, 0.0
    %v4420 = vmax.f32 %v4228, 0.0
    %v4421 = vmax.f32 %v4230, 0.0
    %v4422 = vmax.f32 %v4232, 0.0
    %v4423 = vmax.f32 %v4234, 0.0
    %v4424 = vmax.f32 %v4238, 0.0
    %v4425 = vmax.f32 %v4240, 0.0
    %v4426 = vmax.f32 %v4242, 0.0
    %v4427 = vmax.f32 %v4244, 0.0
    %v4428 = vmax.f32 %v4248, 0.0
    %v4429 = vmax.f32 %v4250, 0.0
    %v4430 = vmax.f32 %v4252, 0.0
    %v4431 = vmax.f32 %v4254, 0.0
    %v4432 = vmax.f32 %v4258, 0.0
    %v4433 = vmax.f32 %v4260, 0.0
    %v4434 = vmax.f32 %v4262, 0.0
    %v4435 = vmax.f32 %v4264, 0.0
    %v4436 = vmax.f32 %v4268, 0.0
    %v4437 = vmax.f32 %v4270, 0.0
    %v4438 = vmax.f32 %v4272, 0.0
    %v4439 = vmax.f32 %v4274, 0.0
    %v4440 = vmax.f32 %v4278, 0.0
    %v4441 = vmax.f32 %v4280, 0.0
    %v4442 = vmax.f32 %v4282, 0.0
    %v4443 = vmax.f32 %v4284, 0.0
    %v4444 = vmax.f32 %v4288, 0.0
    %v4445 = vmax.f32 %v4290, 0.0
    %v4446 = vmax.f32 %v4292, 0.0
    %v4447 = vmax.f32 %v4294, 0.0
    %v4448 = vmax.f32 %v4298, 0.0
    %v4449 = vmax.f32 %v4300, 0.0
    %v4450 = vmax.f32 %v4302, 0.0
    %v4451 = vmax.f32 %v4304, 0.0
    %v4452 = vmax.f32 %v4308, 0.0
    %v4453 = vmax.f32 %v4310, 0.0
    %v4454 = vmax.f32 %v4312, 0.0
    %v4455 = vmax.f32 %v4314, 0.0
    %v4456 = vmax.f32 %v4318, 0.0
    %v4457 = vmax.f32 %v4320, 0.0
    %v4458 = vmax.f32 %v4322, 0.0
    %v4459 = vmax.f32 %v4324, 0.0
    %v4460 = vmax.f32 %v4328, 0.0
    %v4461 = vmax.f32 %v4330, 0.0
    %v4462 = vmax.f32 %v4332, 0.0
    %v4463 = vmax.f32 %v4334, 0.0
    %v4464 = vmax.f32 %v4338, 0.0
    %v4465 = vmax.f32 %v4340, 0.0
    %v4466 = vmax.f32 %v4342, 0.0
    %v4467 = vmax.f32 %v4344, 0.0
    %v4468 = vmax.f32 %v4348, 0.0
    %v4469 = vmax.f32 %v4350, 0.0
    %v4470 = vmax.f32 %v4352, 0.0
    %v4471 = vmax.f32 %v4354, 0.0
    %v4472 = vmax.f32 %v4358, 0.0
    %v4473 = vmax.f32 %v4360, 0.0
    %v4474 = vmax.f32 %v4362, 0.0
    %v4475 = vmax.f32 %v4364, 0.0
    %v4476 = vmax.f32 %v4368, 0.0
    %v4477 = vmax.f32 %v4370, 0.0
    %v4478 = vmax.f32 %v4372, 0.0
    %v4479 = vmax.f32 %v4374, 0.0
    %v4480 = vmax.f32 %v4378, 0.0
    %v4481 = vmax.f32 %v4380, 0.0
    %4482 = vmatprep.subr.mxu0 %v4385
    %4483 = vmatpush1.msra.mxu0 %v4384
    %4484 = vmatprep.subr.mxu0 %v4387
    %4485 = vmatpush1.msra.mxu0 %v4386
    %4486 = vmatprep.subr.mxu0 %v4389
    %4487 = vmatpush1.msra.mxu0 %v4388
    %4488 = vmatprep.subr.mxu0 %v4391
    %4489 = vmatpush1.msra.mxu0 %v4390
    %4490 = vmatprep.subr.mxu0 %v4393
    %4491 = vmatpush1.msra.mxu0 %v4392
    %4492 = vmatprep.subr.mxu0 %v4395
    %4493 = vmatpush1.msra.mxu0 %v4394
    %4494 = vmatprep.subr.mxu0 %v4397
    %4495 = vmatpush1.msra.mxu0 %v4396
    %4496 = vmatprep.subr.mxu0 %v4399
    %4497 = vmatpush1.msra.mxu0 %v4398
    %4498 = vmatprep.subr.mxu0 %v4401
    %4499 = vmatpush1.msra.mxu0 %v4400
    %4500 = vmatprep.subr.mxu0 %v4403
    %4501 = vmatpush1.msra.mxu0 %v4402
    %4502 = vmatprep.subr.mxu0 %v4405
    %4503 = vmatpush1.msra.mxu0 %v4404
    %4504 = vmatprep.subr.mxu0 %v4407
    %4505 = vmatpush1.msra.mxu0 %v4406
    %4506 = vmatprep.subr.mxu0 %v4409
    %4507 = vmatpush1.msra.mxu0 %v4408
    %4508 = vmatprep.subr.mxu0 %v4411
    %4509 = vmatpush1.msra.mxu0 %v4410
    %4510 = vmatprep.subr.mxu0 %v4413
    %4511 = vmatpush1.msra.mxu0 %v4412
    %4512 = vmatprep.subr.mxu0 %v4415
    %4513 = vmatpush1.msra.mxu0 %v4414
    %4514 = vmatprep.subr.mxu0 %v4417
    %4515 = vmatpush1.msra.mxu0 %v4416
    %4516 = vmatprep.subr.mxu0 %v4419
    %4517 = vmatpush1.msra.mxu0 %v4418
    %4518 = vmatprep.subr.mxu0 %v4421
    %4519 = vmatpush1.msra.mxu0 %v4420
    %4520 = vmatprep.subr.mxu0 %v4423
    %4521 = vmatpush1.msra.mxu0 %v4422
    %4522 = vmatprep.subr.mxu0 %v4425
    %4523 = vmatpush1.msra.mxu0 %v4424
    %4524 = vmatprep.subr.mxu0 %v4427
    %4525 = vmatpush1.msra.mxu0 %v4426
    %4526 = vmatprep.subr.mxu0 %v4429
    %4527 = vmatpush1.msra.mxu0 %v4428
    %4528 = vmatprep.subr.mxu0 %v4431
    %4529 = vmatpush1.msra.mxu0 %v4430
    %4530 = vmatprep.subr.mxu0 %v4433
    %4531 = vmatpush1.msra.mxu0 %v4432
    %4532 = vmatprep.subr.mxu0 %v4435
    %4533 = vmatpush1.msra.mxu0 %v4434
    %4534 = vmatprep.subr.mxu0 %v4437
    %4535 = vmatpush1.msra.mxu0 %v4436
    %4536 = vmatprep.subr.mxu0 %v4439
    %4537 = vmatpush1.msra.mxu0 %v4438
    %4538 = vmatprep.subr.mxu0 %v4441
    %4539 = vmatpush1.msra.mxu0 %v4440
    %4540 = vmatprep.subr.mxu0 %v4443
    %4541 = vmatpush1.msra.mxu0 %v4442
    %4542 = vmatprep.subr.mxu0 %v4445
    %4543 = vmatpush1.msra.mxu0 %v4444
    %4544 = vmatprep.subr.mxu0 %v4447
    %4545 = vmatpush1.msra.mxu0 %v4446
    %4546 = vmatprep.mubr.f32.mxu0 %v732
    %4547 = vmatmul.mubr.f32.gmra.mrb[0].mxu0 %v724
    %v4548 = vpop.f32.mrb[0].mxu0
    %v4549 = vadd.f32 0.0, %v4548
    %v4550 = vpop.f32.mrb[0].mxu0
    %v4551 = vadd.f32 0.0, %v4550
    %4552 = vdwg.mxu0
    %4553 = vmatprep.subr.mxu0 %v4449
    %4554 = vmatpush1.msra.mxu0 %v4448
    %4555 = vmatprep.subr.mxu0 %v4451
    %4556 = vmatpush1.msra.mxu0 %v4450
    %4557 = vmatprep.subr.mxu0 %v4453
    %4558 = vmatpush1.msra.mxu0 %v4452
    %4559 = vmatprep.subr.mxu0 %v4455
    %4560 = vmatpush1.msra.mxu0 %v4454
    %4561 = vmatprep.subr.mxu0 %v4457
    %4562 = vmatpush1.msra.mxu0 %v4456
    %4563 = vmatprep.subr.mxu0 %v4459
    %4564 = vmatpush1.msra.mxu0 %v4458
    %4565 = vmatprep.subr.mxu0 %v4461
    %4566 = vmatpush1.msra.mxu0 %v4460
    %4567 = vmatprep.subr.mxu0 %v4463
    %4568 = vmatpush1.msra.mxu0 %v4462
    %4569 = vmatprep.subr.mxu0 %v4465
    %4570 = vmatpush1.msra.mxu0 %v4464
    %4571 = vmatprep.subr.mxu0 %v4467
    %4572 = vmatpush1.msra.mxu0 %v4466
    %4573 = vmatprep.subr.mxu0 %v4469
    %4574 = vmatpush1.msra.mxu0 %v4468
    %4575 = vmatprep.subr.mxu0 %v4471
    %4576 = vmatpush1.msra.mxu0 %v4470
    %4577 = vmatprep.subr.mxu0 %v4473
    %4578 = vmatpush1.msra.mxu0 %v4472
    %4579 = vmatprep.subr.mxu0 %v4475
    %4580 = vmatpush1.msra.mxu0 %v4474
    %4581 = vmatprep.subr.mxu0 %v4477
    %4582 = vmatpush1.msra.mxu0 %v4476
    %4583 = vmatprep.subr.mxu0 %v4479
    %4584 = vmatpush1.msra.mxu0 %v4478
    %4585 = vmatprep.subr.mxu0 %v4481
    %4586 = vmatpush1.msra.mxu0 %v4480
    %4587 = vmatprep.subr.mxu0 0.0
    %4588 = vmatpush1.msra.mxu0 0.0
    %4589 = vmatprep.subr.mxu0 0.0
    %4590 = vmatpush1.msra.mxu0 0.0
    %4591 = vmatprep.subr.mxu0 0.0
    %4592 = vmatpush1.msra.mxu0 0.0
    %4593 = vmatprep.subr.mxu0 0.0
    %4594 = vmatpush1.msra.mxu0 0.0
    %4595 = vmatprep.subr.mxu0 0.0
    %4596 = vmatpush1.msra.mxu0 0.0
    %4597 = vmatprep.subr.mxu0 0.0
    %4598 = vmatpush1.msra.mxu0 0.0
    %4599 = vmatprep.subr.mxu0 0.0
    %4600 = vmatpush1.msra.mxu0 0.0
    %4601 = vmatprep.subr.mxu0 0.0
    %4602 = vmatpush1.msra.mxu0 0.0
    %4603 = vmatprep.subr.mxu0 0.0
    %4604 = vmatpush1.msra.mxu0 0.0
    %4605 = vmatprep.subr.mxu0 0.0
    %4606 = vmatpush1.msra.mxu0 0.0
    %4607 = vmatprep.subr.mxu0 0.0
    %4608 = vmatpush1.msra.mxu0 0.0
    %4609 = vmatprep.subr.mxu0 0.0
    %4610 = vmatpush1.msra.mxu0 0.0
    %4611 = vmatprep.subr.mxu0 0.0
    %4612 = vmatpush1.msra.mxu0 0.0
    %4613 = vmatprep.subr.mxu0 0.0
    %4614 = vmatpush1.msra.mxu0 0.0
    %4615 = vmatprep.subr.mxu0 0.0
    %4616 = vmatpush1.msra.mxu0 0.0
    %4617 = vmatprep.mubr.f32.mxu0 %v738
    %4618 = vmatmul.mubr.f32.gmra.mrb[0].mxu0 %v731
    %v4619 = vpop.f32.mrb[0].mxu0
    %v4620 = vadd.f32 %v4549, %v4619
    %v4621 = vpop.f32.mrb[0].mxu0
    %v4622 = vadd.f32 %v4551, %v4621
    %4623 = vdwg.mxu0
    %v4624 = vpack.c.bf16 %v4620, %v4620
    %v4625 = vpack.c.bf16 %v4622, %v4622
    %v4626 = vld [vmem:[%s4 + $0x30] sm:$0xff]
    %v4627 = vld [vmem:[%s4 + $0x70] sm:$0xff]
    %v4630 = vunpack.c.l.b16 %v4626
    %v4631 = vunpack.c.h.b16 %v4626
    %v4632 = vunpack.c.l.b16 %v4627
    %v4633 = vunpack.c.h.b16 %v4627
    %v4634 = vpack.c.b16 %v4632, %v4630
    %v4635 = vpack.c.b16 %v4633, %v4631
    %4638 = vmatprep.subr.bf16.mxu0 %v4635
    %4639 = vmatpush1.bf16.xpose.msra.mxu0 %v4634
    %4640 = vmatprep.subr.bf16.mxu0 0
    %4641 = vmatpush1.bf16.xpose.msra.mxu0 0
    %4642 = vmatprep.subr.bf16.mxu0 0
    %4643 = vmatpush1.bf16.xpose.msra.mxu0 0
    %4644 = vmatprep.subr.bf16.mxu0 0
    %4645 = vmatpush1.bf16.xpose.msra.mxu0 0
    %4646 = vmatprep.subr.bf16.mxu0 0
    %4647 = vmatpush1.bf16.xpose.msra.mxu0 0
    %4648 = vmatprep.subr.bf16.mxu0 0
    %4649 = vmatpush1.bf16.xpose.msra.mxu0 0
    %4650 = vmatprep.subr.bf16.mxu0 0
    %4651 = vmatpush1.bf16.xpose.msra.mxu0 0
    %4652 = vmatprep.subr.bf16.mxu0 0
    %4653 = vmatpush1.bf16.xpose.msra.mxu0 0
    %4654 = vmatprep.subr.bf16.mxu0 0
    %4655 = vmatpush1.bf16.xpose.msra.mxu0 0
    %4656 = vmatprep.subr.bf16.mxu0 0
    %4657 = vmatpush1.bf16.xpose.msra.mxu0 0
    %4658 = vmatprep.subr.bf16.mxu0 0
    %4659 = vmatpush1.bf16.xpose.msra.mxu0 0
    %4660 = vmatprep.subr.bf16.mxu0 0
    %4661 = vmatpush1.bf16.xpose.msra.mxu0 0
    %4662 = vmatprep.subr.bf16.mxu0 0
    %4663 = vmatpush1.bf16.xpose.msra.mxu0 0
    %4664 = vmatprep.subr.bf16.mxu0 0
    %4665 = vmatpush1.bf16.xpose.msra.mxu0 0
    %4666 = vmatprep.subr.bf16.mxu0 0
    %4667 = vmatpush1.bf16.xpose.msra.mxu0 0
    %4668 = vmatprep.subr.bf16.mxu0 0
    %4669 = vmatpush1.bf16.xpose.msra.mxu0 0
    %4670 = vmatprep.mubr.bf16.mxu0 %v4625
    %4671 = vmatmul.mubr.bf16.gmra.mrb[0].mxu0 %v4624
    %v4672 = vpop.f32.mrb[0].mxu0
    %v4673 = vadd.f32 0.0, %v4672
    %v4674 = vpop.f32.mrb[0].mxu0
    %v4675 = vpop.f32.mrb[0].mxu0
    %v4676 = vpop.f32.mrb[0].mxu0
    %4677 = vdwg.mxu0
    %v4678 = vadd.f32 %v4054, %v4673
    %v4679 = vld [vmem:[#allocation2 + $0x38] sm:$0xff]
    %v4680 = vld [vmem:[#allocation2 + $0x78] sm:$0xff]
    %v4681 = vld [vmem:[#allocation2 + $0xb8] sm:$0xff]
    %v4682 = vld [vmem:[#allocation2 + $0xf8] sm:$0xff]
    %v4683 = vld [vmem:[#allocation2 + $0x138] sm:$0x33]
    %v4684 = vld [vmem:[%s3 + $0xe] sm:$0x3]
    %v4686 = vlaneseq
    %v4687 = vshrl.u32 %v4686, 7
    %v4688 = vsub.s32 0, %v4687
    %v4689 = vrot.slane %v4684, %v4688
    %v4690 = vlaneseq
    %v4691 = vshrl.u32 %v4690, 7
    %v4692 = vsub.s32 1, %v4691
    %v4693 = vrot.slane %v4684, %v4692
    %v4701 = vunpack.c.l.b16 %v4679
    %v4702 = vunpack.c.h.b16 %v4679
    %v4703 = vunpack.c.l.b16 %v4680
    %v4704 = vunpack.c.h.b16 %v4680
    %v4705 = vunpack.c.l.b16 %v4681
    %v4706 = vunpack.c.h.b16 %v4681
    %v4707 = vunpack.c.l.b16 %v4682
    %v4708 = vunpack.c.h.b16 %v4682
    %v4709 = vunpack.c.l.b16 %v4683
    %v4710 = vunpack.c.h.b16 %v4683
    %v4711 = vpack.c.b16 %v4703, %v4701
    %v4712 = vpack.c.b16 %v4704, %v4702
    %v4713 = vpack.c.b16 %v4707, %v4705
    %v4714 = vpack.c.b16 %v4708, %v4706
    %v4715 = vpack.c.b16 %v4709, %v4709
    %v4716 = vpack.c.b16 %v4710, %v4710
    %v4722 = vsel %vm330, %v4715, 0
    %v4725 = vsel %vm330, %v4716, 0
    %4727 = vmatprep.subr.bf16.mxu0 %v4712
    %4728 = vmatpush1.bf16.msra.mxu0 %v4711
    %4729 = vmatprep.subr.bf16.mxu0 %v4714
    %4730 = vmatpush1.bf16.msra.mxu0 %v4713
    %4731 = vmatprep.subr.bf16.mxu0 %v4725
    %4732 = vmatpush1.bf16.msra.mxu0 %v4722
    %4733 = vmatprep.subr.bf16.mxu0 0
    %4734 = vmatpush1.bf16.msra.mxu0 0
    %4735 = vmatprep.subr.bf16.mxu0 0
    %4736 = vmatpush1.bf16.msra.mxu0 0
    %4737 = vmatprep.subr.bf16.mxu0 0
    %4738 = vmatpush1.bf16.msra.mxu0 0
    %4739 = vmatprep.subr.bf16.mxu0 0
    %4740 = vmatpush1.bf16.msra.mxu0 0
    %4741 = vmatprep.subr.bf16.mxu0 0
    %4742 = vmatpush1.bf16.msra.mxu0 0
    %4743 = vmatprep.subr.bf16.mxu0 0
    %4744 = vmatpush1.bf16.msra.mxu0 0
    %4745 = vmatprep.subr.bf16.mxu0 0
    %4746 = vmatpush1.bf16.msra.mxu0 0
    %4747 = vmatprep.subr.bf16.mxu0 0
    %4748 = vmatpush1.bf16.msra.mxu0 0
    %4749 = vmatprep.subr.bf16.mxu0 0
    %4750 = vmatpush1.bf16.msra.mxu0 0
    %4751 = vmatprep.subr.bf16.mxu0 0
    %4752 = vmatpush1.bf16.msra.mxu0 0
    %4753 = vmatprep.subr.bf16.mxu0 0
    %4754 = vmatpush1.bf16.msra.mxu0 0
    %4755 = vmatprep.subr.bf16.mxu0 0
    %4756 = vmatpush1.bf16.msra.mxu0 0
    %4757 = vmatprep.subr.bf16.mxu0 0
    %4758 = vmatpush1.bf16.msra.mxu0 0
    %4759 = vmatprep.mubr.bf16.mxu0 0
    %4760 = vmatmul.mubr.bf16.gmra.mrb[0].mxu0 %v256
    %v4761 = vpop.f32.mrb[0].mxu0
    %v4762 = vadd.f32 %v4689, %v4761
    %v4763 = vpop.f32.mrb[0].mxu0
    %v4764 = vadd.f32 %v4693, %v4763
    %v4765 = vpop.f32.mrb[0].mxu0
    %v4766 = vadd.f32 %v4689, %v4765
    %v4767 = vpop.f32.mrb[0].mxu0
    %v4768 = vadd.f32 %v4693, %v4767
    %4769 = vmatprep.mubr.bf16.mxu0 0
    %4770 = vmatmul.mubr.bf16.gmra.mrb[0].mxu0 %v259
    %v4771 = vpop.f32.mrb[0].mxu0
    %v4772 = vadd.f32 %v4689, %v4771
    %v4773 = vpop.f32.mrb[0].mxu0
    %v4774 = vadd.f32 %v4693, %v4773
    %v4775 = vpop.f32.mrb[0].mxu0
    %v4776 = vadd.f32 %v4689, %v4775
    %v4777 = vpop.f32.mrb[0].mxu0
    %v4778 = vadd.f32 %v4693, %v4777
    %4779 = vmatprep.mubr.bf16.mxu0 0
    %4780 = vmatmul.mubr.bf16.gmra.mrb[0].mxu0 %v262
    %v4781 = vpop.f32.mrb[0].mxu0
    %v4782 = vadd.f32 %v4689, %v4781
    %v4783 = vpop.f32.mrb[0].mxu0
    %v4784 = vadd.f32 %v4693, %v4783
    %v4785 = vpop.f32.mrb[0].mxu0
    %v4786 = vadd.f32 %v4689, %v4785
    %v4787 = vpop.f32.mrb[0].mxu0
    %v4788 = vadd.f32 %v4693, %v4787
    %4789 = vmatprep.mubr.bf16.mxu0 0
    %4790 = vmatmul.mubr.bf16.gmra.mrb[0].mxu0 %v265
    %v4791 = vpop.f32.mrb[0].mxu0
    %v4792 = vadd.f32 %v4689, %v4791
    %v4793 = vpop.f32.mrb[0].mxu0
    %v4794 = vadd.f32 %v4693, %v4793
    %v4795 = vpop.f32.mrb[0].mxu0
    %v4796 = vadd.f32 %v4689, %v4795
    %v4797 = vpop.f32.mrb[0].mxu0
    %v4798 = vadd.f32 %v4693, %v4797
    %4799 = vmatprep.mubr.bf16.mxu0 0
    %4800 = vmatmul.mubr.bf16.gmra.mrb[0].mxu0 %v268
    %v4801 = vpop.f32.mrb[0].mxu0
    %v4802 = vadd.f32 %v4689, %v4801
    %v4803 = vpop.f32.mrb[0].mxu0
    %v4804 = vadd.f32 %v4693, %v4803
    %v4805 = vpop.f32.mrb[0].mxu0
    %v4806 = vadd.f32 %v4689, %v4805
    %v4807 = vpop.f32.mrb[0].mxu0
    %v4808 = vadd.f32 %v4693, %v4807
    %4809 = vmatprep.mubr.bf16.mxu0 0
    %4810 = vmatmul.mubr.bf16.gmra.mrb[0].mxu0 %v271
    %v4811 = vpop.f32.mrb[0].mxu0
    %v4812 = vadd.f32 %v4689, %v4811
    %v4813 = vpop.f32.mrb[0].mxu0
    %v4814 = vadd.f32 %v4693, %v4813
    %v4815 = vpop.f32.mrb[0].mxu0
    %v4816 = vadd.f32 %v4689, %v4815
    %v4817 = vpop.f32.mrb[0].mxu0
    %v4818 = vadd.f32 %v4693, %v4817
    %4819 = vmatprep.mubr.bf16.mxu0 0
    %4820 = vmatmul.mubr.bf16.gmra.mrb[0].mxu0 %v274
    %v4821 = vpop.f32.mrb[0].mxu0
    %v4822 = vadd.f32 %v4689, %v4821
    %v4823 = vpop.f32.mrb[0].mxu0
    %v4824 = vadd.f32 %v4693, %v4823
    %v4825 = vpop.f32.mrb[0].mxu0
    %v4826 = vadd.f32 %v4689, %v4825
    %v4827 = vpop.f32.mrb[0].mxu0
    %v4828 = vadd.f32 %v4693, %v4827
    %4829 = vmatprep.mubr.bf16.mxu0 0
    %4830 = vmatmul.mubr.bf16.gmra.mrb[0].mxu0 %v277
    %v4831 = vpop.f32.mrb[0].mxu0
    %v4832 = vadd.f32 %v4689, %v4831
    %v4833 = vpop.f32.mrb[0].mxu0
    %v4834 = vadd.f32 %v4693, %v4833
    %v4835 = vpop.f32.mrb[0].mxu0
    %v4836 = vadd.f32 %v4689, %v4835
    %v4837 = vpop.f32.mrb[0].mxu0
    %v4838 = vadd.f32 %v4693, %v4837
    %4839 = vmatprep.mubr.bf16.mxu0 0
    %4840 = vmatmul.mubr.bf16.gmra.mrb[0].mxu0 %v280
    %v4841 = vpop.f32.mrb[0].mxu0
    %v4842 = vadd.f32 %v4689, %v4841
    %v4843 = vpop.f32.mrb[0].mxu0
    %v4844 = vadd.f32 %v4693, %v4843
    %v4845 = vpop.f32.mrb[0].mxu0
    %v4846 = vadd.f32 %v4689, %v4845
    %v4847 = vpop.f32.mrb[0].mxu0
    %v4848 = vadd.f32 %v4693, %v4847
    %4849 = vmatprep.mubr.bf16.mxu0 0
    %4850 = vmatmul.mubr.bf16.gmra.mrb[0].mxu0 %v283
    %v4851 = vpop.f32.mrb[0].mxu0
    %v4852 = vadd.f32 %v4689, %v4851
    %v4853 = vpop.f32.mrb[0].mxu0
    %v4854 = vadd.f32 %v4693, %v4853
    %v4855 = vpop.f32.mrb[0].mxu0
    %v4856 = vadd.f32 %v4689, %v4855
    %v4857 = vpop.f32.mrb[0].mxu0
    %v4858 = vadd.f32 %v4693, %v4857
    %4859 = vmatprep.mubr.bf16.mxu0 0
    %4860 = vmatmul.mubr.bf16.gmra.mrb[0].mxu0 %v286
    %v4861 = vpop.f32.mrb[0].mxu0
    %v4862 = vadd.f32 %v4689, %v4861
    %v4863 = vpop.f32.mrb[0].mxu0
    %v4864 = vadd.f32 %v4693, %v4863
    %v4865 = vpop.f32.mrb[0].mxu0
    %v4866 = vadd.f32 %v4689, %v4865
    %v4867 = vpop.f32.mrb[0].mxu0
    %v4868 = vadd.f32 %v4693, %v4867
    %4869 = vmatprep.mubr.bf16.mxu0 0
    %4870 = vmatmul.mubr.bf16.gmra.mrb[0].mxu0 %v289
    %v4871 = vpop.f32.mrb[0].mxu0
    %v4872 = vadd.f32 %v4689, %v4871
    %v4873 = vpop.f32.mrb[0].mxu0
    %v4874 = vadd.f32 %v4693, %v4873
    %v4875 = vpop.f32.mrb[0].mxu0
    %v4876 = vadd.f32 %v4689, %v4875
    %v4877 = vpop.f32.mrb[0].mxu0
    %v4878 = vadd.f32 %v4693, %v4877
    %4879 = vmatprep.mubr.bf16.mxu0 0
    %4880 = vmatmul.mubr.bf16.gmra.mrb[0].mxu0 %v292
    %v4881 = vpop.f32.mrb[0].mxu0
    %v4882 = vadd.f32 %v4689, %v4881
    %v4883 = vpop.f32.mrb[0].mxu0
    %v4884 = vadd.f32 %v4693, %v4883
    %v4885 = vpop.f32.mrb[0].mxu0
    %v4886 = vadd.f32 %v4689, %v4885
    %v4887 = vpop.f32.mrb[0].mxu0
    %v4888 = vadd.f32 %v4693, %v4887
    %4889 = vmatprep.mubr.bf16.mxu0 0
    %4890 = vmatmul.mubr.bf16.gmra.mrb[0].mxu0 %v295
    %v4891 = vpop.f32.mrb[0].mxu0
    %v4892 = vadd.f32 %v4689, %v4891
    %v4893 = vpop.f32.mrb[0].mxu0
    %v4894 = vadd.f32 %v4693, %v4893
    %v4895 = vpop.f32.mrb[0].mxu0
    %v4896 = vadd.f32 %v4689, %v4895
    %v4897 = vpop.f32.mrb[0].mxu0
    %v4898 = vadd.f32 %v4693, %v4897
    %4899 = vmatprep.mubr.bf16.mxu0 0
    %4900 = vmatmul.mubr.bf16.gmra.mrb[0].mxu0 %v298
    %v4901 = vpop.f32.mrb[0].mxu0
    %v4902 = vadd.f32 %v4689, %v4901
    %v4903 = vpop.f32.mrb[0].mxu0
    %v4904 = vadd.f32 %v4693, %v4903
    %v4905 = vpop.f32.mrb[0].mxu0
    %v4906 = vadd.f32 %v4689, %v4905
    %v4907 = vpop.f32.mrb[0].mxu0
    %v4908 = vadd.f32 %v4693, %v4907
    %4909 = vmatprep.mubr.bf16.mxu0 0
    %4910 = vmatmul.mubr.bf16.gmra.mrb[0].mxu0 %v301
    %v4911 = vpop.f32.mrb[0].mxu0
    %v4912 = vadd.f32 %v4689, %v4911
    %v4913 = vpop.f32.mrb[0].mxu0
    %v4914 = vadd.f32 %v4693, %v4913
    %v4915 = vpop.f32.mrb[0].mxu0
    %v4916 = vadd.f32 %v4689, %v4915
    %v4917 = vpop.f32.mrb[0].mxu0
    %v4918 = vadd.f32 %v4693, %v4917
    %4919 = vmatprep.mubr.bf16.mxu0 0
    %4920 = vmatmul.mubr.bf16.gmra.mrb[0].mxu0 %v304
    %v4921 = vpop.f32.mrb[0].mxu0
    %v4922 = vadd.f32 %v4689, %v4921
    %v4923 = vpop.f32.mrb[0].mxu0
    %v4924 = vadd.f32 %v4693, %v4923
    %v4925 = vpop.f32.mrb[0].mxu0
    %v4926 = vadd.f32 %v4689, %v4925
    %v4927 = vpop.f32.mrb[0].mxu0
    %v4928 = vadd.f32 %v4693, %v4927
    %4929 = vmatprep.mubr.bf16.mxu0 0
    %4930 = vmatmul.mubr.bf16.gmra.mrb[0].mxu0 %v307
    %v4931 = vpop.f32.mrb[0].mxu0
    %v4932 = vadd.f32 %v4689, %v4931
    %v4933 = vpop.f32.mrb[0].mxu0
    %v4934 = vadd.f32 %v4693, %v4933
    %v4935 = vpop.f32.mrb[0].mxu0
    %v4936 = vadd.f32 %v4689, %v4935
    %v4937 = vpop.f32.mrb[0].mxu0
    %v4938 = vadd.f32 %v4693, %v4937
    %4939 = vmatprep.mubr.bf16.mxu0 0
    %4940 = vmatmul.mubr.bf16.gmra.mrb[0].mxu0 %v310
    %v4941 = vpop.f32.mrb[0].mxu0
    %v4942 = vadd.f32 %v4689, %v4941
    %v4943 = vpop.f32.mrb[0].mxu0
    %v4944 = vadd.f32 %v4693, %v4943
    %v4945 = vpop.f32.mrb[0].mxu0
    %v4946 = vadd.f32 %v4689, %v4945
    %v4947 = vpop.f32.mrb[0].mxu0
    %v4948 = vadd.f32 %v4693, %v4947
    %4949 = vmatprep.mubr.bf16.mxu0 0
    %4950 = vmatmul.mubr.bf16.gmra.mrb[0].mxu0 %v313
    %v4951 = vpop.f32.mrb[0].mxu0
    %v4952 = vadd.f32 %v4689, %v4951
    %v4953 = vpop.f32.mrb[0].mxu0
    %v4954 = vadd.f32 %v4693, %v4953
    %v4955 = vpop.f32.mrb[0].mxu0
    %v4956 = vadd.f32 %v4689, %v4955
    %v4957 = vpop.f32.mrb[0].mxu0
    %v4958 = vadd.f32 %v4693, %v4957
    %4959 = vmatprep.mubr.bf16.mxu0 0
    %4960 = vmatmul.mubr.bf16.gmra.mrb[0].mxu0 %v316
    %v4961 = vpop.f32.mrb[0].mxu0
    %v4962 = vadd.f32 %v4689, %v4961
    %v4963 = vpop.f32.mrb[0].mxu0
    %v4964 = vadd.f32 %v4693, %v4963
    %v4965 = vpop.f32.mrb[0].mxu0
    %v4966 = vadd.f32 %v4689, %v4965
    %v4967 = vpop.f32.mrb[0].mxu0
    %v4968 = vadd.f32 %v4693, %v4967
    %4969 = vmatprep.mubr.bf16.mxu0 0
    %4970 = vmatmul.mubr.bf16.gmra.mrb[0].mxu0 %v319
    %v4971 = vpop.f32.mrb[0].mxu0
    %v4972 = vadd.f32 %v4689, %v4971
    %v4973 = vpop.f32.mrb[0].mxu0
    %v4974 = vadd.f32 %v4693, %v4973
    %v4975 = vpop.f32.mrb[0].mxu0
    %v4976 = vadd.f32 %v4689, %v4975
    %v4977 = vpop.f32.mrb[0].mxu0
    %v4978 = vadd.f32 %v4693, %v4977
    %4979 = vmatprep.mubr.bf16.mxu0 0
    %4980 = vmatmul.mubr.bf16.gmra.mrb[0].mxu0 %v322
    %v4981 = vpop.f32.mrb[0].mxu0
    %v4982 = vadd.f32 %v4689, %v4981
    %v4983 = vpop.f32.mrb[0].mxu0
    %v4984 = vadd.f32 %v4693, %v4983
    %v4985 = vpop.f32.mrb[0].mxu0
    %v4986 = vadd.f32 %v4689, %v4985
    %v4987 = vpop.f32.mrb[0].mxu0
    %v4988 = vadd.f32 %v4693, %v4987
    %4989 = vmatprep.mubr.bf16.mxu0 0
    %4990 = vmatmul.mubr.bf16.gmra.mrb[0].mxu0 %v325
    %v4991 = vpop.f32.mrb[0].mxu0
    %v4992 = vadd.f32 %v4689, %v4991
    %v4993 = vpop.f32.mrb[0].mxu0
    %v4994 = vadd.f32 %v4693, %v4993
    %v4995 = vpop.f32.mrb[0].mxu0
    %v4996 = vadd.f32 %v4689, %v4995
    %v4997 = vpop.f32.mrb[0].mxu0
    %v4998 = vadd.f32 %v4693, %v4997
    %4999 = vmatprep.mubr.bf16.mxu0 0
    %5000 = vmatmul.mubr.bf16.gmra.mrb[0].mxu0 %v328
    %v5001 = vpop.f32.mrb[0].mxu0
    %v5002 = vadd.f32 %v4689, %v5001
    %v5003 = vpop.f32.mrb[0].mxu0
    %v5004 = vadd.f32 %v4693, %v5003
    %v5005 = vpop.f32.mrb[0].mxu0
    %v5006 = vpop.f32.mrb[0].mxu0
    %5007 = vdwg.mxu0
    %v5008 = vmax.f32 %v4762, 0.0
    %v5009 = vmax.f32 %v4764, 0.0
    %v5010 = vmax.f32 %v4766, 0.0
    %v5011 = vmax.f32 %v4768, 0.0
    %v5012 = vmax.f32 %v4772, 0.0
    %v5013 = vmax.f32 %v4774, 0.0
    %v5014 = vmax.f32 %v4776, 0.0
    %v5015 = vmax.f32 %v4778, 0.0
    %v5016 = vmax.f32 %v4782, 0.0
    %v5017 = vmax.f32 %v4784, 0.0
    %v5018 = vmax.f32 %v4786, 0.0
    %v5019 = vmax.f32 %v4788, 0.0
    %v5020 = vmax.f32 %v4792, 0.0
    %v5021 = vmax.f32 %v4794, 0.0
    %v5022 = vmax.f32 %v4796, 0.0
    %v5023 = vmax.f32 %v4798, 0.0
    %v5024 = vmax.f32 %v4802, 0.0
    %v5025 = vmax.f32 %v4804, 0.0
    %v5026 = vmax.f32 %v4806, 0.0
    %v5027 = vmax.f32 %v4808, 0.0
    %v5028 = vmax.f32 %v4812, 0.0
    %v5029 = vmax.f32 %v4814, 0.0
    %v5030 = vmax.f32 %v4816, 0.0
    %v5031 = vmax.f32 %v4818, 0.0
    %v5032 = vmax.f32 %v4822, 0.0
    %v5033 = vmax.f32 %v4824, 0.0
    %v5034 = vmax.f32 %v4826, 0.0
    %v5035 = vmax.f32 %v4828, 0.0
    %v5036 = vmax.f32 %v4832, 0.0
    %v5037 = vmax.f32 %v4834, 0.0
    %v5038 = vmax.f32 %v4836, 0.0
    %v5039 = vmax.f32 %v4838, 0.0
    %v5040 = vmax.f32 %v4842, 0.0
    %v5041 = vmax.f32 %v4844, 0.0
    %v5042 = vmax.f32 %v4846, 0.0
    %v5043 = vmax.f32 %v4848, 0.0
    %v5044 = vmax.f32 %v4852, 0.0
    %v5045 = vmax.f32 %v4854, 0.0
    %v5046 = vmax.f32 %v4856, 0.0
    %v5047 = vmax.f32 %v4858, 0.0
    %v5048 = vmax.f32 %v4862, 0.0
    %v5049 = vmax.f32 %v4864, 0.0
    %v5050 = vmax.f32 %v4866, 0.0
    %v5051 = vmax.f32 %v4868, 0.0
    %v5052 = vmax.f32 %v4872, 0.0
    %v5053 = vmax.f32 %v4874, 0.0
    %v5054 = vmax.f32 %v4876, 0.0
    %v5055 = vmax.f32 %v4878, 0.0
    %v5056 = vmax.f32 %v4882, 0.0
    %v5057 = vmax.f32 %v4884, 0.0
    %v5058 = vmax.f32 %v4886, 0.0
    %v5059 = vmax.f32 %v4888, 0.0
    %v5060 = vmax.f32 %v4892, 0.0
    %v5061 = vmax.f32 %v4894, 0.0
    %v5062 = vmax.f32 %v4896, 0.0
    %v5063 = vmax.f32 %v4898, 0.0
    %v5064 = vmax.f32 %v4902, 0.0
    %v5065 = vmax.f32 %v4904, 0.0
    %v5066 = vmax.f32 %v4906, 0.0
    %v5067 = vmax.f32 %v4908, 0.0
    %v5068 = vmax.f32 %v4912, 0.0
    %v5069 = vmax.f32 %v4914, 0.0
    %v5070 = vmax.f32 %v4916, 0.0
    %v5071 = vmax.f32 %v4918, 0.0
    %v5072 = vmax.f32 %v4922, 0.0
    %v5073 = vmax.f32 %v4924, 0.0
    %v5074 = vmax.f32 %v4926, 0.0
    %v5075 = vmax.f32 %v4928, 0.0
    %v5076 = vmax.f32 %v4932, 0.0
    %v5077 = vmax.f32 %v4934, 0.0
    %v5078 = vmax.f32 %v4936, 0.0
    %v5079 = vmax.f32 %v4938, 0.0
    %v5080 = vmax.f32 %v4942, 0.0
    %v5081 = vmax.f32 %v4944, 0.0
    %v5082 = vmax.f32 %v4946, 0.0
    %v5083 = vmax.f32 %v4948, 0.0
    %v5084 = vmax.f32 %v4952, 0.0
    %v5085 = vmax.f32 %v4954, 0.0
    %v5086 = vmax.f32 %v4956, 0.0
    %v5087 = vmax.f32 %v4958, 0.0
    %v5088 = vmax.f32 %v4962, 0.0
    %v5089 = vmax.f32 %v4964, 0.0
    %v5090 = vmax.f32 %v4966, 0.0
    %v5091 = vmax.f32 %v4968, 0.0
    %v5092 = vmax.f32 %v4972, 0.0
    %v5093 = vmax.f32 %v4974, 0.0
    %v5094 = vmax.f32 %v4976, 0.0
    %v5095 = vmax.f32 %v4978, 0.0
    %v5096 = vmax.f32 %v4982, 0.0
    %v5097 = vmax.f32 %v4984, 0.0
    %v5098 = vmax.f32 %v4986, 0.0
    %v5099 = vmax.f32 %v4988, 0.0
    %v5100 = vmax.f32 %v4992, 0.0
    %v5101 = vmax.f32 %v4994, 0.0
    %v5102 = vmax.f32 %v4996, 0.0
    %v5103 = vmax.f32 %v4998, 0.0
    %v5104 = vmax.f32 %v5002, 0.0
    %v5105 = vmax.f32 %v5004, 0.0
    %5106 = vmatprep.subr.mxu0 %v5009
    %5107 = vmatpush1.msra.mxu0 %v5008
    %5108 = vmatprep.subr.mxu0 %v5011
    %5109 = vmatpush1.msra.mxu0 %v5010
    %5110 = vmatprep.subr.mxu0 %v5013
    %5111 = vmatpush1.msra.mxu0 %v5012
    %5112 = vmatprep.subr.mxu0 %v5015
    %5113 = vmatpush1.msra.mxu0 %v5014
    %5114 = vmatprep.subr.mxu0 %v5017
    %5115 = vmatpush1.msra.mxu0 %v5016
    %5116 = vmatprep.subr.mxu0 %v5019
    %5117 = vmatpush1.msra.mxu0 %v5018
    %5118 = vmatprep.subr.mxu0 %v5021
    %5119 = vmatpush1.msra.mxu0 %v5020
    %5120 = vmatprep.subr.mxu0 %v5023
    %5121 = vmatpush1.msra.mxu0 %v5022
    %5122 = vmatprep.subr.mxu0 %v5025
    %5123 = vmatpush1.msra.mxu0 %v5024
    %5124 = vmatprep.subr.mxu0 %v5027
    %5125 = vmatpush1.msra.mxu0 %v5026
    %5126 = vmatprep.subr.mxu0 %v5029
    %5127 = vmatpush1.msra.mxu0 %v5028
    %5128 = vmatprep.subr.mxu0 %v5031
    %5129 = vmatpush1.msra.mxu0 %v5030
    %5130 = vmatprep.subr.mxu0 %v5033
    %5131 = vmatpush1.msra.mxu0 %v5032
    %5132 = vmatprep.subr.mxu0 %v5035
    %5133 = vmatpush1.msra.mxu0 %v5034
    %5134 = vmatprep.subr.mxu0 %v5037
    %5135 = vmatpush1.msra.mxu0 %v5036
    %5136 = vmatprep.subr.mxu0 %v5039
    %5137 = vmatpush1.msra.mxu0 %v5038
    %5138 = vmatprep.subr.mxu0 %v5041
    %5139 = vmatpush1.msra.mxu0 %v5040
    %5140 = vmatprep.subr.mxu0 %v5043
    %5141 = vmatpush1.msra.mxu0 %v5042
    %5142 = vmatprep.subr.mxu0 %v5045
    %5143 = vmatpush1.msra.mxu0 %v5044
    %5144 = vmatprep.subr.mxu0 %v5047
    %5145 = vmatpush1.msra.mxu0 %v5046
    %5146 = vmatprep.subr.mxu0 %v5049
    %5147 = vmatpush1.msra.mxu0 %v5048
    %5148 = vmatprep.subr.mxu0 %v5051
    %5149 = vmatpush1.msra.mxu0 %v5050
    %5150 = vmatprep.subr.mxu0 %v5053
    %5151 = vmatpush1.msra.mxu0 %v5052
    %5152 = vmatprep.subr.mxu0 %v5055
    %5153 = vmatpush1.msra.mxu0 %v5054
    %5154 = vmatprep.subr.mxu0 %v5057
    %5155 = vmatpush1.msra.mxu0 %v5056
    %5156 = vmatprep.subr.mxu0 %v5059
    %5157 = vmatpush1.msra.mxu0 %v5058
    %5158 = vmatprep.subr.mxu0 %v5061
    %5159 = vmatpush1.msra.mxu0 %v5060
    %5160 = vmatprep.subr.mxu0 %v5063
    %5161 = vmatpush1.msra.mxu0 %v5062
    %5162 = vmatprep.subr.mxu0 %v5065
    %5163 = vmatpush1.msra.mxu0 %v5064
    %5164 = vmatprep.subr.mxu0 %v5067
    %5165 = vmatpush1.msra.mxu0 %v5066
    %5166 = vmatprep.subr.mxu0 %v5069
    %5167 = vmatpush1.msra.mxu0 %v5068
    %5168 = vmatprep.subr.mxu0 %v5071
    %5169 = vmatpush1.msra.mxu0 %v5070
    %5170 = vmatprep.mubr.f32.mxu0 %v732
    %5171 = vmatmul.mubr.f32.gmra.mrb[0].mxu0 %v724
    %v5172 = vpop.f32.mrb[0].mxu0
    %v5173 = vadd.f32 0.0, %v5172
    %v5174 = vpop.f32.mrb[0].mxu0
    %v5175 = vadd.f32 0.0, %v5174
    %5176 = vdwg.mxu0
    %5177 = vmatprep.subr.mxu0 %v5073
    %5178 = vmatpush1.msra.mxu0 %v5072
    %5179 = vmatprep.subr.mxu0 %v5075
    %5180 = vmatpush1.msra.mxu0 %v5074
    %5181 = vmatprep.subr.mxu0 %v5077
    %5182 = vmatpush1.msra.mxu0 %v5076
    %5183 = vmatprep.subr.mxu0 %v5079
    %5184 = vmatpush1.msra.mxu0 %v5078
    %5185 = vmatprep.subr.mxu0 %v5081
    %5186 = vmatpush1.msra.mxu0 %v5080
    %5187 = vmatprep.subr.mxu0 %v5083
    %5188 = vmatpush1.msra.mxu0 %v5082
    %5189 = vmatprep.subr.mxu0 %v5085
    %5190 = vmatpush1.msra.mxu0 %v5084
    %5191 = vmatprep.subr.mxu0 %v5087
    %5192 = vmatpush1.msra.mxu0 %v5086
    %5193 = vmatprep.subr.mxu0 %v5089
    %5194 = vmatpush1.msra.mxu0 %v5088
    %5195 = vmatprep.subr.mxu0 %v5091
    %5196 = vmatpush1.msra.mxu0 %v5090
    %5197 = vmatprep.subr.mxu0 %v5093
    %5198 = vmatpush1.msra.mxu0 %v5092
    %5199 = vmatprep.subr.mxu0 %v5095
    %5200 = vmatpush1.msra.mxu0 %v5094
    %5201 = vmatprep.subr.mxu0 %v5097
    %5202 = vmatpush1.msra.mxu0 %v5096
    %5203 = vmatprep.subr.mxu0 %v5099
    %5204 = vmatpush1.msra.mxu0 %v5098
    %5205 = vmatprep.subr.mxu0 %v5101
    %5206 = vmatpush1.msra.mxu0 %v5100
    %5207 = vmatprep.subr.mxu0 %v5103
    %5208 = vmatpush1.msra.mxu0 %v5102
    %5209 = vmatprep.subr.mxu0 %v5105
    %5210 = vmatpush1.msra.mxu0 %v5104
    %5211 = vmatprep.subr.mxu0 0.0
    %5212 = vmatpush1.msra.mxu0 0.0
    %5213 = vmatprep.subr.mxu0 0.0
    %5214 = vmatpush1.msra.mxu0 0.0
    %5215 = vmatprep.subr.mxu0 0.0
    %5216 = vmatpush1.msra.mxu0 0.0
    %5217 = vmatprep.subr.mxu0 0.0
    %5218 = vmatpush1.msra.mxu0 0.0
    %5219 = vmatprep.subr.mxu0 0.0
    %5220 = vmatpush1.msra.mxu0 0.0
    %5221 = vmatprep.subr.mxu0 0.0
    %5222 = vmatpush1.msra.mxu0 0.0
    %5223 = vmatprep.subr.mxu0 0.0
    %5224 = vmatpush1.msra.mxu0 0.0
    %5225 = vmatprep.subr.mxu0 0.0
    %5226 = vmatpush1.msra.mxu0 0.0
    %5227 = vmatprep.subr.mxu0 0.0
    %5228 = vmatpush1.msra.mxu0 0.0
    %5229 = vmatprep.subr.mxu0 0.0
    %5230 = vmatpush1.msra.mxu0 0.0
    %5231 = vmatprep.subr.mxu0 0.0
    %5232 = vmatpush1.msra.mxu0 0.0
    %5233 = vmatprep.subr.mxu0 0.0
    %5234 = vmatpush1.msra.mxu0 0.0
    %5235 = vmatprep.subr.mxu0 0.0
    %5236 = vmatpush1.msra.mxu0 0.0
    %5237 = vmatprep.subr.mxu0 0.0
    %5238 = vmatpush1.msra.mxu0 0.0
    %5239 = vmatprep.subr.mxu0 0.0
    %5240 = vmatpush1.msra.mxu0 0.0
    %5241 = vmatprep.mubr.f32.mxu0 %v738
    %5242 = vmatmul.mubr.f32.gmra.mrb[0].mxu0 %v731
    %v5243 = vpop.f32.mrb[0].mxu0
    %v5244 = vadd.f32 %v5173, %v5243
    %v5245 = vpop.f32.mrb[0].mxu0
    %v5246 = vadd.f32 %v5175, %v5245
    %5247 = vdwg.mxu0
    %v5248 = vpack.c.bf16 %v5244, %v5244
    %v5249 = vpack.c.bf16 %v5246, %v5246
    %v5250 = vld [vmem:[%s4 + $0x38] sm:$0xff]
    %v5251 = vld [vmem:[%s4 + $0x78] sm:$0xff]
    %v5254 = vunpack.c.l.b16 %v5250
    %v5255 = vunpack.c.h.b16 %v5250
    %v5256 = vunpack.c.l.b16 %v5251
    %v5257 = vunpack.c.h.b16 %v5251
    %v5258 = vpack.c.b16 %v5256, %v5254
    %v5259 = vpack.c.b16 %v5257, %v5255
    %5262 = vmatprep.subr.bf16.mxu0 %v5259
    %5263 = vmatpush1.bf16.xpose.msra.mxu0 %v5258
    %5264 = vmatprep.subr.bf16.mxu0 0
    %5265 = vmatpush1.bf16.xpose.msra.mxu0 0
    %5266 = vmatprep.subr.bf16.mxu0 0
    %5267 = vmatpush1.bf16.xpose.msra.mxu0 0
    %5268 = vmatprep.subr.bf16.mxu0 0
    %5269 = vmatpush1.bf16.xpose.msra.mxu0 0
    %5270 = vmatprep.subr.bf16.mxu0 0
    %5271 = vmatpush1.bf16.xpose.msra.mxu0 0
    %5272 = vmatprep.subr.bf16.mxu0 0
    %5273 = vmatpush1.bf16.xpose.msra.mxu0 0
    %5274 = vmatprep.subr.bf16.mxu0 0
    %5275 = vmatpush1.bf16.xpose.msra.mxu0 0
    %5276 = vmatprep.subr.bf16.mxu0 0
    %5277 = vmatpush1.bf16.xpose.msra.mxu0 0
    %5278 = vmatprep.subr.bf16.mxu0 0
    %5279 = vmatpush1.bf16.xpose.msra.mxu0 0
    %5280 = vmatprep.subr.bf16.mxu0 0
    %5281 = vmatpush1.bf16.xpose.msra.mxu0 0
    %5282 = vmatprep.subr.bf16.mxu0 0
    %5283 = vmatpush1.bf16.xpose.msra.mxu0 0
    %5284 = vmatprep.subr.bf16.mxu0 0
    %5285 = vmatpush1.bf16.xpose.msra.mxu0 0
    %5286 = vmatprep.subr.bf16.mxu0 0
    %5287 = vmatpush1.bf16.xpose.msra.mxu0 0
    %5288 = vmatprep.subr.bf16.mxu0 0
    %5289 = vmatpush1.bf16.xpose.msra.mxu0 0
    %5290 = vmatprep.subr.bf16.mxu0 0
    %5291 = vmatpush1.bf16.xpose.msra.mxu0 0
    %5292 = vmatprep.subr.bf16.mxu0 0
    %5293 = vmatpush1.bf16.xpose.msra.mxu0 0
    %5294 = vmatprep.mubr.bf16.mxu0 %v5249
    %5295 = vmatmul.mubr.bf16.gmra.mrb[0].mxu0 %v5248
    %v5296 = vpop.f32.mrb[0].mxu0
    %v5297 = vadd.f32 0.0, %v5296
    %v5298 = vpop.f32.mrb[0].mxu0
    %v5299 = vpop.f32.mrb[0].mxu0
    %v5300 = vpop.f32.mrb[0].mxu0
    %5301 = vdwg.mxu0
    %v5302 = vadd.f32 %v4678, %v5297
    %v5303 = vld [vmem:[%s5] sm:$0x1]
    %v5305 = vlaneseq
    %v5306 = vshrl.u32 %v5305, 7
    %v5307 = vsub.s32 0, %v5306
    %v5308 = vrot.slane %v5303, %v5307
    %v5310 = vadd.f32 %v5302, %v5308
    %v5311 = vmul.f32 %v5310, 0.5
    %v5312 = vtanh.pop %v5311
    %v5313 = vadd.f32 %v5312, 1.0
    %v5314 = vmul.f32 %v5313, 0.5
    %vm5315 = vcmask 123904
    %5316 = vst.msk [vmem:[#allocation5] sm:$0x3] %vm5315, %v5314
    // Predicated region
    $region30: #{tpu_custom_call.1} parent=1 // pred_check
      _
    $region31: #{tpu_custom_call.1} parent=1 // pred_check_branch
      %5318 = sbr.rel (0) target = $region33
    $region32: #{tpu_custom_call.1} parent=1 // pred_region
      %s5320 = ssub.s32 32, 32
      %5321 = vsyncadd [#allocation4], %s5320
      %s5323 = sshll.u32 [#allocation5], 4
      %s5324 = int_to_ptr.vmem [resolvable:$true] %s5323
      %5326 = dma.vmem_to_hbm [thread:$0]  %s5324, 32, %s6, [#allocation4]
    $region33: #{tpu_custom_call.1} parent=1 // pred_fallthru
      _
    // Predicated region
    $region34: #{tpu_custom_call.1} parent=1 // pred_check
      _
    $region35: #{tpu_custom_call.1} parent=1 // pred_check_branch
      %5328 = sbr.rel (0) target = $region37
    $region36: #{tpu_custom_call.1} parent=1 // pred_region
      %5329 = dma.done [#allocation4], 32
    $region37: #{tpu_custom_call.1} parent=1 // pred_fallthru
      _
    %5330 = vsyncpa [#allocation3], 1
    %5331 = vsyncpa [#allocation4], 1

</llo_original>
